<compile_context>
chip_gen: v7x
topology: tpu7x:2x2x1
jax: 0.10.0
libtpu: 0.0.40
codegen_flags: <defaults>
</compile_context>

<pallas_src>
import functools

import jax
import jax.numpy as jnp
from jax import lax
from jax.experimental import pallas as pl
from jax.experimental.pallas import tpu as pltpu


_LANE = 128                      # channel dims padded to the TPU lane width
_MXU_DTYPE = jnp.bfloat16        # MXU operand dtype (f32 accumulation everywhere)
_VMEM_LIMIT = 48 * 1024 * 1024   # headroom under v7x's 64 MiB physical VMEM


def _round_up(x, m):
    return (x + m - 1) // m * m


def _pick_row_tile(h_dim, cap=8):
    """Largest divisor of the image height that is <= cap (output rows / step)."""
    for th in range(min(h_dim, cap), 0, -1):
        if h_dim % th == 0:
            return th
    return h_dim


# ----------------------------------------------------------------------------
# Pass 1: 3x3 conv (pad=1) + per-channel batch-stat accumulation.
# ----------------------------------------------------------------------------
def _conv_stats_kernel(x_ref, w_ref, b_ref, iscale_ref, ishift_ref,
                       y_ref, stat_ref, xpad_ref, col_ref,
                       *, th, input_act):
    """One (batch n, row-tile h) grid step.

    x_ref      (1, H, W, Ci)   full image of batch item n (f32)
    w_ref      (9*Ci, Co)      conv weight as an im2col matmul matrix (bf16)
    b_ref      (1, Co)         conv bias (f32)
    iscale_ref (1, Ci)         previous layer's fused BN scale  (used if input_act)
    ishift_ref (1, Ci)         previous layer's fused BN shift  (used if input_act)
    y_ref      (1, th, W, Co)  pre-BN conv output tile (f32, streamed out)
    stat_ref   (1, 8, Co)      row 0: sum, row 1: sum of squares (accumulated
                               across the row-tile grid axis, per batch item)
    xpad_ref   (th+2, W+2, Ci) VMEM scratch: zero-padded input tile (+halo), f32
    col_ref    (th*W, 9*Ci)    VMEM scratch: im2col matrix (bf16) for one matmul
    """
    h = pl.program_id(1)
    n_h = pl.num_programs(1)
    _, _H, W, Ci = x_ref.shape
    Co = y_ref.shape[3]
    row0 = h * th

    def act(v):
        # v: (rows, W, Ci) f32 slice of the input image.  When input_act, apply
        # the previous layer's BN (+ReLU) on the fly; padded channels have
        # scale == shift == 0 so they stay exactly zero.
        if input_act:
            s = iscale_ref[...].reshape(1, 1, Ci)
            t = ishift_ref[...].reshape(1, 1, Ci)
            v = jnp.maximum(v * s + t, 0.0)
        return v

    # --- Build the zero-padded (halo) input tile in VMEM scratch -------------
    xpad_ref[...] = jnp.zeros_like(xpad_ref)
    xpad_ref[1:th + 1, 1:W + 1, :] = act(x_ref[0, pl.ds(row0, th), :, :])

    @pl.when(h > 0)
    def _():                                      # top halo row
        xpad_ref[0:1, 1:W + 1, :] = act(x_ref[0, pl.ds(row0 - 1, 1), :, :])

    @pl.when(h < n_h - 1)
    def _():                                      # bottom halo row
        xpad_ref[th + 1:th + 2, 1:W + 1, :] = act(
            x_ref[0, pl.ds(row0 + th, 1), :, :])

    # --- im2col into VMEM scratch, then ONE deep-K matmul on the MXU ---------
    for dy in range(3):
        for dx in range(3):
            tap = dy * 3 + dx
            col_ref[:, tap * Ci:(tap + 1) * Ci] = (
                xpad_ref[dy:dy + th, dx:dx + W, :]
                .reshape(th * W, Ci)
                .astype(col_ref.dtype))

    acc = jnp.dot(col_ref[...], w_ref[...], preferred_element_type=jnp.float32)
    acc = acc + b_ref[...]                        # (th*W, Co) + (1, Co)

    y_ref[...] = acc.reshape(1, th, W, Co)

    # --- Per-channel BatchNorm statistics (exact over the full batch) --------
    @pl.when(h == 0)
    def _():
        stat_ref[...] = jnp.zeros_like(stat_ref)

    stat_ref[0, 0:1, :] = stat_ref[0, 0:1, :] + jnp.sum(acc, axis=0, keepdims=True)
    stat_ref[0, 1:2, :] = stat_ref[0, 1:2, :] + jnp.sum(acc * acc, axis=0,
                                                        keepdims=True)


def _conv_pass(x, w_mat, bias, iscale, ishift, *, th, input_act):
    """Conv2d(3x3, s=1, p=1) (+ optional fused input BN/ReLU) over NHWC `x`.

    Returns (y, stats): y is the pre-BN conv output, stats[n, 0/1, c] holds the
    per-batch-item per-channel sum / sum-of-squares of y.
    """
    N, H, W, Ci = x.shape
    Co = w_mat.shape[1]
    assert H % th == 0, (H, th)
    n_h = H // th

    # TODO(synk): for very large feature maps, also tile the *input* along H
    # with an explicit halo DMA (memory_space=pl.ANY + make_async_copy) instead
    # of the per-image block used here.
    kernel = functools.partial(_conv_stats_kernel, th=th, input_act=input_act)
    return pl.pallas_call(
        kernel,
        grid=(N, n_h),
        in_specs=[
            # Full image per batch item; index map is h-independent so the DMA
            # is issued once per n and re-used by every row tile.
            pl.BlockSpec((1, H, W, Ci), lambda n, h: (n, 0, 0, 0)),
            pl.BlockSpec((9 * Ci, Co), lambda n, h: (0, 0)),
            pl.BlockSpec((1, Co), lambda n, h: (0, 0)),
            pl.BlockSpec((1, Ci), lambda n, h: (0, 0)),
            pl.BlockSpec((1, Ci), lambda n, h: (0, 0)),
        ],
        out_specs=[
            pl.BlockSpec((1, th, W, Co), lambda n, h: (n, h, 0, 0)),
            pl.BlockSpec((1, 8, Co), lambda n, h: (n, 0, 0)),
        ],
        out_shape=[
            jax.ShapeDtypeStruct((N, H, W, Co), jnp.float32),
            jax.ShapeDtypeStruct((N, 8, Co), jnp.float32),
        ],
        scratch_shapes=[
            pltpu.VMEM((th + 2, W + 2, Ci), jnp.float32),   # padded input tile
            pltpu.VMEM((th * W, 9 * Ci), _MXU_DTYPE),        # im2col matrix
        ],
        compiler_params=pltpu.CompilerParams(
            dimension_semantics=("parallel", "arbitrary"),
            vmem_limit_bytes=_VMEM_LIMIT),
    )(x, w_mat, bias, iscale, ishift)


# ----------------------------------------------------------------------------
# Pass 2: streamed per-channel affine (folded BN) + ReLU.
# ----------------------------------------------------------------------------
def _bn_relu_kernel(y_ref, scale_ref, shift_ref, o_ref):
    s = scale_ref[...].reshape(1, 1, 1, -1)
    t = shift_ref[...].reshape(1, 1, 1, -1)
    o_ref[...] = jnp.maximum(y_ref[...] * s + t, 0.0)


def _bn_relu(y, scale, shift, *, th):
    N, H, W, C = y.shape
    n_h = H // th
    return pl.pallas_call(
        _bn_relu_kernel,
        grid=(N, n_h),
        in_specs=[
            pl.BlockSpec((1, th, W, C), lambda n, h: (n, h, 0, 0)),
            pl.BlockSpec((1, C), lambda n, h: (0, 0)),
            pl.BlockSpec((1, C), lambda n, h: (0, 0)),
        ],
        out_specs=pl.BlockSpec((1, th, W, C), lambda n, h: (n, h, 0, 0)),
        out_shape=jax.ShapeDtypeStruct((N, H, W, C), jnp.float32),
        compiler_params=pltpu.CompilerParams(
            dimension_semantics=("parallel", "parallel"),
            vmem_limit_bytes=_VMEM_LIMIT),
    )(y, scale, shift)


# ----------------------------------------------------------------------------
# Host-side glue: per-channel BN finalize, parameter packing, block wrapper.
# ----------------------------------------------------------------------------
def _bn_scale_shift(stats, gamma, beta, count, eps):
    """Fold training-mode BatchNorm into a per-channel (scale, shift)."""
    s = jnp.sum(stats[:, 0, :], axis=0)
    ss = jnp.sum(stats[:, 1, :], axis=0)
    mean = s / count
    # NOTE: E[x^2] - E[x]^2 in f32 is fine for unit-scale activations; switch to
    # a centered two-pass reduction if activations get very large.
    var = jnp.maximum(ss / count - mean * mean, 0.0)
    scale = gamma * lax.rsqrt(var + eps)
    shift = beta - mean * scale
    return scale.reshape(1, -1), shift.reshape(1, -1)


def _prep_conv_params(w, b, ci_pad, co_pad):
    """Pad channels to lane multiples and reshape HWIO weight for the im2col matmul."""
    kh, kw, ci, co = w.shape
    w_p = jnp.zeros((kh, kw, ci_pad, co_pad), jnp.float32)
    w_p = w_p.at[:, :, :ci, :co].set(w)
    w_mat = w_p.reshape(kh * kw * ci_pad, co_pad).astype(_MXU_DTYPE)
    b_p = jnp.zeros((1, co_pad), jnp.float32).at[0, :co].set(b)
    return w_mat, b_p


def _pad_vec(v, c_pad):
    return jnp.zeros((c_pad,), jnp.float32).at[:v.shape[0]].set(v)


def _pad_channels(x, c_pad):
    c = x.shape[-1]
    if c == c_pad:
        return x
    return jnp.pad(x, ((0, 0),) * (x.ndim - 1) + ((0, c_pad - c),))


def conv_block(x_nchw, params, *, eps=1e-5):
    """Forward of the PyTorch `Conv` module (training-mode BatchNorm stats)."""
    # NCHW -> NHWC once at the boundary (in the full UNet this transpose lives
    # at the model entry/exit, not per block).
    x = jnp.transpose(x_nchw, (0, 2, 3, 1)).astype(jnp.float32)
    N, H, W, cin = x.shape
    cout = params["w2"].shape[-1]
    ci = _round_up(cin, _LANE)
    co = _round_up(cout, _LANE)
    th = _pick_row_tile(H)
    count = N * H * W

    x = _pad_channels(x, ci)                         # lane-dense channels (one-time)

    w1, b1 = _prep_conv_params(params["w1"], params["b1"], ci, co)
    w2, b2 = _prep_conv_params(params["w2"], params["b2"], co, co)
    g1, be1 = _pad_vec(params["g1"], co), _pad_vec(params["be1"], co)
    g2, be2 = _pad_vec(params["g2"], co), _pad_vec(params["be2"], co)

    ones = jnp.ones((1, ci), jnp.float32)
    zeros = jnp.zeros((1, ci), jnp.float32)

    # Layer 1: conv + streamed per-channel batch statistics.
    y1, st1 = _conv_pass(x, w1, b1, ones, zeros, th=th, input_act=False)
    sc1, sh1 = _bn_scale_shift(st1, g1, be1, count, eps)

    # Layer 2: BN1 + ReLU1 fused into conv2's input path (no extra HBM pass).
    y2, st2 = _conv_pass(y1, w2, b2, sc1, sh1, th=th, input_act=True)
    sc2, sh2 = _bn_scale_shift(st2, g2, be2, count, eps)

    # Final BN2 + ReLU2, streamed elementwise with a lane-dense out_spec.
    out = _bn_relu(y2, sc2, sh2, th=th)

    out = out[..., :cout]                            # drop lane padding
    return jnp.transpose(out, (0, 3, 1, 2))          # NHWC -> NCHW


def init_params(key, in_channel, out_channel):
    k = jax.random.split(key, 8)

    def w_init(kk, shape, fan_in):
        return jax.random.normal(kk, shape, jnp.float32) / jnp.sqrt(fan_in)

    return {
        "w1": w_init(k[0], (3, 3, in_channel, out_channel), 9 * in_channel),
        "b1": 0.1 * jax.random.normal(k[1], (out_channel,), jnp.float32),
        "g1": 1.0 + 0.1 * jax.random.normal(k[2], (out_channel,), jnp.float32),
        "be1": 0.1 * jax.random.normal(k[3], (out_channel,), jnp.float32),
        "w2": w_init(k[4], (3, 3, out_channel, out_channel), 9 * out_channel),
        "b2": 0.1 * jax.random.normal(k[5], (out_channel,), jnp.float32),
        "g2": 1.0 + 0.1 * jax.random.normal(k[6], (out_channel,), jnp.float32),
        "be2": 0.1 * jax.random.normal(k[7], (out_channel,), jnp.float32),
    }


def _reference(x_nchw, params, eps=1e-5):
    """Pure-JAX reference (lax.conv), same MXU operand dtype, f32 accumulation."""
    def block(x, w, b, g, be):
        y = lax.conv_general_dilated(
            x.astype(_MXU_DTYPE), w.astype(_MXU_DTYPE),
            window_strides=(1, 1), padding=((1, 1), (1, 1)),
            dimension_numbers=("NHWC", "HWIO", "NHWC"),
            preferred_element_type=jnp.float32,
        ) + b.reshape(1, 1, 1, -1)
        mean = jnp.mean(y, axis=(0, 1, 2), keepdims=True)
        var = jnp.mean((y - mean) ** 2, axis=(0, 1, 2), keepdims=True)
        y = (y - mean) * lax.rsqrt(var + eps)
        y = y * g.reshape(1, 1, 1, -1) + be.reshape(1, 1, 1, -1)
        return jnp.maximum(y, 0.0)

    x = jnp.transpose(x_nchw, (0, 2, 3, 1))
    x = block(x, params["w1"], params["b1"], params["g1"], params["be1"])
    x = block(x, params["w2"], params["b2"], params["g2"], params["be2"])
    return jnp.transpose(x, (0, 3, 1, 2))


if __name__ == "__main__":
    key = jax.random.PRNGKey(0)
    k_x, k_p = jax.random.split(key)

    N, Cin, Cout, H, W = 2, 4, 8, 16, 16
    x = jax.random.normal(k_x, (N, Cin, H, W), jnp.float32)
    params = init_params(k_p, Cin, Cout)

    out = jax.block_until_ready(jax.jit(conv_block)(x, params))
    ref = jax.block_until_ready(_reference(x, params))

    assert out.shape == (N, Cout, H, W), out.shape
    err = float(jnp.max(jnp.abs(out - ref)))
    assert err < 2e-2, err
    print("KERNEL_OK")
</pallas_src>

<mosaic_0001>
module attributes {stable_mosaic.version = 11 : i64} {
  func.func @_conv_stats_kernel(%arg0: i32, %arg1: i32, %arg2: memref<1x16x16x128xf32, #tpu.memory_space<vmem>>, %arg3: memref<1152x128xbf16, #tpu.memory_space<vmem>>, %arg4: memref<1x128xf32, #tpu.memory_space<vmem>>, %arg5: memref<1x128xf32, #tpu.memory_space<vmem>>, %arg6: memref<1x128xf32, #tpu.memory_space<vmem>>, %arg7: memref<1x8x16x128xf32, #tpu.memory_space<vmem>>, %arg8: memref<1x8x128xf32, #tpu.memory_space<vmem>>, %arg9: memref<10x18x128xf32, #tpu.memory_space<vmem>>, %arg10: memref<128x1152xbf16, #tpu.memory_space<vmem>>) attributes {dimension_semantics = [#tpu.dimension_semantics<parallel>, #tpu.dimension_semantics<arbitrary>], iteration_bounds = array<i64: 2, 2>, scalar_prefetch = 0 : i64, scratch_operands = 2 : i64, tpu.core_type = #tpu.core_type<tc>, window_params = [{transform_indices = @transform_0, window_bounds = array<i64: 1, 16, 16, 128>}, {pipeline_mode = #tpu.pipeline_mode<synchronous>, transform_indices = @transform_1, window_bounds = array<i64: 1152, 128>}, {pipeline_mode = #tpu.pipeline_mode<synchronous>, transform_indices = @transform_2, window_bounds = array<i64: 1, 128>}, {pipeline_mode = #tpu.pipeline_mode<synchronous>, transform_indices = @transform_3, window_bounds = array<i64: 1, 128>}, {pipeline_mode = #tpu.pipeline_mode<synchronous>, transform_indices = @transform_4, window_bounds = array<i64: 1, 128>}, {transform_indices = @transform_5, window_bounds = array<i64: 1, 8, 16, 128>}, {transform_indices = @transform_6, window_bounds = array<i64: 1, 8, 128>}]} {
    %c8_i32 = arith.constant 8 : i32
    %0 = arith.muli %arg1, %c8_i32 : i32
    %cst = arith.constant 0.000000e+00 : f32
    %1 = vector.broadcast %cst : f32 to vector<10x18x128xf32>
    %c0 = arith.constant 0 : index
    %c0_0 = arith.constant 0 : index
    %c0_1 = arith.constant 0 : index
    %2 = vector.load %arg9[%c0, %c0_0, %c0_1] : memref<10x18x128xf32, #tpu.memory_space<vmem>>, vector<10x18x128xf32>
    tpu.vector_store %arg9[%c0, %c0_0, %c0_1], %1 {strides = array<i32>} : memref<10x18x128xf32, #tpu.memory_space<vmem>>, vector<10x18x128xf32>,
    %c0_2 = arith.constant 0 : index
    %3 = arith.index_cast %0 : i32 to index
    %c0_3 = arith.constant 0 : index
    %c0_4 = arith.constant 0 : index
    %4 = vector.load %arg2[%c0_2, %3, %c0_3, %c0_4] : memref<1x16x16x128xf32, #tpu.memory_space<vmem>>, vector<1x8x16x128xf32>
    %5 = vector.shape_cast %4 : vector<1x8x16x128xf32> to vector<8x16x128xf32>
    %c1 = arith.constant 1 : index
    %c1_5 = arith.constant 1 : index
    %c0_6 = arith.constant 0 : index
    %6 = vector.load %arg9[%c1, %c1_5, %c0_6] : memref<10x18x128xf32, #tpu.memory_space<vmem>>, vector<8x16x128xf32>
    tpu.vector_store %arg9[%c1, %c1_5, %c0_6], %5 {strides = array<i32>} : memref<10x18x128xf32, #tpu.memory_space<vmem>>, vector<8x16x128xf32>,
    %c0_i32 = arith.constant 0 : i32
    %7 = arith.cmpi sgt, %arg1, %c0_i32 : i32
    %8 = arith.extui %7 : i1 to i32
    %c0_i32_7 = arith.constant 0 : i32
    %9 = arith.cmpi ne, %8, %c0_i32_7 : i32
    scf.if %9 {
      %c1_i32_72 = arith.constant 1 : i32
      %77 = arith.subi %0, %c1_i32_72 : i32
      %c0_73 = arith.constant 0 : index
      %78 = arith.index_cast %77 : i32 to index
      %c0_74 = arith.constant 0 : index
      %c0_75 = arith.constant 0 : index
      %79 = vector.load %arg2[%c0_73, %78, %c0_74, %c0_75] : memref<1x16x16x128xf32, #tpu.memory_space<vmem>>, vector<1x1x16x128xf32>
      %80 = vector.shape_cast %79 : vector<1x1x16x128xf32> to vector<1x16x128xf32>
      %c0_76 = arith.constant 0 : index
      %c1_77 = arith.constant 1 : index
      %c0_78 = arith.constant 0 : index
      %81 = vector.load %arg9[%c0_76, %c1_77, %c0_78] : memref<10x18x128xf32, #tpu.memory_space<vmem>>, vector<1x16x128xf32>
      tpu.vector_store %arg9[%c0_76, %c1_77, %c0_78], %80 {strides = array<i32>} : memref<10x18x128xf32, #tpu.memory_space<vmem>>, vector<1x16x128xf32>,
    } else {
    }
    %c1_i32 = arith.constant 1 : i32
    %10 = arith.cmpi slt, %arg1, %c1_i32 : i32
    %11 = arith.extui %10 : i1 to i32
    %c0_i32_8 = arith.constant 0 : i32
    %12 = arith.cmpi ne, %11, %c0_i32_8 : i32
    scf.if %12 {
      %c8_i32_72 = arith.constant 8 : i32
      %77 = arith.addi %0, %c8_i32_72 : i32
      %c0_73 = arith.constant 0 : index
      %78 = arith.index_cast %77 : i32 to index
      %c0_74 = arith.constant 0 : index
      %c0_75 = arith.constant 0 : index
      %79 = vector.load %arg2[%c0_73, %78, %c0_74, %c0_75] : memref<1x16x16x128xf32, #tpu.memory_space<vmem>>, vector<1x1x16x128xf32>
      %80 = vector.shape_cast %79 : vector<1x1x16x128xf32> to vector<1x16x128xf32>
      %c9 = arith.constant 9 : index
      %c1_76 = arith.constant 1 : index
      %c0_77 = arith.constant 0 : index
      %81 = vector.load %arg9[%c9, %c1_76, %c0_77] : memref<10x18x128xf32, #tpu.memory_space<vmem>>, vector<1x16x128xf32>
      tpu.vector_store %arg9[%c9, %c1_76, %c0_77], %80 {strides = array<i32>} : memref<10x18x128xf32, #tpu.memory_space<vmem>>, vector<1x16x128xf32>,
    } else {
    }
    %c0_9 = arith.constant 0 : index
    %c0_10 = arith.constant 0 : index
    %c0_11 = arith.constant 0 : index
    %13 = vector.load %arg9[%c0_9, %c0_10, %c0_11] : memref<10x18x128xf32, #tpu.memory_space<vmem>>, vector<8x16x128xf32>
    %14 = vector.shape_cast %13 : vector<8x16x128xf32> to vector<128x128xf32>
    %15 = arith.truncf %14 : vector<128x128xf32> to vector<128x128xbf16>
    %c0_12 = arith.constant 0 : index
    %c0_13 = arith.constant 0 : index
    %16 = vector.load %arg10[%c0_12, %c0_13] : memref<128x1152xbf16, #tpu.memory_space<vmem>>, vector<128x128xbf16>
    tpu.vector_store %arg10[%c0_12, %c0_13], %15 {strides = array<i32>} : memref<128x1152xbf16, #tpu.memory_space<vmem>>, vector<128x128xbf16>,
    %c0_14 = arith.constant 0 : index
    %c1_15 = arith.constant 1 : index
    %c0_16 = arith.constant 0 : index
    %17 = vector.load %arg9[%c0_14, %c1_15, %c0_16] : memref<10x18x128xf32, #tpu.memory_space<vmem>>, vector<8x16x128xf32>
    %18 = vector.shape_cast %17 : vector<8x16x128xf32> to vector<128x128xf32>
    %19 = arith.truncf %18 : vector<128x128xf32> to vector<128x128xbf16>
    %c0_17 = arith.constant 0 : index
    %c128 = arith.constant 128 : index
    %20 = vector.load %arg10[%c0_17, %c128] : memref<128x1152xbf16, #tpu.memory_space<vmem>>, vector<128x128xbf16>
    tpu.vector_store %arg10[%c0_17, %c128], %19 {strides = array<i32>} : memref<128x1152xbf16, #tpu.memory_space<vmem>>, vector<128x128xbf16>,
    %c0_18 = arith.constant 0 : index
    %c2 = arith.constant 2 : index
    %c0_19 = arith.constant 0 : index
    %21 = vector.load %arg9[%c0_18, %c2, %c0_19] : memref<10x18x128xf32, #tpu.memory_space<vmem>>, vector<8x16x128xf32>
    %22 = vector.shape_cast %21 : vector<8x16x128xf32> to vector<128x128xf32>
    %23 = arith.truncf %22 : vector<128x128xf32> to vector<128x128xbf16>
    %c0_20 = arith.constant 0 : index
    %c256 = arith.constant 256 : index
    %24 = vector.load %arg10[%c0_20, %c256] : memref<128x1152xbf16, #tpu.memory_space<vmem>>, vector<128x128xbf16>
    tpu.vector_store %arg10[%c0_20, %c256], %23 {strides = array<i32>} : memref<128x1152xbf16, #tpu.memory_space<vmem>>, vector<128x128xbf16>,
    %c1_21 = arith.constant 1 : index
    %c0_22 = arith.constant 0 : index
    %c0_23 = arith.constant 0 : index
    %25 = vector.load %arg9[%c1_21, %c0_22, %c0_23] : memref<10x18x128xf32, #tpu.memory_space<vmem>>, vector<8x16x128xf32>
    %26 = vector.shape_cast %25 : vector<8x16x128xf32> to vector<128x128xf32>
    %27 = arith.truncf %26 : vector<128x128xf32> to vector<128x128xbf16>
    %c0_24 = arith.constant 0 : index
    %c384 = arith.constant 384 : index
    %28 = vector.load %arg10[%c0_24, %c384] : memref<128x1152xbf16, #tpu.memory_space<vmem>>, vector<128x128xbf16>
    tpu.vector_store %arg10[%c0_24, %c384], %27 {strides = array<i32>} : memref<128x1152xbf16, #tpu.memory_space<vmem>>, vector<128x128xbf16>,
    %c1_25 = arith.constant 1 : index
    %c1_26 = arith.constant 1 : index
    %c0_27 = arith.constant 0 : index
    %29 = vector.load %arg9[%c1_25, %c1_26, %c0_27] : memref<10x18x128xf32, #tpu.memory_space<vmem>>, vector<8x16x128xf32>
    %30 = vector.shape_cast %29 : vector<8x16x128xf32> to vector<128x128xf32>
    %31 = arith.truncf %30 : vector<128x128xf32> to vector<128x128xbf16>
    %c0_28 = arith.constant 0 : index
    %c512 = arith.constant 512 : index
    %32 = vector.load %arg10[%c0_28, %c512] : memref<128x1152xbf16, #tpu.memory_space<vmem>>, vector<128x128xbf16>
    tpu.vector_store %arg10[%c0_28, %c512], %31 {strides = array<i32>} : memref<128x1152xbf16, #tpu.memory_space<vmem>>, vector<128x128xbf16>,
    %c1_29 = arith.constant 1 : index
    %c2_30 = arith.constant 2 : index
    %c0_31 = arith.constant 0 : index
    %33 = vector.load %arg9[%c1_29, %c2_30, %c0_31] : memref<10x18x128xf32, #tpu.memory_space<vmem>>, vector<8x16x128xf32>
    %34 = vector.shape_cast %33 : vector<8x16x128xf32> to vector<128x128xf32>
    %35 = arith.truncf %34 : vector<128x128xf32> to vector<128x128xbf16>
    %c0_32 = arith.constant 0 : index
    %c640 = arith.constant 640 : index
    %36 = vector.load %arg10[%c0_32, %c640] : memref<128x1152xbf16, #tpu.memory_space<vmem>>, vector<128x128xbf16>
    tpu.vector_store %arg10[%c0_32, %c640], %35 {strides = array<i32>} : memref<128x1152xbf16, #tpu.memory_space<vmem>>, vector<128x128xbf16>,
    %c2_33 = arith.constant 2 : index
    %c0_34 = arith.constant 0 : index
    %c0_35 = arith.constant 0 : index
    %37 = vector.load %arg9[%c2_33, %c0_34, %c0_35] : memref<10x18x128xf32, #tpu.memory_space<vmem>>, vector<8x16x128xf32>
    %38 = vector.shape_cast %37 : vector<8x16x128xf32> to vector<128x128xf32>
    %39 = arith.truncf %38 : vector<128x128xf32> to vector<128x128xbf16>
    %c0_36 = arith.constant 0 : index
    %c768 = arith.constant 768 : index
    %40 = vector.load %arg10[%c0_36, %c768] : memref<128x1152xbf16, #tpu.memory_space<vmem>>, vector<128x128xbf16>
    tpu.vector_store %arg10[%c0_36, %c768], %39 {strides = array<i32>} : memref<128x1152xbf16, #tpu.memory_space<vmem>>, vector<128x128xbf16>,
    %c2_37 = arith.constant 2 : index
    %c1_38 = arith.constant 1 : index
    %c0_39 = arith.constant 0 : index
    %41 = vector.load %arg9[%c2_37, %c1_38, %c0_39] : memref<10x18x128xf32, #tpu.memory_space<vmem>>, vector<8x16x128xf32>
    %42 = vector.shape_cast %41 : vector<8x16x128xf32> to vector<128x128xf32>
    %43 = arith.truncf %42 : vector<128x128xf32> to vector<128x128xbf16>
    %c0_40 = arith.constant 0 : index
    %c896 = arith.constant 896 : index
    %44 = vector.load %arg10[%c0_40, %c896] : memref<128x1152xbf16, #tpu.memory_space<vmem>>, vector<128x128xbf16>
    tpu.vector_store %arg10[%c0_40, %c896], %43 {strides = array<i32>} : memref<128x1152xbf16, #tpu.memory_space<vmem>>, vector<128x128xbf16>,
    %c2_41 = arith.constant 2 : index
    %c2_42 = arith.constant 2 : index
    %c0_43 = arith.constant 0 : index
    %45 = vector.load %arg9[%c2_41, %c2_42, %c0_43] : memref<10x18x128xf32, #tpu.memory_space<vmem>>, vector<8x16x128xf32>
    %46 = vector.shape_cast %45 : vector<8x16x128xf32> to vector<128x128xf32>
    %47 = arith.truncf %46 : vector<128x128xf32> to vector<128x128xbf16>
    %c0_44 = arith.constant 0 : index
    %c1024 = arith.constant 1024 : index
    %48 = vector.load %arg10[%c0_44, %c1024] : memref<128x1152xbf16, #tpu.memory_space<vmem>>, vector<128x128xbf16>
    tpu.vector_store %arg10[%c0_44, %c1024], %47 {strides = array<i32>} : memref<128x1152xbf16, #tpu.memory_space<vmem>>, vector<128x128xbf16>,
    %c0_45 = arith.constant 0 : index
    %c0_46 = arith.constant 0 : index
    %49 = vector.load %arg10[%c0_45, %c0_46] : memref<128x1152xbf16, #tpu.memory_space<vmem>>, vector<128x1152xbf16>
    %c0_47 = arith.constant 0 : index
    %c0_48 = arith.constant 0 : index
    %50 = vector.load %arg3[%c0_47, %c0_48] : memref<1152x128xbf16, #tpu.memory_space<vmem>>, vector<1152x128xbf16>
    %cst_49 = arith.constant dense<0.000000e+00> : vector<128x128xf32>
    %51 = tpu.matmul %49, %50, %cst_49 {dimension_numbers = #tpu.dot_dimension_numbers<[1], [0], [0], [1], [0, 0, 1, 1], [], []>} : vector<128x1152xbf16>, vector<1152x128xbf16>, vector<128x128xf32> -> vector<128x128xf32>
    %c0_50 = arith.constant 0 : index
    %c0_51 = arith.constant 0 : index
    %52 = vector.load %arg4[%c0_50, %c0_51] : memref<1x128xf32, #tpu.memory_space<vmem>>, vector<1x128xf32>
    %53 = vector.broadcast %52 : vector<1x128xf32> to vector<128x128xf32>
    %54 = arith.addf %51, %53 : vector<128x128xf32>
    %55 = vector.shape_cast %54 : vector<128x128xf32> to vector<1x8x16x128xf32>
    %c0_52 = arith.constant 0 : index
    %c0_53 = arith.constant 0 : index
    %c0_54 = arith.constant 0 : index
    %c0_55 = arith.constant 0 : index
    %56 = vector.load %arg7[%c0_52, %c0_53, %c0_54, %c0_55] : memref<1x8x16x128xf32, #tpu.memory_space<vmem>>, vector<1x8x16x128xf32>
    tpu.vector_store %arg7[%c0_52, %c0_53, %c0_54, %c0_55], %55 {strides = array<i32>} : memref<1x8x16x128xf32, #tpu.memory_space<vmem>>, vector<1x8x16x128xf32>,
    %c0_i32_56 = arith.constant 0 : i32
    %57 = arith.cmpi eq, %arg1, %c0_i32_56 : i32
    %58 = arith.extui %57 : i1 to i32
    %c0_i32_57 = arith.constant 0 : i32
    %59 = arith.cmpi ne, %58, %c0_i32_57 : i32
    scf.if %59 {
      %cst_72 = arith.constant 0.000000e+00 : f32
      %77 = vector.broadcast %cst_72 : f32 to vector<1x8x128xf32>
      %c0_73 = arith.constant 0 : index
      %c0_74 = arith.constant 0 : index
      %c0_75 = arith.constant 0 : index
      %78 = vector.load %arg8[%c0_73, %c0_74, %c0_75] : memref<1x8x128xf32, #tpu.memory_space<vmem>>, vector<1x8x128xf32>
      tpu.vector_store %arg8[%c0_73, %c0_74, %c0_75], %77 {strides = array<i32>} : memref<1x8x128xf32, #tpu.memory_space<vmem>>, vector<1x8x128xf32>,
    } else {
    }
    %c0_58 = arith.constant 0 : index
    %c0_59 = arith.constant 0 : index
    %c0_60 = arith.constant 0 : index
    %60 = vector.load %arg8[%c0_58, %c0_59, %c0_60] : memref<1x8x128xf32, #tpu.memory_space<vmem>>, vector<1x1x128xf32>
    %61 = vector.shape_cast %60 : vector<1x1x128xf32> to vector<1x128xf32>
    %cst_61 = arith.constant dense<0.000000e+00> : vector<128xf32>
    %62 = vector.multi_reduction <add>, %54, %cst_61 [0] : vector<128x128xf32> to vector<128xf32>
    %63 = vector.shape_cast %62 : vector<128xf32> to vector<1x128xf32>
    %64 = arith.addf %61, %63 : vector<1x128xf32>
    %c0_62 = arith.constant 0 : index
    %c0_63 = arith.constant 0 : index
    %c0_64 = arith.constant 0 : index
    %65 = vector.load %arg8[%c0_62, %c0_63, %c0_64] : memref<1x8x128xf32, #tpu.memory_space<vmem>>, vector<1x1x128xf32>
    %66 = vector.shape_cast %65 : vector<1x1x128xf32> to vector<1x128xf32>
    %67 = vector.shape_cast %64 : vector<1x128xf32> to vector<1x1x128xf32>
    tpu.vector_store %arg8[%c0_62, %c0_63, %c0_64], %67 {strides = array<i32>} : memref<1x8x128xf32, #tpu.memory_space<vmem>>, vector<1x1x128xf32>,
    %c0_65 = arith.constant 0 : index
    %c1_66 = arith.constant 1 : index
    %c0_67 = arith.constant 0 : index
    %68 = vector.load %arg8[%c0_65, %c1_66, %c0_67] : memref<1x8x128xf32, #tpu.memory_space<vmem>>, vector<1x1x128xf32>
    %69 = vector.shape_cast %68 : vector<1x1x128xf32> to vector<1x128xf32>
    %70 = arith.mulf %54, %54 : vector<128x128xf32>
    %cst_68 = arith.constant dense<0.000000e+00> : vector<128xf32>
    %71 = vector.multi_reduction <add>, %70, %cst_68 [0] : vector<128x128xf32> to vector<128xf32>
    %72 = vector.shape_cast %71 : vector<128xf32> to vector<1x128xf32>
    %73 = arith.addf %69, %72 : vector<1x128xf32>
    %c0_69 = arith.constant 0 : index
    %c1_70 = arith.constant 1 : index
    %c0_71 = arith.constant 0 : index
    %74 = vector.load %arg8[%c0_69, %c1_70, %c0_71] : memref<1x8x128xf32, #tpu.memory_space<vmem>>, vector<1x1x128xf32>
    %75 = vector.shape_cast %74 : vector<1x1x128xf32> to vector<1x128xf32>
    %76 = vector.shape_cast %73 : vector<1x128xf32> to vector<1x1x128xf32>
    tpu.vector_store %arg8[%c0_69, %c1_70, %c0_71], %76 {strides = array<i32>} : memref<1x8x128xf32, #tpu.memory_space<vmem>>, vector<1x1x128xf32>,
    return
  }
  func.func @transform_0(%arg0: i32, %arg1: i32) -> (i32, i32, i32, i32) {
    %c0_i32 = arith.constant 0 : i32
    %c0_i32_0 = arith.constant 0 : i32
    %c0_i32_1 = arith.constant 0 : i32
    %c0_i32_2 = arith.constant 0 : i32
    return %arg0, %c0_i32, %c0_i32_0, %c0_i32_1 : i32, i32, i32, i32
  }
  func.func @transform_1(%arg0: i32, %arg1: i32) -> (i32, i32) {
    %c0_i32 = arith.constant 0 : i32
    %c0_i32_0 = arith.constant 0 : i32
    %c0_i32_1 = arith.constant 0 : i32
    return %c0_i32, %c0_i32_0 : i32, i32
  }
  func.func @transform_2(%arg0: i32, %arg1: i32) -> (i32, i32) {
    %c0_i32 = arith.constant 0 : i32
    %c0_i32_0 = arith.constant 0 : i32
    %c0_i32_1 = arith.constant 0 : i32
    return %c0_i32, %c0_i32_0 : i32, i32
  }
  func.func @transform_3(%arg0: i32, %arg1: i32) -> (i32, i32) {
    %c0_i32 = arith.constant 0 : i32
    %c0_i32_0 = arith.constant 0 : i32
    %c0_i32_1 = arith.constant 0 : i32
    return %c0_i32, %c0_i32_0 : i32, i32
  }
  func.func @transform_4(%arg0: i32, %arg1: i32) -> (i32, i32) {
    %c0_i32 = arith.constant 0 : i32
    %c0_i32_0 = arith.constant 0 : i32
    %c0_i32_1 = arith.constant 0 : i32
    return %c0_i32, %c0_i32_0 : i32, i32
  }
  func.func @transform_5(%arg0: i32, %arg1: i32) -> (i32, i32, i32, i32) {
    %c0_i32 = arith.constant 0 : i32
    %c0_i32_0 = arith.constant 0 : i32
    %c0_i32_1 = arith.constant 0 : i32
    return %arg0, %arg1, %c0_i32, %c0_i32_0 : i32, i32, i32, i32
  }
  func.func @transform_6(%arg0: i32, %arg1: i32) -> (i32, i32, i32) {
    %c0_i32 = arith.constant 0 : i32
    %c0_i32_0 = arith.constant 0 : i32
    %c0_i32_1 = arith.constant 0 : i32
    return %arg0, %c0_i32, %c0_i32_0 : i32, i32, i32
  }
}

module attributes {stable_mosaic.version = 11 : i64} {
  func.func @_conv_stats_kernel(%arg0: i32, %arg1: i32, %arg2: memref<1x16x16x128xf32, #tpu.memory_space<vmem>>, %arg3: memref<1152x128xbf16, #tpu.memory_space<vmem>>, %arg4: memref<1x128xf32, #tpu.memory_space<vmem>>, %arg5: memref<1x128xf32, #tpu.memory_space<vmem>>, %arg6: memref<1x128xf32, #tpu.memory_space<vmem>>, %arg7: memref<1x8x16x128xf32, #tpu.memory_space<vmem>>, %arg8: memref<1x8x128xf32, #tpu.memory_space<vmem>>, %arg9: memref<10x18x128xf32, #tpu.memory_space<vmem>>, %arg10: memref<128x1152xbf16, #tpu.memory_space<vmem>>) attributes {dimension_semantics = [#tpu.dimension_semantics<parallel>, #tpu.dimension_semantics<arbitrary>], iteration_bounds = array<i64: 2, 2>, scalar_prefetch = 0 : i64, scratch_operands = 2 : i64, tpu.core_type = #tpu.core_type<tc>, window_params = [{transform_indices = @transform_0, window_bounds = array<i64: 1, 16, 16, 128>}, {pipeline_mode = #tpu.pipeline_mode<synchronous>, transform_indices = @transform_1, window_bounds = array<i64: 1152, 128>}, {pipeline_mode = #tpu.pipeline_mode<synchronous>, transform_indices = @transform_2, window_bounds = array<i64: 1, 128>}, {pipeline_mode = #tpu.pipeline_mode<synchronous>, transform_indices = @transform_3, window_bounds = array<i64: 1, 128>}, {pipeline_mode = #tpu.pipeline_mode<synchronous>, transform_indices = @transform_4, window_bounds = array<i64: 1, 128>}, {transform_indices = @transform_5, window_bounds = array<i64: 1, 8, 16, 128>}, {transform_indices = @transform_6, window_bounds = array<i64: 1, 8, 128>}]} {
    %c8_i32 = arith.constant 8 : i32
    %0 = arith.muli %arg1, %c8_i32 : i32
    %cst = arith.constant 0.000000e+00 : f32
    %1 = vector.broadcast %cst : f32 to vector<10x18x128xf32>
    %c0 = arith.constant 0 : index
    %c0_0 = arith.constant 0 : index
    %c0_1 = arith.constant 0 : index
    %2 = vector.load %arg9[%c0, %c0_0, %c0_1] : memref<10x18x128xf32, #tpu.memory_space<vmem>>, vector<10x18x128xf32>
    tpu.vector_store %arg9[%c0, %c0_0, %c0_1], %1 {strides = array<i32>} : memref<10x18x128xf32, #tpu.memory_space<vmem>>, vector<10x18x128xf32>,
    %c0_2 = arith.constant 0 : index
    %3 = arith.index_cast %0 : i32 to index
    %c0_3 = arith.constant 0 : index
    %c0_4 = arith.constant 0 : index
    %4 = vector.load %arg2[%c0_2, %3, %c0_3, %c0_4] : memref<1x16x16x128xf32, #tpu.memory_space<vmem>>, vector<1x8x16x128xf32>
    %5 = vector.shape_cast %4 : vector<1x8x16x128xf32> to vector<8x16x128xf32>
    %c0_5 = arith.constant 0 : index
    %c0_6 = arith.constant 0 : index
    %6 = vector.load %arg5[%c0_5, %c0_6] : memref<1x128xf32, #tpu.memory_space<vmem>>, vector<1x128xf32>
    %7 = vector.shape_cast %6 : vector<1x128xf32> to vector<1x1x128xf32>
    %c0_7 = arith.constant 0 : index
    %c0_8 = arith.constant 0 : index
    %8 = vector.load %arg6[%c0_7, %c0_8] : memref<1x128xf32, #tpu.memory_space<vmem>>, vector<1x128xf32>
    %9 = vector.shape_cast %8 : vector<1x128xf32> to vector<1x1x128xf32>
    %10 = vector.broadcast %7 : vector<1x1x128xf32> to vector<8x16x128xf32>
    %11 = arith.mulf %5, %10 : vector<8x16x128xf32>
    %12 = vector.broadcast %9 : vector<1x1x128xf32> to vector<8x16x128xf32>
    %13 = arith.addf %11, %12 : vector<8x16x128xf32>
    %cst_9 = arith.constant 0.000000e+00 : f32
    %14 = vector.broadcast %cst_9 : f32 to vector<8x16x128xf32>
    %15 = arith.maximumf %13, %14 : vector<8x16x128xf32>
    %c1 = arith.constant 1 : index
    %c1_10 = arith.constant 1 : index
    %c0_11 = arith.constant 0 : index
    %16 = vector.load %arg9[%c1, %c1_10, %c0_11] : memref<10x18x128xf32, #tpu.memory_space<vmem>>, vector<8x16x128xf32>
    tpu.vector_store %arg9[%c1, %c1_10, %c0_11], %15 {strides = array<i32>} : memref<10x18x128xf32, #tpu.memory_space<vmem>>, vector<8x16x128xf32>,
    %c0_i32 = arith.constant 0 : i32
    %17 = arith.cmpi sgt, %arg1, %c0_i32 : i32
    %18 = arith.extui %17 : i1 to i32
    %c0_i32_12 = arith.constant 0 : i32
    %19 = arith.cmpi ne, %18, %c0_i32_12 : i32
    scf.if %19 {
      %c1_i32_77 = arith.constant 1 : i32
      %87 = arith.subi %0, %c1_i32_77 : i32
      %c0_78 = arith.constant 0 : index
      %88 = arith.index_cast %87 : i32 to index
      %c0_79 = arith.constant 0 : index
      %c0_80 = arith.constant 0 : index
      %89 = vector.load %arg2[%c0_78, %88, %c0_79, %c0_80] : memref<1x16x16x128xf32, #tpu.memory_space<vmem>>, vector<1x1x16x128xf32>
      %90 = vector.shape_cast %89 : vector<1x1x16x128xf32> to vector<1x16x128xf32>
      %c0_81 = arith.constant 0 : index
      %c0_82 = arith.constant 0 : index
      %91 = vector.load %arg5[%c0_81, %c0_82] : memref<1x128xf32, #tpu.memory_space<vmem>>, vector<1x128xf32>
      %92 = vector.shape_cast %91 : vector<1x128xf32> to vector<1x1x128xf32>
      %c0_83 = arith.constant 0 : index
      %c0_84 = arith.constant 0 : index
      %93 = vector.load %arg6[%c0_83, %c0_84] : memref<1x128xf32, #tpu.memory_space<vmem>>, vector<1x128xf32>
      %94 = vector.shape_cast %93 : vector<1x128xf32> to vector<1x1x128xf32>
      %95 = vector.broadcast %92 : vector<1x1x128xf32> to vector<1x16x128xf32>
      %96 = arith.mulf %90, %95 : vector<1x16x128xf32>
      %97 = vector.broadcast %94 : vector<1x1x128xf32> to vector<1x16x128xf32>
      %98 = arith.addf %96, %97 : vector<1x16x128xf32>
      %cst_85 = arith.constant 0.000000e+00 : f32
      %99 = vector.broadcast %cst_85 : f32 to vector<1x16x128xf32>
      %100 = arith.maximumf %98, %99 : vector<1x16x128xf32>
      %c0_86 = arith.constant 0 : index
      %c1_87 = arith.constant 1 : index
      %c0_88 = arith.constant 0 : index
      %101 = vector.load %arg9[%c0_86, %c1_87, %c0_88] : memref<10x18x128xf32, #tpu.memory_space<vmem>>, vector<1x16x128xf32>
      tpu.vector_store %arg9[%c0_86, %c1_87, %c0_88], %100 {strides = array<i32>} : memref<10x18x128xf32, #tpu.memory_space<vmem>>, vector<1x16x128xf32>,
    } else {
    }
    %c1_i32 = arith.constant 1 : i32
    %20 = arith.cmpi slt, %arg1, %c1_i32 : i32
    %21 = arith.extui %20 : i1 to i32
    %c0_i32_13 = arith.constant 0 : i32
    %22 = arith.cmpi ne, %21, %c0_i32_13 : i32
    scf.if %22 {
      %c8_i32_77 = arith.constant 8 : i32
      %87 = arith.addi %0, %c8_i32_77 : i32
      %c0_78 = arith.constant 0 : index
      %88 = arith.index_cast %87 : i32 to index
      %c0_79 = arith.constant 0 : index
      %c0_80 = arith.constant 0 : index
      %89 = vector.load %arg2[%c0_78, %88, %c0_79, %c0_80] : memref<1x16x16x128xf32, #tpu.memory_space<vmem>>, vector<1x1x16x128xf32>
      %90 = vector.shape_cast %89 : vector<1x1x16x128xf32> to vector<1x16x128xf32>
      %c0_81 = arith.constant 0 : index
      %c0_82 = arith.constant 0 : index
      %91 = vector.load %arg5[%c0_81, %c0_82] : memref<1x128xf32, #tpu.memory_space<vmem>>, vector<1x128xf32>
      %92 = vector.shape_cast %91 : vector<1x128xf32> to vector<1x1x128xf32>
      %c0_83 = arith.constant 0 : index
      %c0_84 = arith.constant 0 : index
      %93 = vector.load %arg6[%c0_83, %c0_84] : memref<1x128xf32, #tpu.memory_space<vmem>>, vector<1x128xf32>
      %94 = vector.shape_cast %93 : vector<1x128xf32> to vector<1x1x128xf32>
      %95 = vector.broadcast %92 : vector<1x1x128xf32> to vector<1x16x128xf32>
      %96 = arith.mulf %90, %95 : vector<1x16x128xf32>
      %97 = vector.broadcast %94 : vector<1x1x128xf32> to vector<1x16x128xf32>
      %98 = arith.addf %96, %97 : vector<1x16x128xf32>
      %cst_85 = arith.constant 0.000000e+00 : f32
      %99 = vector.broadcast %cst_85 : f32 to vector<1x16x128xf32>
      %100 = arith.maximumf %98, %99 : vector<1x16x128xf32>
      %c9 = arith.constant 9 : index
      %c1_86 = arith.constant 1 : index
      %c0_87 = arith.constant 0 : index
      %101 = vector.load %arg9[%c9, %c1_86, %c0_87] : memref<10x18x128xf32, #tpu.memory_space<vmem>>, vector<1x16x128xf32>
      tpu.vector_store %arg9[%c9, %c1_86, %c0_87], %100 {strides = array<i32>} : memref<10x18x128xf32, #tpu.memory_space<vmem>>, vector<1x16x128xf32>,
    } else {
    }
    %c0_14 = arith.constant 0 : index
    %c0_15 = arith.constant 0 : index
    %c0_16 = arith.constant 0 : index
    %23 = vector.load %arg9[%c0_14, %c0_15, %c0_16] : memref<10x18x128xf32, #tpu.memory_space<vmem>>, vector<8x16x128xf32>
    %24 = vector.shape_cast %23 : vector<8x16x128xf32> to vector<128x128xf32>
    %25 = arith.truncf %24 : vector<128x128xf32> to vector<128x128xbf16>
    %c0_17 = arith.constant 0 : index
    %c0_18 = arith.constant 0 : index
    %26 = vector.load %arg10[%c0_17, %c0_18] : memref<128x1152xbf16, #tpu.memory_space<vmem>>, vector<128x128xbf16>
    tpu.vector_store %arg10[%c0_17, %c0_18], %25 {strides = array<i32>} : memref<128x1152xbf16, #tpu.memory_space<vmem>>, vector<128x128xbf16>,
    %c0_19 = arith.constant 0 : index
    %c1_20 = arith.constant 1 : index
    %c0_21 = arith.constant 0 : index
    %27 = vector.load %arg9[%c0_19, %c1_20, %c0_21] : memref<10x18x128xf32, #tpu.memory_space<vmem>>, vector<8x16x128xf32>
    %28 = vector.shape_cast %27 : vector<8x16x128xf32> to vector<128x128xf32>
    %29 = arith.truncf %28 : vector<128x128xf32> to vector<128x128xbf16>
    %c0_22 = arith.constant 0 : index
    %c128 = arith.constant 128 : index
    %30 = vector.load %arg10[%c0_22, %c128] : memref<128x1152xbf16, #tpu.memory_space<vmem>>, vector<128x128xbf16>
    tpu.vector_store %arg10[%c0_22, %c128], %29 {strides = array<i32>} : memref<128x1152xbf16, #tpu.memory_space<vmem>>, vector<128x128xbf16>,
    %c0_23 = arith.constant 0 : index
    %c2 = arith.constant 2 : index
    %c0_24 = arith.constant 0 : index
    %31 = vector.load %arg9[%c0_23, %c2, %c0_24] : memref<10x18x128xf32, #tpu.memory_space<vmem>>, vector<8x16x128xf32>
    %32 = vector.shape_cast %31 : vector<8x16x128xf32> to vector<128x128xf32>
    %33 = arith.truncf %32 : vector<128x128xf32> to vector<128x128xbf16>
    %c0_25 = arith.constant 0 : index
    %c256 = arith.constant 256 : index
    %34 = vector.load %arg10[%c0_25, %c256] : memref<128x1152xbf16, #tpu.memory_space<vmem>>, vector<128x128xbf16>
    tpu.vector_store %arg10[%c0_25, %c256], %33 {strides = array<i32>} : memref<128x1152xbf16, #tpu.memory_space<vmem>>, vector<128x128xbf16>,
    %c1_26 = arith.constant 1 : index
    %c0_27 = arith.constant 0 : index
    %c0_28 = arith.constant 0 : index
    %35 = vector.load %arg9[%c1_26, %c0_27, %c0_28] : memref<10x18x128xf32, #tpu.memory_space<vmem>>, vector<8x16x128xf32>
    %36 = vector.shape_cast %35 : vector<8x16x128xf32> to vector<128x128xf32>
    %37 = arith.truncf %36 : vector<128x128xf32> to vector<128x128xbf16>
    %c0_29 = arith.constant 0 : index
    %c384 = arith.constant 384 : index
    %38 = vector.load %arg10[%c0_29, %c384] : memref<128x1152xbf16, #tpu.memory_space<vmem>>, vector<128x128xbf16>
    tpu.vector_store %arg10[%c0_29, %c384], %37 {strides = array<i32>} : memref<128x1152xbf16, #tpu.memory_space<vmem>>, vector<128x128xbf16>,
    %c1_30 = arith.constant 1 : index
    %c1_31 = arith.constant 1 : index
    %c0_32 = arith.constant 0 : index
    %39 = vector.load %arg9[%c1_30, %c1_31, %c0_32] : memref<10x18x128xf32, #tpu.memory_space<vmem>>, vector<8x16x128xf32>
    %40 = vector.shape_cast %39 : vector<8x16x128xf32> to vector<128x128xf32>
    %41 = arith.truncf %40 : vector<128x128xf32> to vector<128x128xbf16>
    %c0_33 = arith.constant 0 : index
    %c512 = arith.constant 512 : index
    %42 = vector.load %arg10[%c0_33, %c512] : memref<128x1152xbf16, #tpu.memory_space<vmem>>, vector<128x128xbf16>
    tpu.vector_store %arg10[%c0_33, %c512], %41 {strides = array<i32>} : memref<128x1152xbf16, #tpu.memory_space<vmem>>, vector<128x128xbf16>,
    %c1_34 = arith.constant 1 : index
    %c2_35 = arith.constant 2 : index
    %c0_36 = arith.constant 0 : index
    %43 = vector.load %arg9[%c1_34, %c2_35, %c0_36] : memref<10x18x128xf32, #tpu.memory_space<vmem>>, vector<8x16x128xf32>
    %44 = vector.shape_cast %43 : vector<8x16x128xf32> to vector<128x128xf32>
    %45 = arith.truncf %44 : vector<128x128xf32> to vector<128x128xbf16>
    %c0_37 = arith.constant 0 : index
    %c640 = arith.constant 640 : index
    %46 = vector.load %arg10[%c0_37, %c640] : memref<128x1152xbf16, #tpu.memory_space<vmem>>, vector<128x128xbf16>
    tpu.vector_store %arg10[%c0_37, %c640], %45 {strides = array<i32>} : memref<128x1152xbf16, #tpu.memory_space<vmem>>, vector<128x128xbf16>,
    %c2_38 = arith.constant 2 : index
    %c0_39 = arith.constant 0 : index
    %c0_40 = arith.constant 0 : index
    %47 = vector.load %arg9[%c2_38, %c0_39, %c0_40] : memref<10x18x128xf32, #tpu.memory_space<vmem>>, vector<8x16x128xf32>
    %48 = vector.shape_cast %47 : vector<8x16x128xf32> to vector<128x128xf32>
    %49 = arith.truncf %48 : vector<128x128xf32> to vector<128x128xbf16>
    %c0_41 = arith.constant 0 : index
    %c768 = arith.constant 768 : index
    %50 = vector.load %arg10[%c0_41, %c768] : memref<128x1152xbf16, #tpu.memory_space<vmem>>, vector<128x128xbf16>
    tpu.vector_store %arg10[%c0_41, %c768], %49 {strides = array<i32>} : memref<128x1152xbf16, #tpu.memory_space<vmem>>, vector<128x128xbf16>,
    %c2_42 = arith.constant 2 : index
    %c1_43 = arith.constant 1 : index
    %c0_44 = arith.constant 0 : index
    %51 = vector.load %arg9[%c2_42, %c1_43, %c0_44] : memref<10x18x128xf32, #tpu.memory_space<vmem>>, vector<8x16x128xf32>
    %52 = vector.shape_cast %51 : vector<8x16x128xf32> to vector<128x128xf32>
    %53 = arith.truncf %52 : vector<128x128xf32> to vector<128x128xbf16>
    %c0_45 = arith.constant 0 : index
    %c896 = arith.constant 896 : index
    %54 = vector.load %arg10[%c0_45, %c896] : memref<128x1152xbf16, #tpu.memory_space<vmem>>, vector<128x128xbf16>
    tpu.vector_store %arg10[%c0_45, %c896], %53 {strides = array<i32>} : memref<128x1152xbf16, #tpu.memory_space<vmem>>, vector<128x128xbf16>,
    %c2_46 = arith.constant 2 : index
    %c2_47 = arith.constant 2 : index
    %c0_48 = arith.constant 0 : index
    %55 = vector.load %arg9[%c2_46, %c2_47, %c0_48] : memref<10x18x128xf32, #tpu.memory_space<vmem>>, vector<8x16x128xf32>
    %56 = vector.shape_cast %55 : vector<8x16x128xf32> to vector<128x128xf32>
    %57 = arith.truncf %56 : vector<128x128xf32> to vector<128x128xbf16>
    %c0_49 = arith.constant 0 : index
    %c1024 = arith.constant 1024 : index
    %58 = vector.load %arg10[%c0_49, %c1024] : memref<128x1152xbf16, #tpu.memory_space<vmem>>, vector<128x128xbf16>
    tpu.vector_store %arg10[%c0_49, %c1024], %57 {strides = array<i32>} : memref<128x1152xbf16, #tpu.memory_space<vmem>>, vector<128x128xbf16>,
    %c0_50 = arith.constant 0 : index
    %c0_51 = arith.constant 0 : index
    %59 = vector.load %arg10[%c0_50, %c0_51] : memref<128x1152xbf16, #tpu.memory_space<vmem>>, vector<128x1152xbf16>
    %c0_52 = arith.constant 0 : index
    %c0_53 = arith.constant 0 : index
    %60 = vector.load %arg3[%c0_52, %c0_53] : memref<1152x128xbf16, #tpu.memory_space<vmem>>, vector<1152x128xbf16>
    %cst_54 = arith.constant dense<0.000000e+00> : vector<128x128xf32>
    %61 = tpu.matmul %59, %60, %cst_54 {dimension_numbers = #tpu.dot_dimension_numbers<[1], [0], [0], [1], [0, 0, 1, 1], [], []>} : vector<128x1152xbf16>, vector<1152x128xbf16>, vector<128x128xf32> -> vector<128x128xf32>
    %c0_55 = arith.constant 0 : index
    %c0_56 = arith.constant 0 : index
    %62 = vector.load %arg4[%c0_55, %c0_56] : memref<1x128xf32, #tpu.memory_space<vmem>>, vector<1x128xf32>
    %63 = vector.broadcast %62 : vector<1x128xf32> to vector<128x128xf32>
    %64 = arith.addf %61, %63 : vector<128x128xf32>
    %65 = vector.shape_cast %64 : vector<128x128xf32> to vector<1x8x16x128xf32>
    %c0_57 = arith.constant 0 : index
    %c0_58 = arith.constant 0 : index
    %c0_59 = arith.constant 0 : index
    %c0_60 = arith.constant 0 : index
    %66 = vector.load %arg7[%c0_57, %c0_58, %c0_59, %c0_60] : memref<1x8x16x128xf32, #tpu.memory_space<vmem>>, vector<1x8x16x128xf32>
    tpu.vector_store %arg7[%c0_57, %c0_58, %c0_59, %c0_60], %65 {strides = array<i32>} : memref<1x8x16x128xf32, #tpu.memory_space<vmem>>, vector<1x8x16x128xf32>,
    %c0_i32_61 = arith.constant 0 : i32
    %67 = arith.cmpi eq, %arg1, %c0_i32_61 : i32
    %68 = arith.extui %67 : i1 to i32
    %c0_i32_62 = arith.constant 0 : i32
    %69 = arith.cmpi ne, %68, %c0_i32_62 : i32
    scf.if %69 {
      %cst_77 = arith.constant 0.000000e+00 : f32
      %87 = vector.broadcast %cst_77 : f32 to vector<1x8x128xf32>
      %c0_78 = arith.constant 0 : index
      %c0_79 = arith.constant 0 : index
      %c0_80 = arith.constant 0 : index
      %88 = vector.load %arg8[%c0_78, %c0_79, %c0_80] : memref<1x8x128xf32, #tpu.memory_space<vmem>>, vector<1x8x128xf32>
      tpu.vector_store %arg8[%c0_78, %c0_79, %c0_80], %87 {strides = array<i32>} : memref<1x8x128xf32, #tpu.memory_space<vmem>>, vector<1x8x128xf32>,
    } else {
    }
    %c0_63 = arith.constant 0 : index
    %c0_64 = arith.constant 0 : index
    %c0_65 = arith.constant 0 : index
    %70 = vector.load %arg8[%c0_63, %c0_64, %c0_65] : memref<1x8x128xf32, #tpu.memory_space<vmem>>, vector<1x1x128xf32>
    %71 = vector.shape_cast %70 : vector<1x1x128xf32> to vector<1x128xf32>
    %cst_66 = arith.constant dense<0.000000e+00> : vector<128xf32>
    %72 = vector.multi_reduction <add>, %64, %cst_66 [0] : vector<128x128xf32> to vector<128xf32>
    %73 = vector.shape_cast %72 : vector<128xf32> to vector<1x128xf32>
    %74 = arith.addf %71, %73 : vector<1x128xf32>
    %c0_67 = arith.constant 0 : index
    %c0_68 = arith.constant 0 : index
    %c0_69 = arith.constant 0 : index
    %75 = vector.load %arg8[%c0_67, %c0_68, %c0_69] : memref<1x8x128xf32, #tpu.memory_space<vmem>>, vector<1x1x128xf32>
    %76 = vector.shape_cast %75 : vector<1x1x128xf32> to vector<1x128xf32>
    %77 = vector.shape_cast %74 : vector<1x128xf32> to vector<1x1x128xf32>
    tpu.vector_store %arg8[%c0_67, %c0_68, %c0_69], %77 {strides = array<i32>} : memref<1x8x128xf32, #tpu.memory_space<vmem>>, vector<1x1x128xf32>,
    %c0_70 = arith.constant 0 : index
    %c1_71 = arith.constant 1 : index
    %c0_72 = arith.constant 0 : index
    %78 = vector.load %arg8[%c0_70, %c1_71, %c0_72] : memref<1x8x128xf32, #tpu.memory_space<vmem>>, vector<1x1x128xf32>
    %79 = vector.shape_cast %78 : vector<1x1x128xf32> to vector<1x128xf32>
    %80 = arith.mulf %64, %64 : vector<128x128xf32>
    %cst_73 = arith.constant dense<0.000000e+00> : vector<128xf32>
    %81 = vector.multi_reduction <add>, %80, %cst_73 [0] : vector<128x128xf32> to vector<128xf32>
    %82 = vector.shape_cast %81 : vector<128xf32> to vector<1x128xf32>
    %83 = arith.addf %79, %82 : vector<1x128xf32>
    %c0_74 = arith.constant 0 : index
    %c1_75 = arith.constant 1 : index
    %c0_76 = arith.constant 0 : index
    %84 = vector.load %arg8[%c0_74, %c1_75, %c0_76] : memref<1x8x128xf32, #tpu.memory_space<vmem>>, vector<1x1x128xf32>
    %85 = vector.shape_cast %84 : vector<1x1x128xf32> to vector<1x128xf32>
    %86 = vector.shape_cast %83 : vector<1x128xf32> to vector<1x1x128xf32>
    tpu.vector_store %arg8[%c0_74, %c1_75, %c0_76], %86 {strides = array<i32>} : memref<1x8x128xf32, #tpu.memory_space<vmem>>, vector<1x1x128xf32>,
    return
  }
  func.func @transform_0(%arg0: i32, %arg1: i32) -> (i32, i32, i32, i32) {
    %c0_i32 = arith.constant 0 : i32
    %c0_i32_0 = arith.constant 0 : i32
    %c0_i32_1 = arith.constant 0 : i32
    %c0_i32_2 = arith.constant 0 : i32
    return %arg0, %c0_i32, %c0_i32_0, %c0_i32_1 : i32, i32, i32, i32
  }
  func.func @transform_1(%arg0: i32, %arg1: i32) -> (i32, i32) {
    %c0_i32 = arith.constant 0 : i32
    %c0_i32_0 = arith.constant 0 : i32
    %c0_i32_1 = arith.constant 0 : i32
    return %c0_i32, %c0_i32_0 : i32, i32
  }
  func.func @transform_2(%arg0: i32, %arg1: i32) -> (i32, i32) {
    %c0_i32 = arith.constant 0 : i32
    %c0_i32_0 = arith.constant 0 : i32
    %c0_i32_1 = arith.constant 0 : i32
    return %c0_i32, %c0_i32_0 : i32, i32
  }
  func.func @transform_3(%arg0: i32, %arg1: i32) -> (i32, i32) {
    %c0_i32 = arith.constant 0 : i32
    %c0_i32_0 = arith.constant 0 : i32
    %c0_i32_1 = arith.constant 0 : i32
    return %c0_i32, %c0_i32_0 : i32, i32
  }
  func.func @transform_4(%arg0: i32, %arg1: i32) -> (i32, i32) {
    %c0_i32 = arith.constant 0 : i32
    %c0_i32_0 = arith.constant 0 : i32
    %c0_i32_1 = arith.constant 0 : i32
    return %c0_i32, %c0_i32_0 : i32, i32
  }
  func.func @transform_5(%arg0: i32, %arg1: i32) -> (i32, i32, i32, i32) {
    %c0_i32 = arith.constant 0 : i32
    %c0_i32_0 = arith.constant 0 : i32
    %c0_i32_1 = arith.constant 0 : i32
    return %arg0, %arg1, %c0_i32, %c0_i32_0 : i32, i32, i32, i32
  }
  func.func @transform_6(%arg0: i32, %arg1: i32) -> (i32, i32, i32) {
    %c0_i32 = arith.constant 0 : i32
    %c0_i32_0 = arith.constant 0 : i32
    %c0_i32_1 = arith.constant 0 : i32
    return %arg0, %c0_i32, %c0_i32_0 : i32, i32, i32
  }
}

module attributes {stable_mosaic.version = 11 : i64} {
  func.func @_bn_relu_kernel(%arg0: i32, %arg1: i32, %arg2: memref<1x8x16x128xf32, #tpu.memory_space<vmem>>, %arg3: memref<1x128xf32, #tpu.memory_space<vmem>>, %arg4: memref<1x128xf32, #tpu.memory_space<vmem>>, %arg5: memref<1x8x16x128xf32, #tpu.memory_space<vmem>>) attributes {dimension_semantics = [#tpu.dimension_semantics<parallel>, #tpu.dimension_semantics<parallel>], iteration_bounds = array<i64: 2, 2>, scalar_prefetch = 0 : i64, scratch_operands = 0 : i64, tpu.core_type = #tpu.core_type<tc>, window_params = [{transform_indices = @transform_0, window_bounds = array<i64: 1, 8, 16, 128>}, {pipeline_mode = #tpu.pipeline_mode<synchronous>, transform_indices = @transform_1, window_bounds = array<i64: 1, 128>}, {pipeline_mode = #tpu.pipeline_mode<synchronous>, transform_indices = @transform_2, window_bounds = array<i64: 1, 128>}, {transform_indices = @transform_3, window_bounds = array<i64: 1, 8, 16, 128>}]} {
    %c0 = arith.constant 0 : index
    %c0_0 = arith.constant 0 : index
    %0 = vector.load %arg3[%c0, %c0_0] : memref<1x128xf32, #tpu.memory_space<vmem>>, vector<1x128xf32>
    %1 = vector.shape_cast %0 : vector<1x128xf32> to vector<1x1x1x128xf32>
    %c0_1 = arith.constant 0 : index
    %c0_2 = arith.constant 0 : index
    %2 = vector.load %arg4[%c0_1, %c0_2] : memref<1x128xf32, #tpu.memory_space<vmem>>, vector<1x128xf32>
    %3 = vector.shape_cast %2 : vector<1x128xf32> to vector<1x1x1x128xf32>
    %c0_3 = arith.constant 0 : index
    %c0_4 = arith.constant 0 : index
    %c0_5 = arith.constant 0 : index
    %c0_6 = arith.constant 0 : index
    %4 = vector.load %arg2[%c0_3, %c0_4, %c0_5, %c0_6] : memref<1x8x16x128xf32, #tpu.memory_space<vmem>>, vector<1x8x16x128xf32>
    %5 = vector.broadcast %1 : vector<1x1x1x128xf32> to vector<1x8x16x128xf32>
    %6 = arith.mulf %4, %5 : vector<1x8x16x128xf32>
    %7 = vector.broadcast %3 : vector<1x1x1x128xf32> to vector<1x8x16x128xf32>
    %8 = arith.addf %6, %7 : vector<1x8x16x128xf32>
    %cst = arith.constant 0.000000e+00 : f32
    %9 = vector.broadcast %cst : f32 to vector<1x8x16x128xf32>
    %10 = arith.maximumf %8, %9 : vector<1x8x16x128xf32>
    %c0_7 = arith.constant 0 : index
    %c0_8 = arith.constant 0 : index
    %c0_9 = arith.constant 0 : index
    %c0_10 = arith.constant 0 : index
    %11 = vector.load %arg5[%c0_7, %c0_8, %c0_9, %c0_10] : memref<1x8x16x128xf32, #tpu.memory_space<vmem>>, vector<1x8x16x128xf32>
    tpu.vector_store %arg5[%c0_7, %c0_8, %c0_9, %c0_10], %10 {strides = array<i32>} : memref<1x8x16x128xf32, #tpu.memory_space<vmem>>, vector<1x8x16x128xf32>,
    return
  }
  func.func @transform_0(%arg0: i32, %arg1: i32) -> (i32, i32, i32, i32) {
    %c0_i32 = arith.constant 0 : i32
    %c0_i32_0 = arith.constant 0 : i32
    %c0_i32_1 = arith.constant 0 : i32
    return %arg0, %arg1, %c0_i32, %c0_i32_0 : i32, i32, i32, i32
  }
  func.func @transform_1(%arg0: i32, %arg1: i32) -> (i32, i32) {
    %c0_i32 = arith.constant 0 : i32
    %c0_i32_0 = arith.constant 0 : i32
    %c0_i32_1 = arith.constant 0 : i32
    return %c0_i32, %c0_i32_0 : i32, i32
  }
  func.func @transform_2(%arg0: i32, %arg1: i32) -> (i32, i32) {
    %c0_i32 = arith.constant 0 : i32
    %c0_i32_0 = arith.constant 0 : i32
    %c0_i32_1 = arith.constant 0 : i32
    return %c0_i32, %c0_i32_0 : i32, i32
  }
  func.func @transform_3(%arg0: i32, %arg1: i32) -> (i32, i32, i32, i32) {
    %c0_i32 = arith.constant 0 : i32
    %c0_i32_0 = arith.constant 0 : i32
    %c0_i32_1 = arith.constant 0 : i32
    return %arg0, %arg1, %c0_i32, %c0_i32_0 : i32, i32, i32, i32
  }
}

</mosaic_0001>

<llo_original>
// kernel: conv_block.5
$region0: #{conv_block.5}
  #allocation0 [shape = 'u32[]', space=smem, size = 0x4, offset = 0x4, fixed_abs, tag = 'smem constant byte address 0x4 - core index']
  #allocation1 [shape = 'u32[144,128]{1,0:T(1,128)}', space=vmem, size = 0x12000, scoped, tag = 'internal scratch']
  %s0 = inlined_call_operand.vmem [shape: f32[2,16,16,128], index: 0, kind: input, shape index: {}]
  %s1 = inlined_call_operand.vmem [shape: f32[1,128], index: 1, kind: input, shape index: {}]
  %s2 = inlined_call_operand.vmem [shape: f32[1,128], index: 2, kind: input, shape index: {}]
  %s3 = inlined_call_operand.vmem [shape: f32[2,16,16,128], index: 3, kind: output, shape index: {}]
  %s4 = sld [smem:[#allocation0]]
  $region45: #{conv_block.5} parent=0
    _
  %s6 = ssub.s32 1, %s4
  %s7 = scalar_select 0, %s6, %s4
  loop: start=0, step=1, limit=6
  $region2: #{conv_block.5} parent=0 // loop_pre_header
    _
  $region3: #{conv_block.5} parent=0 // loop_header
    %s9 = sphi 0, %s13
    %p10 = scmp.ge.s32.totalorder %s9, 6
    %s16 = sphi 0, %s28
    %s17 = sphi 0, %s24
    %s18 = sphi 0, %s16
    %s19 = sphi 0, %s17
    %s20 = sphi 0, %s18
    %s21 = sphi 0, %s19
    %s33 = sphi 0, %s35
    %s36 = sphi 0, %s33
    %s37 = sphi 0, %s36
    %s53 = sphi 0, %s37
    %s57 = sphi 0, %s57
    %s59 = sphi 0, %s57
    %s60 = sphi 0, %s59
    %s74 = sphi 0, %s60
    %s78 = sphi 0, %s78
    %s80 = sphi 0, %s78
    %s81 = sphi 0, %s80
    %s95 = sphi 0, %s81
    %s103 = sphi 0, %s105
    %s106 = sphi 0, %s103
    %s107 = sphi 0, %s106
    %s123 = sphi 0, %s107
  $region4: #{conv_block.5} parent=0 // loop_header_branch
    %12 = sbr.rel (%p10) target = $region8
  $region5: #{conv_block.5} parent=0 // loop_body
    %s14 = ssub.s32 %s9, 1
    %s15 = ssub.s32 %s9, 2
    %s22 = sadd.s32 1, %s17
    %p23 = scmp.ge.s32.totalorder %s22, 2
    %s24 = scalar_select %p23, 0, %s22
    %s25 = sadd.s32 1, %s16
    %s26 = scalar_select %p23, %s25, %s16
    %p27 = scmp.ge.s32.totalorder %s26, 2
    %s28 = scalar_select %p27, 0, %s26
    %s29 = ssub.s32 %s16, %s28
    %s30 = ssub.s32 %s17, %s24
    %s31 = sor.u32 %s29, %s30
    %p32 = scmp.eq.s32.totalorder %s31, 0
    %s34 = sadd.s32 %s33, 1
    %s35 = scalar_select %p32, %s33, %s34
    %p38 = pneg %p32
    %p39 = scmp.eq.s32.totalorder %s9, 3
    %p40 = por %p38, %p39
    %p41 = scmp.ne.s32.totalorder %s33, %s36
    %p42 = scmp.eq.s32.totalorder %s9, 0
    %p43 = por %p41, %p42
    %p44 = scmp.ne.s32.totalorder %s33, %s36
    %p45 = scmp.eq.s32.totalorder %s14, 3
    %p46 = por %p44, %p45
    %p47 = scmp.ne.s32.totalorder %s36, %s37
    %p48 = scmp.eq.s32.totalorder %s14, 0
    %p49 = por %p47, %p48
    %p50 = scmp.ne.s32.totalorder %s36, %s37
    %p51 = scmp.eq.s32.totalorder %s15, 3
    %p52 = por %p50, %p51
    %p54 = scmp.ne.s32.totalorder %s37, %s53
    %p55 = scmp.eq.s32.totalorder %s15, 0
    %p56 = por %p54, %p55
    %s58 = sadd.s32 %s57, 1
    %p61 = scmp.eq.s32.totalorder %s9, 3
    %p62 = scmp.ne.s32.totalorder %s57, %s59
    %p63 = scmp.eq.s32.totalorder %s9, 0
    %p64 = por %p62, %p63
    %p65 = scmp.ne.s32.totalorder %s57, %s59
    %p66 = scmp.eq.s32.totalorder %s14, 3
    %p67 = por %p65, %p66
    %p68 = scmp.ne.s32.totalorder %s59, %s60
    %p69 = scmp.eq.s32.totalorder %s14, 0
    %p70 = por %p68, %p69
    %p71 = scmp.ne.s32.totalorder %s59, %s60
    %p72 = scmp.eq.s32.totalorder %s15, 3
    %p73 = por %p71, %p72
    %p75 = scmp.ne.s32.totalorder %s60, %s74
    %p76 = scmp.eq.s32.totalorder %s15, 0
    %p77 = por %p75, %p76
    %s79 = sadd.s32 %s78, 1
    %p82 = scmp.eq.s32.totalorder %s9, 3
    %p83 = scmp.ne.s32.totalorder %s78, %s80
    %p84 = scmp.eq.s32.totalorder %s9, 0
    %p85 = por %p83, %p84
    %p86 = scmp.ne.s32.totalorder %s78, %s80
    %p87 = scmp.eq.s32.totalorder %s14, 3
    %p88 = por %p86, %p87
    %p89 = scmp.ne.s32.totalorder %s80, %s81
    %p90 = scmp.eq.s32.totalorder %s14, 0
    %p91 = por %p89, %p90
    %p92 = scmp.ne.s32.totalorder %s80, %s81
    %p93 = scmp.eq.s32.totalorder %s15, 3
    %p94 = por %p92, %p93
    %p96 = scmp.ne.s32.totalorder %s81, %s95
    %p97 = scmp.eq.s32.totalorder %s15, 0
    %p98 = por %p96, %p97
    %s99 = ssub.s32 %s16, %s28
    %s100 = ssub.s32 %s17, %s24
    %s101 = sor.u32 %s99, %s100
    %p102 = scmp.eq.s32.totalorder %s101, 0
    %s104 = sadd.s32 %s103, 1
    %s105 = scalar_select %p102, %s103, %s104
    %p108 = pneg %p102
    %p109 = scmp.eq.s32.totalorder %s9, 3
    %p110 = por %p108, %p109
    %p111 = scmp.ne.s32.totalorder %s103, %s106
    %p112 = scmp.eq.s32.totalorder %s9, 0
    %p113 = por %p111, %p112
    %p114 = scmp.ne.s32.totalorder %s103, %s106
    %p115 = scmp.eq.s32.totalorder %s14, 3
    %p116 = por %p114, %p115
    %p117 = scmp.ne.s32.totalorder %s106, %s107
    %p118 = scmp.eq.s32.totalorder %s14, 0
    %p119 = por %p117, %p118
    %p120 = scmp.ne.s32.totalorder %s106, %s107
    %p121 = scmp.eq.s32.totalorder %s15, 3
    %p122 = por %p120, %p121
    %p124 = scmp.ne.s32.totalorder %s107, %s123
    %p125 = scmp.eq.s32.totalorder %s15, 0
    %p126 = por %p124, %p125
    %p127 = scmp.le.s32.totalorder 1, %s9
    %p128 = scmp.lt.s32.totalorder %s9, 5
    %p129 = pnand %p127, %p128
    %p130 = pneg %p129
    // Predicated region
    $region9: #{conv_block.5} parent=5 // pred_check
      _
    $region10: #{conv_block.5} parent=5 // pred_check_branch
      %132 = sbr.rel (%p129) target = $region12
    $region11: #{conv_block.5} parent=5 // pred_region
      %s133 = ssub.s32 %s9, 1
      // Predicated region
      $region13: #{conv_block.5} parent=11 // pred_check
        %p134 = pneg %p70
      $region14: #{conv_block.5} parent=11 // pred_check_branch
        %136 = sbr.rel (%p134) target = $region16
      $region15: #{conv_block.5} parent=11 // pred_region
        _
      $region16: #{conv_block.5} parent=11 // pred_fallthru
        _
      // Predicated region
      $region17: #{conv_block.5} parent=11 // pred_check
        %p137 = pneg %p91
      $region18: #{conv_block.5} parent=11 // pred_check_branch
        %139 = sbr.rel (%p137) target = $region20
      $region19: #{conv_block.5} parent=11 // pred_region
        _
      $region20: #{conv_block.5} parent=11 // pred_fallthru
        _
    $region12: #{conv_block.5} parent=5 // pred_fallthru
      _
    %p140 = scmp.lt.s32.totalorder %s9, 4
    // Predicated region
    $region21: #{conv_block.5} parent=5 // pred_check
      %p141 = pneg %p140
    $region22: #{conv_block.5} parent=5 // pred_check_branch
      %143 = sbr.rel (%p141) target = $region24
    $region23: #{conv_block.5} parent=5 // pred_region
      // Predicated region
      $region25: #{conv_block.5} parent=23 // pred_check
        %p144 = pneg %p43
      $region26: #{conv_block.5} parent=23 // pred_check_branch
        %146 = sbr.rel (%p144) target = $region28
      $region27: #{conv_block.5} parent=23 // pred_region
        %s147 = smul.u32 8, %s17
        %p148 = scmp.lt.s32.totalorder %s16, 1
        %s149 = scalar_select %p148, %s16, 1
        %p150 = scmp.lt.s32.totalorder %s147, 15
        %s151 = scalar_select %p150, %s147, 15
        %s152 = smul.addr %s151, 2
        %s153 = smul.addr %s149, 32
        %s154 = sadd.s32 %s152, %s153
        %s155 = smul.addr %s154, 8
        %s156 = scalar_lea.vmem %s0, %s155
        %s157 = smul.u32 8, %s17
      $region28: #{conv_block.5} parent=23 // pred_fallthru
        _
    $region24: #{conv_block.5} parent=5 // pred_fallthru
      _
    %p158 = scmp.le.s32.totalorder 1, %s9
    %p159 = scmp.lt.s32.totalorder %s9, 5
    %p160 = pnand %p158, %p159
    %p161 = pneg %p160
    // Predicated region
    $region29: #{conv_block.5} parent=5 // pred_check
      _
    $region30: #{conv_block.5} parent=5 // pred_check_branch
      %163 = sbr.rel (%p160) target = $region32
    $region31: #{conv_block.5} parent=5 // pred_region
      %s164 = ssub.s32 %s9, 1
      %s165 = smul.u32 8, %s19
      %p166 = scmp.lt.s32.totalorder %s18, 1
      %s167 = scalar_select %p166, %s18, 1
      %p168 = scmp.lt.s32.totalorder %s165, 15
      %s169 = scalar_select %p168, %s165, 15
      %s170 = smul.addr %s169, 2
      %s171 = smul.addr %s167, 32
      %s172 = sadd.s32 %s170, %s171
      %s173 = smul.addr %s172, 8
      %s174 = scalar_lea.vmem %s0, %s173
      %p175 = pneg %p49
      %p176 = pneg %p46
      %p177 = pneg %p70
      %p178 = pneg %p67
      %p179 = pneg %p91
      %p180 = pneg %p88
      %p181 = pneg %p119
      %p182 = pneg %p116
      %s183 = smul.u32 8, %s19
      %p184 = scmp.lt.s32.totalorder %s18, 1
      %s185 = scalar_select %p184, %s18, 1
      %p186 = scmp.lt.s32.totalorder %s183, 15
      %s187 = scalar_select %p186, %s183, 15
      %s188 = smul.addr %s187, 2
      %s189 = smul.addr %s185, 32
      %s190 = sadd.s32 %s188, %s189
      %s191 = smul.addr %s190, 8
      %s192 = scalar_lea.vmem %s3, %s191
      %s193 = smul.u32 8, %s19
      %p194 = scmp.lt.s32.totalorder %s18, 1
      %s195 = scalar_select %p194, %s18, 1
      %p196 = scmp.lt.s32.totalorder %s193, 15
      %s197 = scalar_select %p196, %s193, 15
      %s198 = smul.addr %s197, 2
      %s199 = smul.addr %s195, 32
      %s200 = sadd.s32 %s198, %s199
      %s201 = smul.addr %s200, 8
      %s202 = scalar_lea.vmem %s0, %s201
      %s203 = smul.u32 8, %s19
      %s204 = smul.u32 8, %s19
      %p205 = scmp.lt.s32.totalorder %s18, 1
      %s206 = scalar_select %p205, %s18, 1
      %p207 = scmp.lt.s32.totalorder %s204, 15
      %s208 = scalar_select %p207, %s204, 15
      %s209 = smul.addr %s208, 2
      %s210 = smul.addr %s206, 32
      %s211 = sadd.s32 %s209, %s210
      %s212 = smul.addr %s211, 8
      %s213 = scalar_lea.vmem %s3, %s212
      %s214 = smul.u32 8, %s19
      %v215 = vld [vmem:[%s1] sm:$0x1]
      %v216 = vld [vmem:[%s2] sm:$0x1]
      %v217 = vld [vmem:[%s202] sm:$0xff]
      %v218 = vld [vmem:[%s202 + $0x8] sm:$0xff]
      %v219 = vld [vmem:[%s202 + $0x10] sm:$0xff]
      %v220 = vld [vmem:[%s202 + $0x18] sm:$0xff]
      %v221 = vld [vmem:[%s202 + $0x20] sm:$0xff]
      %v222 = vld [vmem:[%s202 + $0x28] sm:$0xff]
      %v223 = vld [vmem:[%s202 + $0x30] sm:$0xff]
      %v224 = vld [vmem:[%s202 + $0x38] sm:$0xff]
      %v225 = vld [vmem:[%s202 + $0x40] sm:$0xff]
      %v226 = vld [vmem:[%s202 + $0x48] sm:$0xff]
      %v227 = vld [vmem:[%s202 + $0x50] sm:$0xff]
      %v228 = vld [vmem:[%s202 + $0x58] sm:$0xff]
      %v229 = vld [vmem:[%s202 + $0x60] sm:$0xff]
      %v230 = vld [vmem:[%s202 + $0x68] sm:$0xff]
      %v231 = vld [vmem:[%s202 + $0x70] sm:$0xff]
      %v232 = vld [vmem:[%s202 + $0x78] sm:$0xff]
      %v234 = vlaneseq
      %v235 = vshrl.u32 %v234, 7
      %v236 = vsub.s32 0, %v235
      %v237 = vrot.slane %v215, %v236
      %v239 = vmul.f32 %v217, %v237
      %v240 = vmul.f32 %v218, %v237
      %v241 = vmul.f32 %v219, %v237
      %v242 = vmul.f32 %v220, %v237
      %v243 = vmul.f32 %v221, %v237
      %v244 = vmul.f32 %v222, %v237
      %v245 = vmul.f32 %v223, %v237
      %v246 = vmul.f32 %v224, %v237
      %v247 = vmul.f32 %v225, %v237
      %v248 = vmul.f32 %v226, %v237
      %v249 = vmul.f32 %v227, %v237
      %v250 = vmul.f32 %v228, %v237
      %v251 = vmul.f32 %v229, %v237
      %v252 = vmul.f32 %v230, %v237
      %v253 = vmul.f32 %v231, %v237
      %v254 = vmul.f32 %v232, %v237
      %v256 = vlaneseq
      %v257 = vshrl.u32 %v256, 7
      %v258 = vsub.s32 0, %v257
      %v259 = vrot.slane %v216, %v258
      %v261 = vadd.f32 %v239, %v259
      %v262 = vadd.f32 %v240, %v259
      %v263 = vadd.f32 %v241, %v259
      %v264 = vadd.f32 %v242, %v259
      %v265 = vadd.f32 %v243, %v259
      %v266 = vadd.f32 %v244, %v259
      %v267 = vadd.f32 %v245, %v259
      %v268 = vadd.f32 %v246, %v259
      %v269 = vadd.f32 %v247, %v259
      %v270 = vadd.f32 %v248, %v259
      %v271 = vadd.f32 %v249, %v259
      %v272 = vadd.f32 %v250, %v259
      %v273 = vadd.f32 %v251, %v259
      %v274 = vadd.f32 %v252, %v259
      %v275 = vadd.f32 %v253, %v259
      %v276 = vadd.f32 %v254, %v259
      %v277 = vmax.f32 %v261, 0.0
      %v278 = vmax.f32 %v262, 0.0
      %v279 = vmax.f32 %v263, 0.0
      %v280 = vmax.f32 %v264, 0.0
      %v281 = vmax.f32 %v265, 0.0
      %v282 = vmax.f32 %v266, 0.0
      %v283 = vmax.f32 %v267, 0.0
      %v284 = vmax.f32 %v268, 0.0
      %v285 = vmax.f32 %v269, 0.0
      %v286 = vmax.f32 %v270, 0.0
      %v287 = vmax.f32 %v271, 0.0
      %v288 = vmax.f32 %v272, 0.0
      %v289 = vmax.f32 %v273, 0.0
      %v290 = vmax.f32 %v274, 0.0
      %v291 = vmax.f32 %v275, 0.0
      %v292 = vmax.f32 %v276, 0.0
      %293 = vst [vmem:[%s213] sm:$0xff] %v277
      %294 = vst [vmem:[%s213 + $0x8] sm:$0xff] %v278
      %295 = vst [vmem:[%s213 + $0x10] sm:$0xff] %v279
      %296 = vst [vmem:[%s213 + $0x18] sm:$0xff] %v280
      %297 = vst [vmem:[%s213 + $0x20] sm:$0xff] %v281
      %298 = vst [vmem:[%s213 + $0x28] sm:$0xff] %v282
      %299 = vst [vmem:[%s213 + $0x30] sm:$0xff] %v283
      %300 = vst [vmem:[%s213 + $0x38] sm:$0xff] %v284
      %301 = vst [vmem:[%s213 + $0x40] sm:$0xff] %v285
      %302 = vst [vmem:[%s213 + $0x48] sm:$0xff] %v286
      %303 = vst [vmem:[%s213 + $0x50] sm:$0xff] %v287
      %304 = vst [vmem:[%s213 + $0x58] sm:$0xff] %v288
      %305 = vst [vmem:[%s213 + $0x60] sm:$0xff] %v289
      %306 = vst [vmem:[%s213 + $0x68] sm:$0xff] %v290
      %307 = vst [vmem:[%s213 + $0x70] sm:$0xff] %v291
      %308 = vst [vmem:[%s213 + $0x78] sm:$0xff] %v292
      %s309 = smul.u32 8, %s19
      %p310 = scmp.lt.s32.totalorder %s18, 1
      %s311 = scalar_select %p310, %s18, 1
      %p312 = scmp.lt.s32.totalorder %s309, 15
      %s313 = scalar_select %p312, %s309, 15
      %s314 = smul.addr %s313, 2
      %s315 = smul.addr %s311, 32
      %s316 = sadd.s32 %s314, %s315
      %s317 = smul.addr %s316, 8
      %s318 = scalar_lea.vmem %s3, %s317
      // Predicated region
      $region33: #{conv_block.5} parent=31 // pred_check
        %p319 = pneg %p116
      $region34: #{conv_block.5} parent=31 // pred_check_branch
        %321 = sbr.rel (%p319) target = $region36
      $region35: #{conv_block.5} parent=31 // pred_region
        %s322 = smul.u32 8, %s19
      $region36: #{conv_block.5} parent=31 // pred_fallthru
        _
    $region32: #{conv_block.5} parent=5 // pred_fallthru
      _
    %p323 = scmp.le.s32.totalorder 2, %s9
    // Predicated region
    $region37: #{conv_block.5} parent=5 // pred_check
      %p324 = pneg %p323
    $region38: #{conv_block.5} parent=5 // pred_check_branch
      %326 = sbr.rel (%p324) target = $region40
    $region39: #{conv_block.5} parent=5 // pred_region
      %s327 = ssub.s32 %s9, 2
      // Predicated region
      $region41: #{conv_block.5} parent=39 // pred_check
        %p328 = pneg %p122
      $region42: #{conv_block.5} parent=39 // pred_check_branch
        %330 = sbr.rel (%p328) target = $region44
      $region43: #{conv_block.5} parent=39 // pred_region
        %s331 = smul.u32 8, %s21
        %p332 = scmp.lt.s32.totalorder %s20, 1
        %s333 = scalar_select %p332, %s20, 1
        %p334 = scmp.lt.s32.totalorder %s331, 15
        %s335 = scalar_select %p334, %s331, 15
        %s336 = smul.addr %s335, 2
        %s337 = smul.addr %s333, 32
        %s338 = sadd.s32 %s336, %s337
        %s339 = smul.addr %s338, 8
        %s340 = scalar_lea.vmem %s3, %s339
      $region44: #{conv_block.5} parent=39 // pred_fallthru
        _
    $region40: #{conv_block.5} parent=5 // pred_fallthru
      _
  $region6: #{conv_block.5} parent=0 // loop_footer
    %s13 = sadd.s32 1, %s9
  $region7: #{conv_block.5} parent=0 // loop_footer_branch
    %8 = sbr.rel target = $region3
  $region8: #{conv_block.5} parent=0 // loop_exit
    _

// kernel: conv_block.3
$region0: #{conv_block.3}
  #allocation0 [shape = 'u32[]', space=smem, size = 0x4, offset = 0x4, fixed_abs, tag = 'smem constant byte address 0x4 - core index']
  #allocation1 [shape = 'u32[144,128]{1,0:T(1,128)}', space=vmem, size = 0x12000, scoped, tag = 'internal scratch']
  #allocation2 [shape = 'f32[10,18,128]{2,1,0:T(8,128)}', space=vmem, size = 0x1e000, scoped, tag = 'scratch operand']
  #allocation3 [shape = 'bf16[128,1152]{1,0:T(16,128)(2,1)}', space=vmem, size = 0x48000, scoped, tag = 'scratch operand']
  %s0 = inlined_call_operand.vmem [shape: f32[2,16,16,128], index: 0, kind: input, shape index: {}]
  %s1 = inlined_call_operand.vmem [shape: bf16[1152,128], index: 1, kind: input, shape index: {}]
  %s2 = inlined_call_operand.vmem [shape: f32[1,128], index: 2, kind: input, shape index: {}]
  %s3 = inlined_call_operand.vmem [shape: f32[1,128], index: 3, kind: input, shape index: {}]
  %s4 = inlined_call_operand.vmem [shape: f32[1,128], index: 4, kind: input, shape index: {}]
  %s5 = inlined_call_operand.vmem [shape: f32[2,16,16,128], index: 5, kind: output, shape index: {0}]
  %s6 = inlined_call_operand.vmem [shape: f32[2,8,128], index: 6, kind: output, shape index: {1}]
  %7 = xla_tuple %s5, %s6
  %s8 = sld [smem:[#allocation0]]
  $region73: #{conv_block.3} parent=0
    _
  %s10 = ssub.s32 1, %s8
  %s11 = scalar_select 0, %s10, %s8
  loop: start=0, step=1, limit=6
  $region2: #{conv_block.3} parent=0 // loop_pre_header
    _
  $region3: #{conv_block.3} parent=0 // loop_header
    %s13 = sphi 0, %s17
    %p14 = scmp.ge.s32.totalorder %s13, 6
    %s20 = sphi 0, %s32
    %s21 = sphi 0, %s28
    %s22 = sphi 0, %s20
    %s23 = sphi 0, %s21
    %s24 = sphi 0, %s22
    %s25 = sphi 0, %s23
    %s35 = sphi 0, %s37
    %s38 = sphi 0, %s35
    %s39 = sphi 0, %s38
    %s55 = sphi 0, %s39
    %s59 = sphi 0, %s59
    %s61 = sphi 0, %s59
    %s62 = sphi 0, %s61
    %s76 = sphi 0, %s62
    %s80 = sphi 0, %s80
    %s82 = sphi 0, %s80
    %s83 = sphi 0, %s82
    %s97 = sphi 0, %s83
    %s101 = sphi 0, %s101
    %s103 = sphi 0, %s101
    %s104 = sphi 0, %s103
    %s118 = sphi 0, %s104
    %s122 = sphi 0, %s122
    %s124 = sphi 0, %s122
    %s125 = sphi 0, %s124
    %s139 = sphi 0, %s125
    %s147 = sphi 0, %s149
    %s150 = sphi 0, %s147
    %s151 = sphi 0, %s150
    %s167 = sphi 0, %s151
    %s173 = sphi 0, %s175
    %s176 = sphi 0, %s173
    %s177 = sphi 0, %s176
    %s193 = sphi 0, %s177
  $region4: #{conv_block.3} parent=0 // loop_header_branch
    %16 = sbr.rel (%p14) target = $region8
  $region5: #{conv_block.3} parent=0 // loop_body
    %s18 = ssub.s32 %s13, 1
    %s19 = ssub.s32 %s13, 2
    %s26 = sadd.s32 1, %s21
    %p27 = scmp.ge.s32.totalorder %s26, 2
    %s28 = scalar_select %p27, 0, %s26
    %s29 = sadd.s32 1, %s20
    %s30 = scalar_select %p27, %s29, %s20
    %p31 = scmp.ge.s32.totalorder %s30, 2
    %s32 = scalar_select %p31, 0, %s30
    %s33 = ssub.s32 %s20, %s32
    %p34 = scmp.eq.s32.totalorder %s33, 0
    %s36 = sadd.s32 %s35, 1
    %s37 = scalar_select %p34, %s35, %s36
    %p40 = pneg %p34
    %p41 = scmp.eq.s32.totalorder %s13, 3
    %p42 = por %p40, %p41
    %p43 = scmp.ne.s32.totalorder %s35, %s38
    %p44 = scmp.eq.s32.totalorder %s13, 0
    %p45 = por %p43, %p44
    %p46 = scmp.ne.s32.totalorder %s35, %s38
    %p47 = scmp.eq.s32.totalorder %s18, 3
    %p48 = por %p46, %p47
    %p49 = scmp.ne.s32.totalorder %s38, %s39
    %p50 = scmp.eq.s32.totalorder %s18, 0
    %p51 = por %p49, %p50
    %p52 = scmp.ne.s32.totalorder %s38, %s39
    %p53 = scmp.eq.s32.totalorder %s19, 3
    %p54 = por %p52, %p53
    %p56 = scmp.ne.s32.totalorder %s39, %s55
    %p57 = scmp.eq.s32.totalorder %s19, 0
    %p58 = por %p56, %p57
    %s60 = sadd.s32 %s59, 1
    %p63 = scmp.eq.s32.totalorder %s13, 3
    %p64 = scmp.ne.s32.totalorder %s59, %s61
    %p65 = scmp.eq.s32.totalorder %s13, 0
    %p66 = por %p64, %p65
    %p67 = scmp.ne.s32.totalorder %s59, %s61
    %p68 = scmp.eq.s32.totalorder %s18, 3
    %p69 = por %p67, %p68
    %p70 = scmp.ne.s32.totalorder %s61, %s62
    %p71 = scmp.eq.s32.totalorder %s18, 0
    %p72 = por %p70, %p71
    %p73 = scmp.ne.s32.totalorder %s61, %s62
    %p74 = scmp.eq.s32.totalorder %s19, 3
    %p75 = por %p73, %p74
    %p77 = scmp.ne.s32.totalorder %s62, %s76
    %p78 = scmp.eq.s32.totalorder %s19, 0
    %p79 = por %p77, %p78
    %s81 = sadd.s32 %s80, 1
    %p84 = scmp.eq.s32.totalorder %s13, 3
    %p85 = scmp.ne.s32.totalorder %s80, %s82
    %p86 = scmp.eq.s32.totalorder %s13, 0
    %p87 = por %p85, %p86
    %p88 = scmp.ne.s32.totalorder %s80, %s82
    %p89 = scmp.eq.s32.totalorder %s18, 3
    %p90 = por %p88, %p89
    %p91 = scmp.ne.s32.totalorder %s82, %s83
    %p92 = scmp.eq.s32.totalorder %s18, 0
    %p93 = por %p91, %p92
    %p94 = scmp.ne.s32.totalorder %s82, %s83
    %p95 = scmp.eq.s32.totalorder %s19, 3
    %p96 = por %p94, %p95
    %p98 = scmp.ne.s32.totalorder %s83, %s97
    %p99 = scmp.eq.s32.totalorder %s19, 0
    %p100 = por %p98, %p99
    %s102 = sadd.s32 %s101, 1
    %p105 = scmp.eq.s32.totalorder %s13, 3
    %p106 = scmp.ne.s32.totalorder %s101, %s103
    %p107 = scmp.eq.s32.totalorder %s13, 0
    %p108 = por %p106, %p107
    %p109 = scmp.ne.s32.totalorder %s101, %s103
    %p110 = scmp.eq.s32.totalorder %s18, 3
    %p111 = por %p109, %p110
    %p112 = scmp.ne.s32.totalorder %s103, %s104
    %p113 = scmp.eq.s32.totalorder %s18, 0
    %p114 = por %p112, %p113
    %p115 = scmp.ne.s32.totalorder %s103, %s104
    %p116 = scmp.eq.s32.totalorder %s19, 3
    %p117 = por %p115, %p116
    %p119 = scmp.ne.s32.totalorder %s104, %s118
    %p120 = scmp.eq.s32.totalorder %s19, 0
    %p121 = por %p119, %p120
    %s123 = sadd.s32 %s122, 1
    %p126 = scmp.eq.s32.totalorder %s13, 3
    %p127 = scmp.ne.s32.totalorder %s122, %s124
    %p128 = scmp.eq.s32.totalorder %s13, 0
    %p129 = por %p127, %p128
    %p130 = scmp.ne.s32.totalorder %s122, %s124
    %p131 = scmp.eq.s32.totalorder %s18, 3
    %p132 = por %p130, %p131
    %p133 = scmp.ne.s32.totalorder %s124, %s125
    %p134 = scmp.eq.s32.totalorder %s18, 0
    %p135 = por %p133, %p134
    %p136 = scmp.ne.s32.totalorder %s124, %s125
    %p137 = scmp.eq.s32.totalorder %s19, 3
    %p138 = por %p136, %p137
    %p140 = scmp.ne.s32.totalorder %s125, %s139
    %p141 = scmp.eq.s32.totalorder %s19, 0
    %p142 = por %p140, %p141
    %s143 = ssub.s32 %s20, %s32
    %s144 = ssub.s32 %s21, %s28
    %s145 = sor.u32 %s143, %s144
    %p146 = scmp.eq.s32.totalorder %s145, 0
    %s148 = sadd.s32 %s147, 1
    %s149 = scalar_select %p146, %s147, %s148
    %p152 = pneg %p146
    %p153 = scmp.eq.s32.totalorder %s13, 3
    %p154 = por %p152, %p153
    %p155 = scmp.ne.s32.totalorder %s147, %s150
    %p156 = scmp.eq.s32.totalorder %s13, 0
    %p157 = por %p155, %p156
    %p158 = scmp.ne.s32.totalorder %s147, %s150
    %p159 = scmp.eq.s32.totalorder %s18, 3
    %p160 = por %p158, %p159
    %p161 = scmp.ne.s32.totalorder %s150, %s151
    %p162 = scmp.eq.s32.totalorder %s18, 0
    %p163 = por %p161, %p162
    %p164 = scmp.ne.s32.totalorder %s150, %s151
    %p165 = scmp.eq.s32.totalorder %s19, 3
    %p166 = por %p164, %p165
    %p168 = scmp.ne.s32.totalorder %s151, %s167
    %p169 = scmp.eq.s32.totalorder %s19, 0
    %p170 = por %p168, %p169
    %s171 = ssub.s32 %s20, %s32
    %p172 = scmp.eq.s32.totalorder %s171, 0
    %s174 = sadd.s32 %s173, 1
    %s175 = scalar_select %p172, %s173, %s174
    %p178 = pneg %p172
    %p179 = scmp.eq.s32.totalorder %s13, 3
    %p180 = por %p178, %p179
    %p181 = scmp.ne.s32.totalorder %s173, %s176
    %p182 = scmp.eq.s32.totalorder %s13, 0
    %p183 = por %p181, %p182
    %p184 = scmp.ne.s32.totalorder %s173, %s176
    %p185 = scmp.eq.s32.totalorder %s18, 3
    %p186 = por %p184, %p185
    %p187 = scmp.ne.s32.totalorder %s176, %s177
    %p188 = scmp.eq.s32.totalorder %s18, 0
    %p189 = por %p187, %p188
    %p190 = scmp.ne.s32.totalorder %s176, %s177
    %p191 = scmp.eq.s32.totalorder %s19, 3
    %p192 = por %p190, %p191
    %p194 = scmp.ne.s32.totalorder %s177, %s193
    %p195 = scmp.eq.s32.totalorder %s19, 0
    %p196 = por %p194, %p195
    %p197 = scmp.le.s32.totalorder 1, %s13
    %p198 = scmp.lt.s32.totalorder %s13, 5
    %p199 = pnand %p197, %p198
    %p200 = pneg %p199
    // Predicated region
    $region9: #{conv_block.3} parent=5 // pred_check
      _
    $region10: #{conv_block.3} parent=5 // pred_check_branch
      %202 = sbr.rel (%p199) target = $region12
    $region11: #{conv_block.3} parent=5 // pred_region
      %s203 = ssub.s32 %s13, 1
      // Predicated region
      $region13: #{conv_block.3} parent=11 // pred_check
        %p204 = pneg %p72
      $region14: #{conv_block.3} parent=11 // pred_check_branch
        %206 = sbr.rel (%p204) target = $region16
      $region15: #{conv_block.3} parent=11 // pred_region
        _
      $region16: #{conv_block.3} parent=11 // pred_fallthru
        _
      // Predicated region
      $region17: #{conv_block.3} parent=11 // pred_check
        %p207 = pneg %p93
      $region18: #{conv_block.3} parent=11 // pred_check_branch
        %209 = sbr.rel (%p207) target = $region20
      $region19: #{conv_block.3} parent=11 // pred_region
        _
      $region20: #{conv_block.3} parent=11 // pred_fallthru
        _
      // Predicated region
      $region21: #{conv_block.3} parent=11 // pred_check
        %p210 = pneg %p114
      $region22: #{conv_block.3} parent=11 // pred_check_branch
        %212 = sbr.rel (%p210) target = $region24
      $region23: #{conv_block.3} parent=11 // pred_region
        _
      $region24: #{conv_block.3} parent=11 // pred_fallthru
        _
      // Predicated region
      $region25: #{conv_block.3} parent=11 // pred_check
        %p213 = pneg %p135
      $region26: #{conv_block.3} parent=11 // pred_check_branch
        %215 = sbr.rel (%p213) target = $region28
      $region27: #{conv_block.3} parent=11 // pred_region
        _
      $region28: #{conv_block.3} parent=11 // pred_fallthru
        _
    $region12: #{conv_block.3} parent=5 // pred_fallthru
      _
    %p216 = scmp.lt.s32.totalorder %s13, 4
    // Predicated region
    $region29: #{conv_block.3} parent=5 // pred_check
      %p217 = pneg %p216
    $region30: #{conv_block.3} parent=5 // pred_check_branch
      %219 = sbr.rel (%p217) target = $region32
    $region31: #{conv_block.3} parent=5 // pred_region
      // Predicated region
      $region33: #{conv_block.3} parent=31 // pred_check
        %p220 = pneg %p45
      $region34: #{conv_block.3} parent=31 // pred_check_branch
        %222 = sbr.rel (%p220) target = $region36
      $region35: #{conv_block.3} parent=31 // pred_region
        %p223 = scmp.lt.s32.totalorder %s20, 1
        %s224 = scalar_select %p223, %s20, 1
        %s225 = smul.addr %s224, 32
        %s226 = smul.addr %s225, 8
        %s227 = scalar_lea.vmem %s0, %s226
      $region36: #{conv_block.3} parent=31 // pred_fallthru
        _
    $region32: #{conv_block.3} parent=5 // pred_fallthru
      _
    %p228 = scmp.le.s32.totalorder 1, %s13
    %p229 = scmp.lt.s32.totalorder %s13, 5
    %p230 = pnand %p228, %p229
    %p231 = pneg %p230
    // Predicated region
    $region37: #{conv_block.3} parent=5 // pred_check
      _
    $region38: #{conv_block.3} parent=5 // pred_check_branch
      %233 = sbr.rel (%p230) target = $region40
    $region39: #{conv_block.3} parent=5 // pred_region
      %s234 = ssub.s32 %s13, 1
      %p235 = scmp.lt.s32.totalorder %s22, 1
      %s236 = scalar_select %p235, %s22, 1
      %s237 = smul.addr %s236, 32
      %s238 = smul.addr %s237, 8
      %s239 = scalar_lea.vmem %s0, %s238
      %p240 = pneg %p51
      %p241 = pneg %p48
      %p242 = pneg %p72
      %p243 = pneg %p69
      %p244 = pneg %p93
      %p245 = pneg %p90
      %p246 = pneg %p114
      %p247 = pneg %p111
      %p248 = pneg %p135
      %p249 = pneg %p132
      %p250 = pneg %p163
      %p251 = pneg %p160
      %s252 = smul.u32 8, %s23
      %p253 = scmp.lt.s32.totalorder %s22, 1
      %s254 = scalar_select %p253, %s22, 1
      %p255 = scmp.lt.s32.totalorder %s252, 15
      %s256 = scalar_select %p255, %s252, 15
      %s257 = smul.addr %s256, 2
      %s258 = smul.addr %s254, 32
      %s259 = sadd.s32 %s257, %s258
      %s260 = smul.addr %s259, 8
      %s261 = scalar_lea.vmem %s5, %s260
      %p262 = pneg %p189
      %p263 = pneg %p186
      %p264 = scmp.lt.s32.totalorder %s22, 1
      %s265 = scalar_select %p264, %s22, 1
      %s266 = smul.addr %s265, 8
      %s267 = scalar_lea.vmem %s6, %s266
      %p268 = scmp.lt.s32.totalorder %s22, 1
      %s269 = scalar_select %p268, %s22, 1
      %s270 = smul.addr %s269, 32
      %s271 = smul.addr %s270, 8
      %s272 = scalar_lea.vmem %s0, %s271
      %s273 = smul.u32 8, %s23
      %p274 = scmp.lt.s32.totalorder %s22, 1
      %s275 = scalar_select %p274, %s22, 1
      %p276 = scmp.lt.s32.totalorder %s273, 15
      %s277 = scalar_select %p276, %s273, 15
      %s278 = smul.addr %s277, 2
      %s279 = smul.addr %s275, 32
      %s280 = sadd.s32 %s278, %s279
      %s281 = smul.addr %s280, 8
      %s282 = scalar_lea.vmem %s5, %s281
      %s283 = smul.u32 8, %s23
      %p284 = scmp.lt.s32.totalorder %s22, 1
      %s285 = scalar_select %p284, %s22, 1
      %s286 = smul.addr %s285, 8
      %s287 = scalar_lea.vmem %s6, %s286
      %s289 = smul.u32 %s23, 8
      %290 = vst [vmem:[#allocation2] sm:$0xff] 0.0
      %291 = vst [vmem:[#allocation2 + $0x8] sm:$0xff] 0.0
      %292 = vst [vmem:[#allocation2 + $0x10] sm:$0x3] 0.0
      %293 = vst [vmem:[#allocation2 + $0x18] sm:$0xff] 0.0
      %294 = vst [vmem:[#allocation2 + $0x20] sm:$0xff] 0.0
      %295 = vst [vmem:[#allocation2 + $0x28] sm:$0x3] 0.0
      %296 = vst [vmem:[#allocation2 + $0x30] sm:$0xff] 0.0
      %297 = vst [vmem:[#allocation2 + $0x38] sm:$0xff] 0.0
      %298 = vst [vmem:[#allocation2 + $0x40] sm:$0x3] 0.0
      %299 = vst [vmem:[#allocation2 + $0x48] sm:$0xff] 0.0
      %300 = vst [vmem:[#allocation2 + $0x50] sm:$0xff] 0.0
      %301 = vst [vmem:[#allocation2 + $0x58] sm:$0x3] 0.0
      %302 = vst [vmem:[#allocation2 + $0x60] sm:$0xff] 0.0
      %303 = vst [vmem:[#allocation2 + $0x68] sm:$0xff] 0.0
      %304 = vst [vmem:[#allocation2 + $0x70] sm:$0x3] 0.0
      %305 = vst [vmem:[#allocation2 + $0x78] sm:$0xff] 0.0
      %306 = vst [vmem:[#allocation2 + $0x80] sm:$0xff] 0.0
      %307 = vst [vmem:[#allocation2 + $0x88] sm:$0x3] 0.0
      %308 = vst [vmem:[#allocation2 + $0x90] sm:$0xff] 0.0
      %309 = vst [vmem:[#allocation2 + $0x98] sm:$0xff] 0.0
      %310 = vst [vmem:[#allocation2 + $0xa0] sm:$0x3] 0.0
      %311 = vst [vmem:[#allocation2 + $0xa8] sm:$0xff] 0.0
      %312 = vst [vmem:[#allocation2 + $0xb0] sm:$0xff] 0.0
      %313 = vst [vmem:[#allocation2 + $0xb8] sm:$0x3] 0.0
      %314 = vst [vmem:[#allocation2 + $0xc0] sm:$0xff] 0.0
      %315 = vst [vmem:[#allocation2 + $0xc8] sm:$0xff] 0.0
      %316 = vst [vmem:[#allocation2 + $0xd0] sm:$0x3] 0.0
      %317 = vst [vmem:[#allocation2 + $0xd8] sm:$0xff] 0.0
      %318 = vst [vmem:[#allocation2 + $0xe0] sm:$0xff] 0.0
      %319 = vst [vmem:[#allocation2 + $0xe8] sm:$0x3] 0.0
      %s320 = smul.u32 %s289, 16
      %s321 = scalar_lea.vmem %s272, %s320
      %v322 = vld [vmem:[%s321] sm:$0xff]
      %v323 = vld [vmem:[%s321 + $0x8] sm:$0xff]
      %v324 = vld [vmem:[%s321 + $0x10] sm:$0xff]
      %v325 = vld [vmem:[%s321 + $0x18] sm:$0xff]
      %v326 = vld [vmem:[%s321 + $0x20] sm:$0xff]
      %v327 = vld [vmem:[%s321 + $0x28] sm:$0xff]
      %v328 = vld [vmem:[%s321 + $0x30] sm:$0xff]
      %v329 = vld [vmem:[%s321 + $0x38] sm:$0xff]
      %v330 = vld [vmem:[%s321 + $0x40] sm:$0xff]
      %v331 = vld [vmem:[%s321 + $0x48] sm:$0xff]
      %v332 = vld [vmem:[%s321 + $0x50] sm:$0xff]
      %v333 = vld [vmem:[%s321 + $0x58] sm:$0xff]
      %v334 = vld [vmem:[%s321 + $0x60] sm:$0xff]
      %v335 = vld [vmem:[%s321 + $0x68] sm:$0xff]
      %v336 = vld [vmem:[%s321 + $0x70] sm:$0xff]
      %v337 = vld [vmem:[%s321 + $0x78] sm:$0xff]
      %s338 = scalar_lea.vmem [#allocation2], 24
      %339 = vst [vmem:[%s338 + $0x1] sm:$0xff] %v322
      %340 = vst [vmem:[%s338 + $0x9] sm:$0xff] %v323
      %341 = vst [vmem:[%s338 + $0x19] sm:$0xff] %v324
      %342 = vst [vmem:[%s338 + $0x21] sm:$0xff] %v325
      %343 = vst [vmem:[%s338 + $0x31] sm:$0xff] %v326
      %344 = vst [vmem:[%s338 + $0x39] sm:$0xff] %v327
      %345 = vst [vmem:[%s338 + $0x49] sm:$0xff] %v328
      %346 = vst [vmem:[%s338 + $0x51] sm:$0xff] %v329
      %347 = vst [vmem:[%s338 + $0x61] sm:$0xff] %v330
      %348 = vst [vmem:[%s338 + $0x69] sm:$0xff] %v331
      %349 = vst [vmem:[%s338 + $0x79] sm:$0xff] %v332
      %350 = vst [vmem:[%s338 + $0x81] sm:$0xff] %v333
      %351 = vst [vmem:[%s338 + $0x91] sm:$0xff] %v334
      %352 = vst [vmem:[%s338 + $0x99] sm:$0xff] %v335
      %353 = vst [vmem:[%s338 + $0xa9] sm:$0xff] %v336
      %354 = vst [vmem:[%s338 + $0xb1] sm:$0xff] %v337
      %p355 = scmp.gt.s32.totalorder %s23, 0
      // Predicated region
      $region41: #{conv_block.3} parent=39 // pred_check
        %p356 = pneg %p355
      $region42: #{conv_block.3} parent=39 // pred_check_branch
        %358 = sbr.rel (%p356) target = $region44
      $region43: #{conv_block.3} parent=39 // pred_region
        %s359 = ssub.s32 %s289, 1
        %s360 = smul.u32 %s359, 16
        %s361 = scalar_lea.vmem %s272, %s360
        %v362 = vld [vmem:[%s361] sm:$0xff]
        %v363 = vld [vmem:[%s361 + $0x8] sm:$0xff]
        %364 = vst [vmem:[#allocation2 + $0x1] sm:$0xff] %v362
        %365 = vst [vmem:[#allocation2 + $0x9] sm:$0xff] %v363
      $region44: #{conv_block.3} parent=39 // pred_fallthru
        _
      %p366 = scmp.lt.s32.totalorder %s23, 1
      // Predicated region
      $region45: #{conv_block.3} parent=39 // pred_check
        %p367 = pneg %p366
      $region46: #{conv_block.3} parent=39 // pred_check_branch
        %369 = sbr.rel (%p367) target = $region48
      $region47: #{conv_block.3} parent=39 // pred_region
        %s370 = sadd.s32 %s289, 8
        %s371 = smul.u32 %s370, 16
        %s372 = scalar_lea.vmem %s272, %s371
        %v373 = vld [vmem:[%s372] sm:$0xff]
        %v374 = vld [vmem:[%s372 + $0x8] sm:$0xff]
        %s375 = scalar_lea.vmem [#allocation2], 216
        %376 = vst [vmem:[%s375 + $0x1] sm:$0xff] %v373
        %377 = vst [vmem:[%s375 + $0x9] sm:$0xff] %v374
      $region48: #{conv_block.3} parent=39 // pred_fallthru
        _
      %v378 = vld [vmem:[#allocation2] sm:$0xff]
      %v379 = vld [vmem:[#allocation2 + $0x8] sm:$0xff]
      %v380 = vld [vmem:[#allocation2 + $0x18] sm:$0xff]
      %v381 = vld [vmem:[#allocation2 + $0x20] sm:$0xff]
      %v382 = vld [vmem:[#allocation2 + $0x30] sm:$0xff]
      %v383 = vld [vmem:[#allocation2 + $0x38] sm:$0xff]
      %v384 = vld [vmem:[#allocation2 + $0x48] sm:$0xff]
      %v385 = vld [vmem:[#allocation2 + $0x50] sm:$0xff]
      %v386 = vld [vmem:[#allocation2 + $0x60] sm:$0xff]
      %v387 = vld [vmem:[#allocation2 + $0x68] sm:$0xff]
      %v388 = vld [vmem:[#allocation2 + $0x78] sm:$0xff]
      %v389 = vld [vmem:[#allocation2 + $0x80] sm:$0xff]
      %v390 = vld [vmem:[#allocation2 + $0x90] sm:$0xff]
      %v391 = vld [vmem:[#allocation2 + $0x98] sm:$0xff]
      %v392 = vld [vmem:[#allocation2 + $0xa8] sm:$0xff]
      %v393 = vld [vmem:[#allocation2 + $0xb0] sm:$0xff]
      %v394 = vpack.c.bf16 %v379, %v378
      %v395 = vpack.c.bf16 %v381, %v380
      %v396 = vpack.c.bf16 %v383, %v382
      %v397 = vpack.c.bf16 %v385, %v384
      %v398 = vpack.c.bf16 %v387, %v386
      %v399 = vpack.c.bf16 %v389, %v388
      %v400 = vpack.c.bf16 %v391, %v390
      %v401 = vpack.c.bf16 %v393, %v392
      %402 = vst [vmem:[#allocation3] sm:$0xff] %v394
      %403 = vst [vmem:[#allocation3 + $0x48] sm:$0xff] %v395
      %404 = vst [vmem:[#allocation3 + $0x90] sm:$0xff] %v396
      %405 = vst [vmem:[#allocation3 + $0xd8] sm:$0xff] %v397
      %406 = vst [vmem:[#allocation3 + $0x120] sm:$0xff] %v398
      %407 = vst [vmem:[#allocation3 + $0x168] sm:$0xff] %v399
      %408 = vst [vmem:[#allocation3 + $0x1b0] sm:$0xff] %v400
      %409 = vst [vmem:[#allocation3 + $0x1f8] sm:$0xff] %v401
      %v410 = vld [vmem:[#allocation2 + $0x1] sm:$0xff]
      %v411 = vld [vmem:[#allocation2 + $0x9] sm:$0xff]
      %v412 = vld [vmem:[#allocation2 + $0x19] sm:$0xff]
      %v413 = vld [vmem:[#allocation2 + $0x21] sm:$0xff]
      %v414 = vld [vmem:[#allocation2 + $0x31] sm:$0xff]
      %v415 = vld [vmem:[#allocation2 + $0x39] sm:$0xff]
      %v416 = vld [vmem:[#allocation2 + $0x49] sm:$0xff]
      %v417 = vld [vmem:[#allocation2 + $0x51] sm:$0xff]
      %v418 = vld [vmem:[#allocation2 + $0x61] sm:$0xff]
      %v419 = vld [vmem:[#allocation2 + $0x69] sm:$0xff]
      %v420 = vld [vmem:[#allocation2 + $0x79] sm:$0xff]
      %v421 = vld [vmem:[#allocation2 + $0x81] sm:$0xff]
      %v422 = vld [vmem:[#allocation2 + $0x91] sm:$0xff]
      %v423 = vld [vmem:[#allocation2 + $0x99] sm:$0xff]
      %v424 = vld [vmem:[#allocation2 + $0xa9] sm:$0xff]
      %v425 = vld [vmem:[#allocation2 + $0xb1] sm:$0xff]
      %v426 = vpack.c.bf16 %v411, %v410
      %v427 = vpack.c.bf16 %v413, %v412
      %v428 = vpack.c.bf16 %v415, %v414
      %v429 = vpack.c.bf16 %v417, %v416
      %v430 = vpack.c.bf16 %v419, %v418
      %v431 = vpack.c.bf16 %v421, %v420
      %v432 = vpack.c.bf16 %v423, %v422
      %v433 = vpack.c.bf16 %v425, %v424
      %434 = vst [vmem:[#allocation3 + $0x8] sm:$0xff] %v426
      %435 = vst [vmem:[#allocation3 + $0x50] sm:$0xff] %v427
      %436 = vst [vmem:[#allocation3 + $0x98] sm:$0xff] %v428
      %437 = vst [vmem:[#allocation3 + $0xe0] sm:$0xff] %v429
      %438 = vst [vmem:[#allocation3 + $0x128] sm:$0xff] %v430
      %439 = vst [vmem:[#allocation3 + $0x170] sm:$0xff] %v431
      %440 = vst [vmem:[#allocation3 + $0x1b8] sm:$0xff] %v432
      %441 = vst [vmem:[#allocation3 + $0x200] sm:$0xff] %v433
      %v442 = vld [vmem:[#allocation2 + $0x2] sm:$0xff]
      %v443 = vld [vmem:[#allocation2 + $0xa] sm:$0xff]
      %v444 = vld [vmem:[#allocation2 + $0x1a] sm:$0xff]
      %v445 = vld [vmem:[#allocation2 + $0x22] sm:$0xff]
      %v446 = vld [vmem:[#allocation2 + $0x32] sm:$0xff]
      %v447 = vld [vmem:[#allocation2 + $0x3a] sm:$0xff]
      %v448 = vld [vmem:[#allocation2 + $0x4a] sm:$0xff]
      %v449 = vld [vmem:[#allocation2 + $0x52] sm:$0xff]
      %v450 = vld [vmem:[#allocation2 + $0x62] sm:$0xff]
      %v451 = vld [vmem:[#allocation2 + $0x6a] sm:$0xff]
      %v452 = vld [vmem:[#allocation2 + $0x7a] sm:$0xff]
      %v453 = vld [vmem:[#allocation2 + $0x82] sm:$0xff]
      %v454 = vld [vmem:[#allocation2 + $0x92] sm:$0xff]
      %v455 = vld [vmem:[#allocation2 + $0x9a] sm:$0xff]
      %v456 = vld [vmem:[#allocation2 + $0xaa] sm:$0xff]
      %v457 = vld [vmem:[#allocation2 + $0xb2] sm:$0xff]
      %v458 = vpack.c.bf16 %v443, %v442
      %v459 = vpack.c.bf16 %v445, %v444
      %v460 = vpack.c.bf16 %v447, %v446
      %v461 = vpack.c.bf16 %v449, %v448
      %v462 = vpack.c.bf16 %v451, %v450
      %v463 = vpack.c.bf16 %v453, %v452
      %v464 = vpack.c.bf16 %v455, %v454
      %v465 = vpack.c.bf16 %v457, %v456
      %466 = vst [vmem:[#allocation3 + $0x10] sm:$0xff] %v458
      %467 = vst [vmem:[#allocation3 + $0x58] sm:$0xff] %v459
      %468 = vst [vmem:[#allocation3 + $0xa0] sm:$0xff] %v460
      %469 = vst [vmem:[#allocation3 + $0xe8] sm:$0xff] %v461
      %470 = vst [vmem:[#allocation3 + $0x130] sm:$0xff] %v462
      %471 = vst [vmem:[#allocation3 + $0x178] sm:$0xff] %v463
      %472 = vst [vmem:[#allocation3 + $0x1c0] sm:$0xff] %v464
      %473 = vst [vmem:[#allocation3 + $0x208] sm:$0xff] %v465
      %v474 = vld [vmem:[%s338] sm:$0xff]
      %v475 = vld [vmem:[%s338 + $0x8] sm:$0xff]
      %v476 = vld [vmem:[%s338 + $0x18] sm:$0xff]
      %v477 = vld [vmem:[%s338 + $0x20] sm:$0xff]
      %v478 = vld [vmem:[%s338 + $0x30] sm:$0xff]
      %v479 = vld [vmem:[%s338 + $0x38] sm:$0xff]
      %v480 = vld [vmem:[%s338 + $0x48] sm:$0xff]
      %v481 = vld [vmem:[%s338 + $0x50] sm:$0xff]
      %v482 = vld [vmem:[%s338 + $0x60] sm:$0xff]
      %v483 = vld [vmem:[%s338 + $0x68] sm:$0xff]
      %v484 = vld [vmem:[%s338 + $0x78] sm:$0xff]
      %v485 = vld [vmem:[%s338 + $0x80] sm:$0xff]
      %v486 = vld [vmem:[%s338 + $0x90] sm:$0xff]
      %v487 = vld [vmem:[%s338 + $0x98] sm:$0xff]
      %v488 = vld [vmem:[%s338 + $0xa8] sm:$0xff]
      %v489 = vld [vmem:[%s338 + $0xb0] sm:$0xff]
      %v490 = vpack.c.bf16 %v475, %v474
      %v491 = vpack.c.bf16 %v477, %v476
      %v492 = vpack.c.bf16 %v479, %v478
      %v493 = vpack.c.bf16 %v481, %v480
      %v494 = vpack.c.bf16 %v483, %v482
      %v495 = vpack.c.bf16 %v485, %v484
      %v496 = vpack.c.bf16 %v487, %v486
      %v497 = vpack.c.bf16 %v489, %v488
      %498 = vst [vmem:[#allocation3 + $0x18] sm:$0xff] %v490
      %499 = vst [vmem:[#allocation3 + $0x60] sm:$0xff] %v491
      %500 = vst [vmem:[#allocation3 + $0xa8] sm:$0xff] %v492
      %501 = vst [vmem:[#allocation3 + $0xf0] sm:$0xff] %v493
      %502 = vst [vmem:[#allocation3 + $0x138] sm:$0xff] %v494
      %503 = vst [vmem:[#allocation3 + $0x180] sm:$0xff] %v495
      %504 = vst [vmem:[#allocation3 + $0x1c8] sm:$0xff] %v496
      %505 = vst [vmem:[#allocation3 + $0x210] sm:$0xff] %v497
      %v506 = vld [vmem:[%s338 + $0x1] sm:$0xff]
      %v507 = vld [vmem:[%s338 + $0x9] sm:$0xff]
      %v508 = vld [vmem:[%s338 + $0x19] sm:$0xff]
      %v509 = vld [vmem:[%s338 + $0x21] sm:$0xff]
      %v510 = vld [vmem:[%s338 + $0x31] sm:$0xff]
      %v511 = vld [vmem:[%s338 + $0x39] sm:$0xff]
      %v512 = vld [vmem:[%s338 + $0x49] sm:$0xff]
      %v513 = vld [vmem:[%s338 + $0x51] sm:$0xff]
      %v514 = vld [vmem:[%s338 + $0x61] sm:$0xff]
      %v515 = vld [vmem:[%s338 + $0x69] sm:$0xff]
      %v516 = vld [vmem:[%s338 + $0x79] sm:$0xff]
      %v517 = vld [vmem:[%s338 + $0x81] sm:$0xff]
      %v518 = vld [vmem:[%s338 + $0x91] sm:$0xff]
      %v519 = vld [vmem:[%s338 + $0x99] sm:$0xff]
      %v520 = vld [vmem:[%s338 + $0xa9] sm:$0xff]
      %v521 = vld [vmem:[%s338 + $0xb1] sm:$0xff]
      %v522 = vpack.c.bf16 %v507, %v506
      %v523 = vpack.c.bf16 %v509, %v508
      %v524 = vpack.c.bf16 %v511, %v510
      %v525 = vpack.c.bf16 %v513, %v512
      %v526 = vpack.c.bf16 %v515, %v514
      %v527 = vpack.c.bf16 %v517, %v516
      %v528 = vpack.c.bf16 %v519, %v518
      %v529 = vpack.c.bf16 %v521, %v520
      %530 = vst [vmem:[#allocation3 + $0x20] sm:$0xff] %v522
      %531 = vst [vmem:[#allocation3 + $0x68] sm:$0xff] %v523
      %532 = vst [vmem:[#allocation3 + $0xb0] sm:$0xff] %v524
      %533 = vst [vmem:[#allocation3 + $0xf8] sm:$0xff] %v525
      %534 = vst [vmem:[#allocation3 + $0x140] sm:$0xff] %v526
      %535 = vst [vmem:[#allocation3 + $0x188] sm:$0xff] %v527
      %536 = vst [vmem:[#allocation3 + $0x1d0] sm:$0xff] %v528
      %537 = vst [vmem:[#allocation3 + $0x218] sm:$0xff] %v529
      %v538 = vld [vmem:[%s338 + $0x2] sm:$0xff]
      %v539 = vld [vmem:[%s338 + $0xa] sm:$0xff]
      %v540 = vld [vmem:[%s338 + $0x1a] sm:$0xff]
      %v541 = vld [vmem:[%s338 + $0x22] sm:$0xff]
      %v542 = vld [vmem:[%s338 + $0x32] sm:$0xff]
      %v543 = vld [vmem:[%s338 + $0x3a] sm:$0xff]
      %v544 = vld [vmem:[%s338 + $0x4a] sm:$0xff]
      %v545 = vld [vmem:[%s338 + $0x52] sm:$0xff]
      %v546 = vld [vmem:[%s338 + $0x62] sm:$0xff]
      %v547 = vld [vmem:[%s338 + $0x6a] sm:$0xff]
      %v548 = vld [vmem:[%s338 + $0x7a] sm:$0xff]
      %v549 = vld [vmem:[%s338 + $0x82] sm:$0xff]
      %v550 = vld [vmem:[%s338 + $0x92] sm:$0xff]
      %v551 = vld [vmem:[%s338 + $0x9a] sm:$0xff]
      %v552 = vld [vmem:[%s338 + $0xaa] sm:$0xff]
      %v553 = vld [vmem:[%s338 + $0xb2] sm:$0xff]
      %v554 = vpack.c.bf16 %v539, %v538
      %v555 = vpack.c.bf16 %v541, %v540
      %v556 = vpack.c.bf16 %v543, %v542
      %v557 = vpack.c.bf16 %v545, %v544
      %v558 = vpack.c.bf16 %v547, %v546
      %v559 = vpack.c.bf16 %v549, %v548
      %v560 = vpack.c.bf16 %v551, %v550
      %v561 = vpack.c.bf16 %v553, %v552
      %562 = vst [vmem:[#allocation3 + $0x28] sm:$0xff] %v554
      %563 = vst [vmem:[#allocation3 + $0x70] sm:$0xff] %v555
      %564 = vst [vmem:[#allocation3 + $0xb8] sm:$0xff] %v556
      %565 = vst [vmem:[#allocation3 + $0x100] sm:$0xff] %v557
      %566 = vst [vmem:[#allocation3 + $0x148] sm:$0xff] %v558
      %567 = vst [vmem:[#allocation3 + $0x190] sm:$0xff] %v559
      %568 = vst [vmem:[#allocation3 + $0x1d8] sm:$0xff] %v560
      %569 = vst [vmem:[#allocation3 + $0x220] sm:$0xff] %v561
      %s570 = scalar_lea.vmem [#allocation2], 48
      %v571 = vld [vmem:[%s570] sm:$0xff]
      %v572 = vld [vmem:[%s570 + $0x8] sm:$0xff]
      %v573 = vld [vmem:[%s570 + $0x18] sm:$0xff]
      %v574 = vld [vmem:[%s570 + $0x20] sm:$0xff]
      %v575 = vld [vmem:[%s570 + $0x30] sm:$0xff]
      %v576 = vld [vmem:[%s570 + $0x38] sm:$0xff]
      %v577 = vld [vmem:[%s570 + $0x48] sm:$0xff]
      %v578 = vld [vmem:[%s570 + $0x50] sm:$0xff]
      %v579 = vld [vmem:[%s570 + $0x60] sm:$0xff]
      %v580 = vld [vmem:[%s570 + $0x68] sm:$0xff]
      %v581 = vld [vmem:[%s570 + $0x78] sm:$0xff]
      %v582 = vld [vmem:[%s570 + $0x80] sm:$0xff]
      %v583 = vld [vmem:[%s570 + $0x90] sm:$0xff]
      %v584 = vld [vmem:[%s570 + $0x98] sm:$0xff]
      %v585 = vld [vmem:[%s570 + $0xa8] sm:$0xff]
      %v586 = vld [vmem:[%s570 + $0xb0] sm:$0xff]
      %v587 = vpack.c.bf16 %v572, %v571
      %v588 = vpack.c.bf16 %v574, %v573
      %v589 = vpack.c.bf16 %v576, %v575
      %v590 = vpack.c.bf16 %v578, %v577
      %v591 = vpack.c.bf16 %v580, %v579
      %v592 = vpack.c.bf16 %v582, %v581
      %v593 = vpack.c.bf16 %v584, %v583
      %v594 = vpack.c.bf16 %v586, %v585
      %595 = vst [vmem:[#allocation3 + $0x30] sm:$0xff] %v587
      %596 = vst [vmem:[#allocation3 + $0x78] sm:$0xff] %v588
      %597 = vst [vmem:[#allocation3 + $0xc0] sm:$0xff] %v589
      %598 = vst [vmem:[#allocation3 + $0x108] sm:$0xff] %v590
      %599 = vst [vmem:[#allocation3 + $0x150] sm:$0xff] %v591
      %600 = vst [vmem:[#allocation3 + $0x198] sm:$0xff] %v592
      %601 = vst [vmem:[#allocation3 + $0x1e0] sm:$0xff] %v593
      %602 = vst [vmem:[#allocation3 + $0x228] sm:$0xff] %v594
      %v603 = vld [vmem:[%s570 + $0x1] sm:$0xff]
      %v604 = vld [vmem:[%s570 + $0x9] sm:$0xff]
      %v605 = vld [vmem:[%s570 + $0x19] sm:$0xff]
      %v606 = vld [vmem:[%s570 + $0x21] sm:$0xff]
      %v607 = vld [vmem:[%s570 + $0x31] sm:$0xff]
      %v608 = vld [vmem:[%s570 + $0x39] sm:$0xff]
      %v609 = vld [vmem:[%s570 + $0x49] sm:$0xff]
      %v610 = vld [vmem:[%s570 + $0x51] sm:$0xff]
      %v611 = vld [vmem:[%s570 + $0x61] sm:$0xff]
      %v612 = vld [vmem:[%s570 + $0x69] sm:$0xff]
      %v613 = vld [vmem:[%s570 + $0x79] sm:$0xff]
      %v614 = vld [vmem:[%s570 + $0x81] sm:$0xff]
      %v615 = vld [vmem:[%s570 + $0x91] sm:$0xff]
      %v616 = vld [vmem:[%s570 + $0x99] sm:$0xff]
      %v617 = vld [vmem:[%s570 + $0xa9] sm:$0xff]
      %v618 = vld [vmem:[%s570 + $0xb1] sm:$0xff]
      %v619 = vpack.c.bf16 %v604, %v603
      %v620 = vpack.c.bf16 %v606, %v605
      %v621 = vpack.c.bf16 %v608, %v607
      %v622 = vpack.c.bf16 %v610, %v609
      %v623 = vpack.c.bf16 %v612, %v611
      %v624 = vpack.c.bf16 %v614, %v613
      %v625 = vpack.c.bf16 %v616, %v615
      %v626 = vpack.c.bf16 %v618, %v617
      %627 = vst [vmem:[#allocation3 + $0x38] sm:$0xff] %v619
      %628 = vst [vmem:[#allocation3 + $0x80] sm:$0xff] %v620
      %629 = vst [vmem:[#allocation3 + $0xc8] sm:$0xff] %v621
      %630 = vst [vmem:[#allocation3 + $0x110] sm:$0xff] %v622
      %631 = vst [vmem:[#allocation3 + $0x158] sm:$0xff] %v623
      %632 = vst [vmem:[#allocation3 + $0x1a0] sm:$0xff] %v624
      %633 = vst [vmem:[#allocation3 + $0x1e8] sm:$0xff] %v625
      %634 = vst [vmem:[#allocation3 + $0x230] sm:$0xff] %v626
      %v635 = vld [vmem:[%s570 + $0x2] sm:$0xff]
      %v636 = vld [vmem:[%s570 + $0xa] sm:$0xff]
      %v637 = vld [vmem:[%s570 + $0x1a] sm:$0xff]
      %v638 = vld [vmem:[%s570 + $0x22] sm:$0xff]
      %v639 = vld [vmem:[%s570 + $0x32] sm:$0xff]
      %v640 = vld [vmem:[%s570 + $0x3a] sm:$0xff]
      %v641 = vld [vmem:[%s570 + $0x4a] sm:$0xff]
      %v642 = vld [vmem:[%s570 + $0x52] sm:$0xff]
      %v643 = vld [vmem:[%s570 + $0x62] sm:$0xff]
      %v644 = vld [vmem:[%s570 + $0x6a] sm:$0xff]
      %v645 = vld [vmem:[%s570 + $0x7a] sm:$0xff]
      %v646 = vld [vmem:[%s570 + $0x82] sm:$0xff]
      %v647 = vld [vmem:[%s570 + $0x92] sm:$0xff]
      %v648 = vld [vmem:[%s570 + $0x9a] sm:$0xff]
      %v649 = vld [vmem:[%s570 + $0xaa] sm:$0xff]
      %v650 = vld [vmem:[%s570 + $0xb2] sm:$0xff]
      %v651 = vpack.c.bf16 %v636, %v635
      %v652 = vpack.c.bf16 %v638, %v637
      %v653 = vpack.c.bf16 %v640, %v639
      %v654 = vpack.c.bf16 %v642, %v641
      %v655 = vpack.c.bf16 %v644, %v643
      %v656 = vpack.c.bf16 %v646, %v645
      %v657 = vpack.c.bf16 %v648, %v647
      %v658 = vpack.c.bf16 %v650, %v649
      %659 = vst [vmem:[#allocation3 + $0x40] sm:$0xff] %v651
      %660 = vst [vmem:[#allocation3 + $0x88] sm:$0xff] %v652
      %661 = vst [vmem:[#allocation3 + $0xd0] sm:$0xff] %v653
      %662 = vst [vmem:[#allocation3 + $0x118] sm:$0xff] %v654
      %663 = vst [vmem:[#allocation3 + $0x160] sm:$0xff] %v655
      %664 = vst [vmem:[#allocation3 + $0x1a8] sm:$0xff] %v656
      %665 = vst [vmem:[#allocation3 + $0x1f0] sm:$0xff] %v657
      %666 = vst [vmem:[#allocation3 + $0x238] sm:$0xff] %v658
      %v667 = vld [vmem:[#allocation3] sm:$0xff]
      %v668 = vld [vmem:[#allocation3 + $0x8] sm:$0xff]
      %v669 = vld [vmem:[#allocation3 + $0x10] sm:$0xff]
      %v670 = vld [vmem:[#allocation3 + $0x18] sm:$0xff]
      %v671 = vld [vmem:[#allocation3 + $0x20] sm:$0xff]
      %v672 = vld [vmem:[#allocation3 + $0x28] sm:$0xff]
      %v673 = vld [vmem:[#allocation3 + $0x30] sm:$0xff]
      %v674 = vld [vmem:[#allocation3 + $0x38] sm:$0xff]
      %v675 = vld [vmem:[#allocation3 + $0x40] sm:$0xff]
      %v676 = vld [vmem:[#allocation3 + $0x48] sm:$0xff]
      %v677 = vld [vmem:[#allocation3 + $0x50] sm:$0xff]
      %v678 = vld [vmem:[#allocation3 + $0x58] sm:$0xff]
      %v679 = vld [vmem:[#allocation3 + $0x60] sm:$0xff]
      %v680 = vld [vmem:[#allocation3 + $0x68] sm:$0xff]
      %v681 = vld [vmem:[#allocation3 + $0x70] sm:$0xff]
      %v682 = vld [vmem:[#allocation3 + $0x78] sm:$0xff]
      %v683 = vld [vmem:[#allocation3 + $0x80] sm:$0xff]
      %v684 = vld [vmem:[#allocation3 + $0x88] sm:$0xff]
      %v685 = vld [vmem:[#allocation3 + $0x90] sm:$0xff]
      %v686 = vld [vmem:[#allocation3 + $0x98] sm:$0xff]
      %v687 = vld [vmem:[#allocation3 + $0xa0] sm:$0xff]
      %v688 = vld [vmem:[#allocation3 + $0xa8] sm:$0xff]
      %v689 = vld [vmem:[#allocation3 + $0xb0] sm:$0xff]
      %v690 = vld [vmem:[#allocation3 + $0xb8] sm:$0xff]
      %v691 = vld [vmem:[#allocation3 + $0xc0] sm:$0xff]
      %v692 = vld [vmem:[#allocation3 + $0xc8] sm:$0xff]
      %v693 = vld [vmem:[#allocation3 + $0xd0] sm:$0xff]
      %v694 = vld [vmem:[#allocation3 + $0xd8] sm:$0xff]
      %v695 = vld [vmem:[#allocation3 + $0xe0] sm:$0xff]
      %v696 = vld [vmem:[#allocation3 + $0xe8] sm:$0xff]
      %v697 = vld [vmem:[#allocation3 + $0xf0] sm:$0xff]
      %v698 = vld [vmem:[#allocation3 + $0xf8] sm:$0xff]
      %v699 = vld [vmem:[#allocation3 + $0x100] sm:$0xff]
      %v700 = vld [vmem:[#allocation3 + $0x108] sm:$0xff]
      %v701 = vld [vmem:[#allocation3 + $0x110] sm:$0xff]
      %v702 = vld [vmem:[#allocation3 + $0x118] sm:$0xff]
      %v703 = vld [vmem:[#allocation3 + $0x120] sm:$0xff]
      %v704 = vld [vmem:[#allocation3 + $0x128] sm:$0xff]
      %v705 = vld [vmem:[#allocation3 + $0x130] sm:$0xff]
      %v706 = vld [vmem:[#allocation3 + $0x138] sm:$0xff]
      %v707 = vld [vmem:[#allocation3 + $0x140] sm:$0xff]
      %v708 = vld [vmem:[#allocation3 + $0x148] sm:$0xff]
      %v709 = vld [vmem:[#allocation3 + $0x150] sm:$0xff]
      %v710 = vld [vmem:[#allocation3 + $0x158] sm:$0xff]
      %v711 = vld [vmem:[#allocation3 + $0x160] sm:$0xff]
      %v712 = vld [vmem:[#allocation3 + $0x168] sm:$0xff]
      %v713 = vld [vmem:[#allocation3 + $0x170] sm:$0xff]
      %v714 = vld [vmem:[#allocation3 + $0x178] sm:$0xff]
      %v715 = vld [vmem:[#allocation3 + $0x180] sm:$0xff]
      %v716 = vld [vmem:[#allocation3 + $0x188] sm:$0xff]
      %v717 = vld [vmem:[#allocation3 + $0x190] sm:$0xff]
      %v718 = vld [vmem:[#allocation3 + $0x198] sm:$0xff]
      %v719 = vld [vmem:[#allocation3 + $0x1a0] sm:$0xff]
      %v720 = vld [vmem:[#allocation3 + $0x1a8] sm:$0xff]
      %v721 = vld [vmem:[#allocation3 + $0x1b0] sm:$0xff]
      %v722 = vld [vmem:[#allocation3 + $0x1b8] sm:$0xff]
      %v723 = vld [vmem:[#allocation3 + $0x1c0] sm:$0xff]
      %v724 = vld [vmem:[#allocation3 + $0x1c8] sm:$0xff]
      %v725 = vld [vmem:[#allocation3 + $0x1d0] sm:$0xff]
      %v726 = vld [vmem:[#allocation3 + $0x1d8] sm:$0xff]
      %v727 = vld [vmem:[#allocation3 + $0x1e0] sm:$0xff]
      %v728 = vld [vmem:[#allocation3 + $0x1e8] sm:$0xff]
      %v729 = vld [vmem:[#allocation3 + $0x1f0] sm:$0xff]
      %v730 = vld [vmem:[#allocation3 + $0x1f8] sm:$0xff]
      %v731 = vld [vmem:[#allocation3 + $0x200] sm:$0xff]
      %v732 = vld [vmem:[#allocation3 + $0x208] sm:$0xff]
      %v733 = vld [vmem:[#allocation3 + $0x210] sm:$0xff]
      %v734 = vld [vmem:[#allocation3 + $0x218] sm:$0xff]
      %v735 = vld [vmem:[#allocation3 + $0x220] sm:$0xff]
      %v736 = vld [vmem:[#allocation3 + $0x228] sm:$0xff]
      %v737 = vld [vmem:[#allocation3 + $0x230] sm:$0xff]
      %v738 = vld [vmem:[#allocation3 + $0x238] sm:$0xff]
      %v739 = vld [vmem:[%s1] sm:$0xf]
      %v740 = vld [vmem:[%s1 + $0x4] sm:$0xf]
      %v741 = vld [vmem:[%s1 + $0x8] sm:$0xf]
      %v742 = vld [vmem:[%s1 + $0xc] sm:$0xf]
      %v743 = vld [vmem:[%s1 + $0x10] sm:$0xf]
      %v744 = vld [vmem:[%s1 + $0x14] sm:$0xf]
      %v745 = vld [vmem:[%s1 + $0x18] sm:$0xf]
      %v746 = vld [vmem:[%s1 + $0x1c] sm:$0xf]
      %v747 = vld [vmem:[%s1 + $0x20] sm:$0xf]
      %v748 = vld [vmem:[%s1 + $0x24] sm:$0xf]
      %v749 = vld [vmem:[%s1 + $0x28] sm:$0xf]
      %v750 = vld [vmem:[%s1 + $0x2c] sm:$0xf]
      %v751 = vld [vmem:[%s1 + $0x30] sm:$0xf]
      %v752 = vld [vmem:[%s1 + $0x34] sm:$0xf]
      %v753 = vld [vmem:[%s1 + $0x38] sm:$0xf]
      %v754 = vld [vmem:[%s1 + $0x3c] sm:$0xf]
      %v755 = vld [vmem:[%s1 + $0x40] sm:$0xf]
      %v756 = vld [vmem:[%s1 + $0x44] sm:$0xf]
      %v757 = vld [vmem:[%s1 + $0x48] sm:$0xf]
      %v758 = vld [vmem:[%s1 + $0x4c] sm:$0xf]
      %v759 = vld [vmem:[%s1 + $0x50] sm:$0xf]
      %v760 = vld [vmem:[%s1 + $0x54] sm:$0xf]
      %v761 = vld [vmem:[%s1 + $0x58] sm:$0xf]
      %v762 = vld [vmem:[%s1 + $0x5c] sm:$0xf]
      %v763 = vld [vmem:[%s1 + $0x60] sm:$0xf]
      %v764 = vld [vmem:[%s1 + $0x64] sm:$0xf]
      %v765 = vld [vmem:[%s1 + $0x68] sm:$0xf]
      %v766 = vld [vmem:[%s1 + $0x6c] sm:$0xf]
      %v767 = vld [vmem:[%s1 + $0x70] sm:$0xf]
      %v768 = vld [vmem:[%s1 + $0x74] sm:$0xf]
      %v769 = vld [vmem:[%s1 + $0x78] sm:$0xf]
      %v770 = vld [vmem:[%s1 + $0x7c] sm:$0xf]
      %v771 = vld [vmem:[%s1 + $0x80] sm:$0xf]
      %v772 = vld [vmem:[%s1 + $0x84] sm:$0xf]
      %v773 = vld [vmem:[%s1 + $0x88] sm:$0xf]
      %v774 = vld [vmem:[%s1 + $0x8c] sm:$0xf]
      %v775 = vld [vmem:[%s1 + $0x90] sm:$0xf]
      %v776 = vld [vmem:[%s1 + $0x94] sm:$0xf]
      %v777 = vld [vmem:[%s1 + $0x98] sm:$0xf]
      %v778 = vld [vmem:[%s1 + $0x9c] sm:$0xf]
      %v779 = vld [vmem:[%s1 + $0xa0] sm:$0xf]
      %v780 = vld [vmem:[%s1 + $0xa4] sm:$0xf]
      %v781 = vld [vmem:[%s1 + $0xa8] sm:$0xf]
      %v782 = vld [vmem:[%s1 + $0xac] sm:$0xf]
      %v783 = vld [vmem:[%s1 + $0xb0] sm:$0xf]
      %v784 = vld [vmem:[%s1 + $0xb4] sm:$0xf]
      %v785 = vld [vmem:[%s1 + $0xb8] sm:$0xf]
      %v786 = vld [vmem:[%s1 + $0xbc] sm:$0xf]
      %v787 = vld [vmem:[%s1 + $0xc0] sm:$0xf]
      %v788 = vld [vmem:[%s1 + $0xc4] sm:$0xf]
      %v789 = vld [vmem:[%s1 + $0xc8] sm:$0xf]
      %v790 = vld [vmem:[%s1 + $0xcc] sm:$0xf]
      %v791 = vld [vmem:[%s1 + $0xd0] sm:$0xf]
      %v792 = vld [vmem:[%s1 + $0xd4] sm:$0xf]
      %v793 = vld [vmem:[%s1 + $0xd8] sm:$0xf]
      %v794 = vld [vmem:[%s1 + $0xdc] sm:$0xf]
      %v795 = vld [vmem:[%s1 + $0xe0] sm:$0xf]
      %v796 = vld [vmem:[%s1 + $0xe4] sm:$0xf]
      %v797 = vld [vmem:[%s1 + $0xe8] sm:$0xf]
      %v798 = vld [vmem:[%s1 + $0xec] sm:$0xf]
      %v799 = vld [vmem:[%s1 + $0xf0] sm:$0xf]
      %v800 = vld [vmem:[%s1 + $0xf4] sm:$0xf]
      %v801 = vld [vmem:[%s1 + $0xf8] sm:$0xf]
      %v802 = vld [vmem:[%s1 + $0xfc] sm:$0xf]
      %v803 = vld [vmem:[%s1 + $0x100] sm:$0xf]
      %v804 = vld [vmem:[%s1 + $0x104] sm:$0xf]
      %v805 = vld [vmem:[%s1 + $0x108] sm:$0xf]
      %v806 = vld [vmem:[%s1 + $0x10c] sm:$0xf]
      %v807 = vld [vmem:[%s1 + $0x110] sm:$0xf]
      %v808 = vld [vmem:[%s1 + $0x114] sm:$0xf]
      %v809 = vld [vmem:[%s1 + $0x118] sm:$0xf]
      %v810 = vld [vmem:[%s1 + $0x11c] sm:$0xf]
      %v811 = vld [vmem:[%s1 + $0x120] sm:$0xf]
      %v812 = vld [vmem:[%s1 + $0x124] sm:$0xf]
      %v813 = vld [vmem:[%s1 + $0x128] sm:$0xf]
      %v814 = vld [vmem:[%s1 + $0x12c] sm:$0xf]
      %v815 = vld [vmem:[%s1 + $0x130] sm:$0xf]
      %v816 = vld [vmem:[%s1 + $0x134] sm:$0xf]
      %v817 = vld [vmem:[%s1 + $0x138] sm:$0xf]
      %v818 = vld [vmem:[%s1 + $0x13c] sm:$0xf]
      %v819 = vld [vmem:[%s1 + $0x140] sm:$0xf]
      %v820 = vld [vmem:[%s1 + $0x144] sm:$0xf]
      %v821 = vld [vmem:[%s1 + $0x148] sm:$0xf]
      %v822 = vld [vmem:[%s1 + $0x14c] sm:$0xf]
      %v823 = vld [vmem:[%s1 + $0x150] sm:$0xf]
      %v824 = vld [vmem:[%s1 + $0x154] sm:$0xf]
      %v825 = vld [vmem:[%s1 + $0x158] sm:$0xf]
      %v826 = vld [vmem:[%s1 + $0x15c] sm:$0xf]
      %v827 = vld [vmem:[%s1 + $0x160] sm:$0xf]
      %v828 = vld [vmem:[%s1 + $0x164] sm:$0xf]
      %v829 = vld [vmem:[%s1 + $0x168] sm:$0xf]
      %v830 = vld [vmem:[%s1 + $0x16c] sm:$0xf]
      %v831 = vld [vmem:[%s1 + $0x170] sm:$0xf]
      %v832 = vld [vmem:[%s1 + $0x174] sm:$0xf]
      %v833 = vld [vmem:[%s1 + $0x178] sm:$0xf]
      %v834 = vld [vmem:[%s1 + $0x17c] sm:$0xf]
      %v835 = vld [vmem:[%s1 + $0x180] sm:$0xf]
      %v836 = vld [vmem:[%s1 + $0x184] sm:$0xf]
      %v837 = vld [vmem:[%s1 + $0x188] sm:$0xf]
      %v838 = vld [vmem:[%s1 + $0x18c] sm:$0xf]
      %v839 = vld [vmem:[%s1 + $0x190] sm:$0xf]
      %v840 = vld [vmem:[%s1 + $0x194] sm:$0xf]
      %v841 = vld [vmem:[%s1 + $0x198] sm:$0xf]
      %v842 = vld [vmem:[%s1 + $0x19c] sm:$0xf]
      %v843 = vld [vmem:[%s1 + $0x1a0] sm:$0xf]
      %v844 = vld [vmem:[%s1 + $0x1a4] sm:$0xf]
      %v845 = vld [vmem:[%s1 + $0x1a8] sm:$0xf]
      %v846 = vld [vmem:[%s1 + $0x1ac] sm:$0xf]
      %v847 = vld [vmem:[%s1 + $0x1b0] sm:$0xf]
      %v848 = vld [vmem:[%s1 + $0x1b4] sm:$0xf]
      %v849 = vld [vmem:[%s1 + $0x1b8] sm:$0xf]
      %v850 = vld [vmem:[%s1 + $0x1bc] sm:$0xf]
      %v851 = vld [vmem:[%s1 + $0x1c0] sm:$0xf]
      %v852 = vld [vmem:[%s1 + $0x1c4] sm:$0xf]
      %v853 = vld [vmem:[%s1 + $0x1c8] sm:$0xf]
      %v854 = vld [vmem:[%s1 + $0x1cc] sm:$0xf]
      %v855 = vld [vmem:[%s1 + $0x1d0] sm:$0xf]
      %v856 = vld [vmem:[%s1 + $0x1d4] sm:$0xf]
      %v857 = vld [vmem:[%s1 + $0x1d8] sm:$0xf]
      %v858 = vld [vmem:[%s1 + $0x1dc] sm:$0xf]
      %v859 = vld [vmem:[%s1 + $0x1e0] sm:$0xf]
      %v860 = vld [vmem:[%s1 + $0x1e4] sm:$0xf]
      %v861 = vld [vmem:[%s1 + $0x1e8] sm:$0xf]
      %v862 = vld [vmem:[%s1 + $0x1ec] sm:$0xf]
      %v863 = vld [vmem:[%s1 + $0x1f0] sm:$0xf]
      %v864 = vld [vmem:[%s1 + $0x1f4] sm:$0xf]
      %v865 = vld [vmem:[%s1 + $0x1f8] sm:$0xf]
      %v866 = vld [vmem:[%s1 + $0x1fc] sm:$0xf]
      %v867 = vld [vmem:[%s1 + $0x200] sm:$0xf]
      %v868 = vld [vmem:[%s1 + $0x204] sm:$0xf]
      %v869 = vld [vmem:[%s1 + $0x208] sm:$0xf]
      %v870 = vld [vmem:[%s1 + $0x20c] sm:$0xf]
      %v871 = vld [vmem:[%s1 + $0x210] sm:$0xf]
      %v872 = vld [vmem:[%s1 + $0x214] sm:$0xf]
      %v873 = vld [vmem:[%s1 + $0x218] sm:$0xf]
      %v874 = vld [vmem:[%s1 + $0x21c] sm:$0xf]
      %v875 = vld [vmem:[%s1 + $0x220] sm:$0xf]
      %v876 = vld [vmem:[%s1 + $0x224] sm:$0xf]
      %v877 = vld [vmem:[%s1 + $0x228] sm:$0xf]
      %v878 = vld [vmem:[%s1 + $0x22c] sm:$0xf]
      %v879 = vld [vmem:[%s1 + $0x230] sm:$0xf]
      %v880 = vld [vmem:[%s1 + $0x234] sm:$0xf]
      %v881 = vld [vmem:[%s1 + $0x238] sm:$0xf]
      %v882 = vld [vmem:[%s1 + $0x23c] sm:$0xf]
      %v883 = vld [vmem:[%s2] sm:$0x1]
      %v885 = vlaneseq
      %v886 = vshrl.u32 %v885, 7
      %v887 = vsub.s32 0, %v886
      %v888 = vrot.slane %v883, %v887
      %v1034 = vunpack.c.l.b16 %v739
      %v1035 = vunpack.c.l.b16 %v740
      %v1036 = vunpack.c.l.b16 %v741
      %v1037 = vunpack.c.l.b16 %v742
      %v1038 = vunpack.c.l.b16 %v743
      %v1039 = vunpack.c.l.b16 %v744
      %v1040 = vunpack.c.l.b16 %v745
      %v1041 = vunpack.c.l.b16 %v746
      %v1042 = vunpack.c.l.b16 %v747
      %v1043 = vunpack.c.l.b16 %v748
      %v1044 = vunpack.c.l.b16 %v749
      %v1045 = vunpack.c.l.b16 %v750
      %v1046 = vunpack.c.l.b16 %v751
      %v1047 = vunpack.c.l.b16 %v752
      %v1048 = vunpack.c.l.b16 %v753
      %v1049 = vunpack.c.l.b16 %v754
      %v1050 = vunpack.c.l.b16 %v755
      %v1051 = vunpack.c.l.b16 %v756
      %v1052 = vunpack.c.l.b16 %v757
      %v1053 = vunpack.c.l.b16 %v758
      %v1054 = vunpack.c.l.b16 %v759
      %v1055 = vunpack.c.l.b16 %v760
      %v1056 = vunpack.c.l.b16 %v761
      %v1057 = vunpack.c.l.b16 %v762
      %v1058 = vunpack.c.l.b16 %v763
      %v1059 = vunpack.c.l.b16 %v764
      %v1060 = vunpack.c.l.b16 %v765
      %v1061 = vunpack.c.l.b16 %v766
      %v1062 = vunpack.c.l.b16 %v767
      %v1063 = vunpack.c.l.b16 %v768
      %v1064 = vunpack.c.l.b16 %v769
      %v1065 = vunpack.c.l.b16 %v770
      %v1066 = vunpack.c.l.b16 %v771
      %v1067 = vunpack.c.l.b16 %v772
      %v1068 = vunpack.c.l.b16 %v773
      %v1069 = vunpack.c.l.b16 %v774
      %v1070 = vunpack.c.l.b16 %v775
      %v1071 = vunpack.c.l.b16 %v776
      %v1072 = vunpack.c.l.b16 %v777
      %v1073 = vunpack.c.l.b16 %v778
      %v1074 = vunpack.c.l.b16 %v779
      %v1075 = vunpack.c.l.b16 %v780
      %v1076 = vunpack.c.l.b16 %v781
      %v1077 = vunpack.c.l.b16 %v782
      %v1078 = vunpack.c.l.b16 %v783
      %v1079 = vunpack.c.l.b16 %v784
      %v1080 = vunpack.c.l.b16 %v785
      %v1081 = vunpack.c.l.b16 %v786
      %v1082 = vunpack.c.l.b16 %v787
      %v1083 = vunpack.c.l.b16 %v788
      %v1084 = vunpack.c.l.b16 %v789
      %v1085 = vunpack.c.l.b16 %v790
      %v1086 = vunpack.c.l.b16 %v791
      %v1087 = vunpack.c.l.b16 %v792
      %v1088 = vunpack.c.l.b16 %v793
      %v1089 = vunpack.c.l.b16 %v794
      %v1090 = vunpack.c.l.b16 %v795
      %v1091 = vunpack.c.l.b16 %v796
      %v1092 = vunpack.c.l.b16 %v797
      %v1093 = vunpack.c.l.b16 %v798
      %v1094 = vunpack.c.l.b16 %v799
      %v1095 = vunpack.c.l.b16 %v800
      %v1096 = vunpack.c.l.b16 %v801
      %v1097 = vunpack.c.l.b16 %v802
      %v1098 = vunpack.c.l.b16 %v803
      %v1099 = vunpack.c.l.b16 %v804
      %v1100 = vunpack.c.l.b16 %v805
      %v1101 = vunpack.c.l.b16 %v806
      %v1102 = vunpack.c.l.b16 %v807
      %v1103 = vunpack.c.l.b16 %v808
      %v1104 = vunpack.c.l.b16 %v809
      %v1105 = vunpack.c.l.b16 %v810
      %v1106 = vunpack.c.l.b16 %v811
      %v1107 = vunpack.c.l.b16 %v812
      %v1108 = vunpack.c.l.b16 %v813
      %v1109 = vunpack.c.l.b16 %v814
      %v1110 = vunpack.c.l.b16 %v815
      %v1111 = vunpack.c.l.b16 %v816
      %v1112 = vunpack.c.l.b16 %v817
      %v1113 = vunpack.c.l.b16 %v818
      %v1114 = vunpack.c.l.b16 %v819
      %v1115 = vunpack.c.l.b16 %v820
      %v1116 = vunpack.c.l.b16 %v821
      %v1117 = vunpack.c.l.b16 %v822
      %v1118 = vunpack.c.l.b16 %v823
      %v1119 = vunpack.c.l.b16 %v824
      %v1120 = vunpack.c.l.b16 %v825
      %v1121 = vunpack.c.l.b16 %v826
      %v1122 = vunpack.c.l.b16 %v827
      %v1123 = vunpack.c.l.b16 %v828
      %v1124 = vunpack.c.l.b16 %v829
      %v1125 = vunpack.c.l.b16 %v830
      %v1126 = vunpack.c.l.b16 %v831
      %v1127 = vunpack.c.l.b16 %v832
      %v1128 = vunpack.c.l.b16 %v833
      %v1129 = vunpack.c.l.b16 %v834
      %v1130 = vunpack.c.l.b16 %v835
      %v1131 = vunpack.c.l.b16 %v836
      %v1132 = vunpack.c.l.b16 %v837
      %v1133 = vunpack.c.l.b16 %v838
      %v1134 = vunpack.c.l.b16 %v839
      %v1135 = vunpack.c.l.b16 %v840
      %v1136 = vunpack.c.l.b16 %v841
      %v1137 = vunpack.c.l.b16 %v842
      %v1138 = vunpack.c.l.b16 %v843
      %v1139 = vunpack.c.l.b16 %v844
      %v1140 = vunpack.c.l.b16 %v845
      %v1141 = vunpack.c.l.b16 %v846
      %v1142 = vunpack.c.l.b16 %v847
      %v1143 = vunpack.c.l.b16 %v848
      %v1144 = vunpack.c.l.b16 %v849
      %v1145 = vunpack.c.l.b16 %v850
      %v1146 = vunpack.c.l.b16 %v851
      %v1147 = vunpack.c.l.b16 %v852
      %v1148 = vunpack.c.l.b16 %v853
      %v1149 = vunpack.c.l.b16 %v854
      %v1150 = vunpack.c.l.b16 %v855
      %v1151 = vunpack.c.l.b16 %v856
      %v1152 = vunpack.c.l.b16 %v857
      %v1153 = vunpack.c.l.b16 %v858
      %v1154 = vunpack.c.l.b16 %v859
      %v1155 = vunpack.c.l.b16 %v860
      %v1156 = vunpack.c.l.b16 %v861
      %v1157 = vunpack.c.l.b16 %v862
      %v1158 = vunpack.c.l.b16 %v863
      %v1159 = vunpack.c.l.b16 %v864
      %v1160 = vunpack.c.l.b16 %v865
      %v1161 = vunpack.c.l.b16 %v866
      %v1162 = vunpack.c.l.b16 %v867
      %v1163 = vunpack.c.l.b16 %v868
      %v1164 = vunpack.c.l.b16 %v869
      %v1165 = vunpack.c.l.b16 %v870
      %v1166 = vunpack.c.l.b16 %v871
      %v1167 = vunpack.c.l.b16 %v872
      %v1168 = vunpack.c.l.b16 %v873
      %v1169 = vunpack.c.l.b16 %v874
      %v1170 = vunpack.c.l.b16 %v875
      %v1171 = vunpack.c.l.b16 %v876
      %v1172 = vunpack.c.l.b16 %v877
      %v1173 = vunpack.c.l.b16 %v878
      %v1174 = vunpack.c.l.b16 %v879
      %v1175 = vunpack.c.l.b16 %v880
      %v1176 = vunpack.c.l.b16 %v881
      %v1177 = vunpack.c.l.b16 %v882
      %v1178 = vpack.c.b16 %v1035, %v1034
      %v1179 = vpack.c.b16 %v1037, %v1036
      %v1180 = vpack.c.b16 %v1039, %v1038
      %v1181 = vpack.c.b16 %v1041, %v1040
      %v1182 = vpack.c.b16 %v1043, %v1042
      %v1183 = vpack.c.b16 %v1045, %v1044
      %v1184 = vpack.c.b16 %v1047, %v1046
      %v1185 = vpack.c.b16 %v1049, %v1048
      %v1186 = vpack.c.b16 %v1051, %v1050
      %v1187 = vpack.c.b16 %v1053, %v1052
      %v1188 = vpack.c.b16 %v1055, %v1054
      %v1189 = vpack.c.b16 %v1057, %v1056
      %v1190 = vpack.c.b16 %v1059, %v1058
      %v1191 = vpack.c.b16 %v1061, %v1060
      %v1192 = vpack.c.b16 %v1063, %v1062
      %v1193 = vpack.c.b16 %v1065, %v1064
      %v1194 = vpack.c.b16 %v1067, %v1066
      %v1195 = vpack.c.b16 %v1069, %v1068
      %v1196 = vpack.c.b16 %v1071, %v1070
      %v1197 = vpack.c.b16 %v1073, %v1072
      %v1198 = vpack.c.b16 %v1075, %v1074
      %v1199 = vpack.c.b16 %v1077, %v1076
      %v1200 = vpack.c.b16 %v1079, %v1078
      %v1201 = vpack.c.b16 %v1081, %v1080
      %v1202 = vpack.c.b16 %v1083, %v1082
      %v1203 = vpack.c.b16 %v1085, %v1084
      %v1204 = vpack.c.b16 %v1087, %v1086
      %v1205 = vpack.c.b16 %v1089, %v1088
      %v1206 = vpack.c.b16 %v1091, %v1090
      %v1207 = vpack.c.b16 %v1093, %v1092
      %v1208 = vpack.c.b16 %v1095, %v1094
      %v1209 = vpack.c.b16 %v1097, %v1096
      %v1210 = vpack.c.b16 %v1099, %v1098
      %v1211 = vpack.c.b16 %v1101, %v1100
      %v1212 = vpack.c.b16 %v1103, %v1102
      %v1213 = vpack.c.b16 %v1105, %v1104
      %v1214 = vpack.c.b16 %v1107, %v1106
      %v1215 = vpack.c.b16 %v1109, %v1108
      %v1216 = vpack.c.b16 %v1111, %v1110
      %v1217 = vpack.c.b16 %v1113, %v1112
      %v1218 = vpack.c.b16 %v1115, %v1114
      %v1219 = vpack.c.b16 %v1117, %v1116
      %v1220 = vpack.c.b16 %v1119, %v1118
      %v1221 = vpack.c.b16 %v1121, %v1120
      %v1222 = vpack.c.b16 %v1123, %v1122
      %v1223 = vpack.c.b16 %v1125, %v1124
      %v1224 = vpack.c.b16 %v1127, %v1126
      %v1225 = vpack.c.b16 %v1129, %v1128
      %v1226 = vpack.c.b16 %v1131, %v1130
      %v1227 = vpack.c.b16 %v1133, %v1132
      %v1228 = vpack.c.b16 %v1135, %v1134
      %v1229 = vpack.c.b16 %v1137, %v1136
      %v1230 = vpack.c.b16 %v1139, %v1138
      %v1231 = vpack.c.b16 %v1141, %v1140
      %v1232 = vpack.c.b16 %v1143, %v1142
      %v1233 = vpack.c.b16 %v1145, %v1144
      %v1234 = vpack.c.b16 %v1147, %v1146
      %v1235 = vpack.c.b16 %v1149, %v1148
      %v1236 = vpack.c.b16 %v1151, %v1150
      %v1237 = vpack.c.b16 %v1153, %v1152
      %v1238 = vpack.c.b16 %v1155, %v1154
      %v1239 = vpack.c.b16 %v1157, %v1156
      %v1240 = vpack.c.b16 %v1159, %v1158
      %v1241 = vpack.c.b16 %v1161, %v1160
      %v1242 = vpack.c.b16 %v1163, %v1162
      %v1243 = vpack.c.b16 %v1165, %v1164
      %v1244 = vpack.c.b16 %v1167, %v1166
      %v1245 = vpack.c.b16 %v1169, %v1168
      %v1246 = vpack.c.b16 %v1171, %v1170
      %v1247 = vpack.c.b16 %v1173, %v1172
      %v1248 = vpack.c.b16 %v1175, %v1174
      %v1249 = vpack.c.b16 %v1177, %v1176
      %1322 = vmatprep.subr.bf16.mxu0 0
      %1323 = vmatpush1.bf16.msra.mxu0 %v1178
      %1324 = vmatprep.subr.bf16.mxu0 0
      %1325 = vmatpush1.bf16.msra.mxu0 %v1179
      %1326 = vmatprep.subr.bf16.mxu0 0
      %1327 = vmatpush1.bf16.msra.mxu0 %v1180
      %1328 = vmatprep.subr.bf16.mxu0 0
      %1329 = vmatpush1.bf16.msra.mxu0 %v1181
      %1330 = vmatprep.subr.bf16.mxu0 0
      %1331 = vmatpush1.bf16.msra.mxu0 %v1182
      %1332 = vmatprep.subr.bf16.mxu0 0
      %1333 = vmatpush1.bf16.msra.mxu0 %v1183
      %1334 = vmatprep.subr.bf16.mxu0 0
      %1335 = vmatpush1.bf16.msra.mxu0 %v1184
      %1336 = vmatprep.subr.bf16.mxu0 0
      %1337 = vmatpush1.bf16.msra.mxu0 %v1185
      %1338 = vmatprep.subr.bf16.mxu0 0
      %1339 = vmatpush1.bf16.msra.mxu0 %v1186
      %1340 = vmatprep.subr.bf16.mxu0 0
      %1341 = vmatpush1.bf16.msra.mxu0 %v1187
      %1342 = vmatprep.subr.bf16.mxu0 0
      %1343 = vmatpush1.bf16.msra.mxu0 %v1188
      %1344 = vmatprep.subr.bf16.mxu0 0
      %1345 = vmatpush1.bf16.msra.mxu0 %v1189
      %1346 = vmatprep.subr.bf16.mxu0 0
      %1347 = vmatpush1.bf16.msra.mxu0 %v1190
      %1348 = vmatprep.subr.bf16.mxu0 0
      %1349 = vmatpush1.bf16.msra.mxu0 %v1191
      %1350 = vmatprep.subr.bf16.mxu0 0
      %1351 = vmatpush1.bf16.msra.mxu0 %v1192
      %1352 = vmatprep.subr.bf16.mxu0 0
      %1353 = vmatpush1.bf16.msra.mxu0 %v1193
      %1354 = vmatprep.mubr.bf16.mxu0 %v668
      %1355 = vmatmul.mubr.bf16.gmra.mrb[0].mxu0 %v667
      %v1356 = vpop.f32.mrb[0].mxu0
      %v1357 = vadd.f32 %v888, %v1356
      %v1358 = vpop.f32.mrb[0].mxu0
      %v1359 = vpop.f32.mrb[0].mxu0
      %v1360 = vadd.f32 %v888, %v1359
      %v1361 = vpop.f32.mrb[0].mxu0
      %1362 = vmatprep.mubr.bf16.mxu0 %v677
      %1363 = vmatmul.mubr.bf16.gmra.mrb[0].mxu0 %v676
      %v1364 = vpop.f32.mrb[0].mxu0
      %v1365 = vadd.f32 %v888, %v1364
      %v1366 = vpop.f32.mrb[0].mxu0
      %v1367 = vpop.f32.mrb[0].mxu0
      %v1368 = vadd.f32 %v888, %v1367
      %v1369 = vpop.f32.mrb[0].mxu0
      %1370 = vmatprep.mubr.bf16.mxu0 %v686
      %1371 = vmatmul.mubr.bf16.gmra.mrb[0].mxu0 %v685
      %v1372 = vpop.f32.mrb[0].mxu0
      %v1373 = vadd.f32 %v888, %v1372
      %v1374 = vpop.f32.mrb[0].mxu0
      %v1375 = vpop.f32.mrb[0].mxu0
      %v1376 = vadd.f32 %v888, %v1375
      %v1377 = vpop.f32.mrb[0].mxu0
      %1378 = vmatprep.mubr.bf16.mxu0 %v695
      %1379 = vmatmul.mubr.bf16.gmra.mrb[0].mxu0 %v694
      %v1380 = vpop.f32.mrb[0].mxu0
      %v1381 = vadd.f32 %v888, %v1380
      %v1382 = vpop.f32.mrb[0].mxu0
      %v1383 = vpop.f32.mrb[0].mxu0
      %v1384 = vadd.f32 %v888, %v1383
      %v1385 = vpop.f32.mrb[0].mxu0
      %1386 = vmatprep.mubr.bf16.mxu0 %v704
      %1387 = vmatmul.mubr.bf16.gmra.mrb[0].mxu0 %v703
      %v1388 = vpop.f32.mrb[0].mxu0
      %v1389 = vadd.f32 %v888, %v1388
      %v1390 = vpop.f32.mrb[0].mxu0
      %v1391 = vpop.f32.mrb[0].mxu0
      %v1392 = vadd.f32 %v888, %v1391
      %v1393 = vpop.f32.mrb[0].mxu0
      %1394 = vmatprep.mubr.bf16.mxu0 %v713
      %1395 = vmatmul.mubr.bf16.gmra.mrb[0].mxu0 %v712
      %v1396 = vpop.f32.mrb[0].mxu0
      %v1397 = vadd.f32 %v888, %v1396
      %v1398 = vpop.f32.mrb[0].mxu0
      %v1399 = vpop.f32.mrb[0].mxu0
      %v1400 = vadd.f32 %v888, %v1399
      %v1401 = vpop.f32.mrb[0].mxu0
      %1402 = vmatprep.mubr.bf16.mxu0 %v722
      %1403 = vmatmul.mubr.bf16.gmra.mrb[0].mxu0 %v721
      %v1404 = vpop.f32.mrb[0].mxu0
      %v1405 = vadd.f32 %v888, %v1404
      %v1406 = vpop.f32.mrb[0].mxu0
      %v1407 = vpop.f32.mrb[0].mxu0
      %v1408 = vadd.f32 %v888, %v1407
      %v1409 = vpop.f32.mrb[0].mxu0
      %1410 = vmatprep.mubr.bf16.mxu0 %v731
      %1411 = vmatmul.mubr.bf16.gmra.mrb[0].mxu0 %v730
      %v1412 = vpop.f32.mrb[0].mxu0
      %v1413 = vadd.f32 %v888, %v1412
      %v1414 = vpop.f32.mrb[0].mxu0
      %v1415 = vpop.f32.mrb[0].mxu0
      %v1416 = vadd.f32 %v888, %v1415
      %v1417 = vpop.f32.mrb[0].mxu0
      %1418 = vdwg.mxu0
      %1419 = vmatprep.subr.bf16.mxu0 0
      %1420 = vmatpush1.bf16.msra.mxu0 %v1194
      %1421 = vmatprep.subr.bf16.mxu0 0
      %1422 = vmatpush1.bf16.msra.mxu0 %v1195
      %1423 = vmatprep.subr.bf16.mxu0 0
      %1424 = vmatpush1.bf16.msra.mxu0 %v1196
      %1425 = vmatprep.subr.bf16.mxu0 0
      %1426 = vmatpush1.bf16.msra.mxu0 %v1197
      %1427 = vmatprep.subr.bf16.mxu0 0
      %1428 = vmatpush1.bf16.msra.mxu0 %v1198
      %1429 = vmatprep.subr.bf16.mxu0 0
      %1430 = vmatpush1.bf16.msra.mxu0 %v1199
      %1431 = vmatprep.subr.bf16.mxu0 0
      %1432 = vmatpush1.bf16.msra.mxu0 %v1200
      %1433 = vmatprep.subr.bf16.mxu0 0
      %1434 = vmatpush1.bf16.msra.mxu0 %v1201
      %1435 = vmatprep.subr.bf16.mxu0 0
      %1436 = vmatpush1.bf16.msra.mxu0 %v1202
      %1437 = vmatprep.subr.bf16.mxu0 0
      %1438 = vmatpush1.bf16.msra.mxu0 %v1203
      %1439 = vmatprep.subr.bf16.mxu0 0
      %1440 = vmatpush1.bf16.msra.mxu0 %v1204
      %1441 = vmatprep.subr.bf16.mxu0 0
      %1442 = vmatpush1.bf16.msra.mxu0 %v1205
      %1443 = vmatprep.subr.bf16.mxu0 0
      %1444 = vmatpush1.bf16.msra.mxu0 %v1206
      %1445 = vmatprep.subr.bf16.mxu0 0
      %1446 = vmatpush1.bf16.msra.mxu0 %v1207
      %1447 = vmatprep.subr.bf16.mxu0 0
      %1448 = vmatpush1.bf16.msra.mxu0 %v1208
      %1449 = vmatprep.subr.bf16.mxu0 0
      %1450 = vmatpush1.bf16.msra.mxu0 %v1209
      %1451 = vmatprep.mubr.bf16.mxu0 %v670
      %1452 = vmatmul.mubr.bf16.gmra.mrb[0].mxu0 %v669
      %v1453 = vpop.f32.mrb[0].mxu0
      %v1454 = vadd.f32 %v1357, %v1453
      %v1455 = vpop.f32.mrb[0].mxu0
      %v1456 = vpop.f32.mrb[0].mxu0
      %v1457 = vadd.f32 %v1360, %v1456
      %v1458 = vpop.f32.mrb[0].mxu0
      %1459 = vmatprep.mubr.bf16.mxu0 %v679
      %1460 = vmatmul.mubr.bf16.gmra.mrb[0].mxu0 %v678
      %v1461 = vpop.f32.mrb[0].mxu0
      %v1462 = vadd.f32 %v1365, %v1461
      %v1463 = vpop.f32.mrb[0].mxu0
      %v1464 = vpop.f32.mrb[0].mxu0
      %v1465 = vadd.f32 %v1368, %v1464
      %v1466 = vpop.f32.mrb[0].mxu0
      %1467 = vmatprep.mubr.bf16.mxu0 %v688
      %1468 = vmatmul.mubr.bf16.gmra.mrb[0].mxu0 %v687
      %v1469 = vpop.f32.mrb[0].mxu0
      %v1470 = vadd.f32 %v1373, %v1469
      %v1471 = vpop.f32.mrb[0].mxu0
      %v1472 = vpop.f32.mrb[0].mxu0
      %v1473 = vadd.f32 %v1376, %v1472
      %v1474 = vpop.f32.mrb[0].mxu0
      %1475 = vmatprep.mubr.bf16.mxu0 %v697
      %1476 = vmatmul.mubr.bf16.gmra.mrb[0].mxu0 %v696
      %v1477 = vpop.f32.mrb[0].mxu0
      %v1478 = vadd.f32 %v1381, %v1477
      %v1479 = vpop.f32.mrb[0].mxu0
      %v1480 = vpop.f32.mrb[0].mxu0
      %v1481 = vadd.f32 %v1384, %v1480
      %v1482 = vpop.f32.mrb[0].mxu0
      %1483 = vmatprep.mubr.bf16.mxu0 %v706
      %1484 = vmatmul.mubr.bf16.gmra.mrb[0].mxu0 %v705
      %v1485 = vpop.f32.mrb[0].mxu0
      %v1486 = vadd.f32 %v1389, %v1485
      %v1487 = vpop.f32.mrb[0].mxu0
      %v1488 = vpop.f32.mrb[0].mxu0
      %v1489 = vadd.f32 %v1392, %v1488
      %v1490 = vpop.f32.mrb[0].mxu0
      %1491 = vmatprep.mubr.bf16.mxu0 %v715
      %1492 = vmatmul.mubr.bf16.gmra.mrb[0].mxu0 %v714
      %v1493 = vpop.f32.mrb[0].mxu0
      %v1494 = vadd.f32 %v1397, %v1493
      %v1495 = vpop.f32.mrb[0].mxu0
      %v1496 = vpop.f32.mrb[0].mxu0
      %v1497 = vadd.f32 %v1400, %v1496
      %v1498 = vpop.f32.mrb[0].mxu0
      %1499 = vmatprep.mubr.bf16.mxu0 %v724
      %1500 = vmatmul.mubr.bf16.gmra.mrb[0].mxu0 %v723
      %v1501 = vpop.f32.mrb[0].mxu0
      %v1502 = vadd.f32 %v1405, %v1501
      %v1503 = vpop.f32.mrb[0].mxu0
      %v1504 = vpop.f32.mrb[0].mxu0
      %v1505 = vadd.f32 %v1408, %v1504
      %v1506 = vpop.f32.mrb[0].mxu0
      %1507 = vmatprep.mubr.bf16.mxu0 %v733
      %1508 = vmatmul.mubr.bf16.gmra.mrb[0].mxu0 %v732
      %v1509 = vpop.f32.mrb[0].mxu0
      %v1510 = vadd.f32 %v1413, %v1509
      %v1511 = vpop.f32.mrb[0].mxu0
      %v1512 = vpop.f32.mrb[0].mxu0
      %v1513 = vadd.f32 %v1416, %v1512
      %v1514 = vpop.f32.mrb[0].mxu0
      %1515 = vdwg.mxu0
      %1516 = vmatprep.subr.bf16.mxu0 0
      %1517 = vmatpush1.bf16.msra.mxu0 %v1210
      %1518 = vmatprep.subr.bf16.mxu0 0
      %1519 = vmatpush1.bf16.msra.mxu0 %v1211
      %1520 = vmatprep.subr.bf16.mxu0 0
      %1521 = vmatpush1.bf16.msra.mxu0 %v1212
      %1522 = vmatprep.subr.bf16.mxu0 0
      %1523 = vmatpush1.bf16.msra.mxu0 %v1213
      %1524 = vmatprep.subr.bf16.mxu0 0
      %1525 = vmatpush1.bf16.msra.mxu0 %v1214
      %1526 = vmatprep.subr.bf16.mxu0 0
      %1527 = vmatpush1.bf16.msra.mxu0 %v1215
      %1528 = vmatprep.subr.bf16.mxu0 0
      %1529 = vmatpush1.bf16.msra.mxu0 %v1216
      %1530 = vmatprep.subr.bf16.mxu0 0
      %1531 = vmatpush1.bf16.msra.mxu0 %v1217
      %1532 = vmatprep.subr.bf16.mxu0 0
      %1533 = vmatpush1.bf16.msra.mxu0 %v1218
      %1534 = vmatprep.subr.bf16.mxu0 0
      %1535 = vmatpush1.bf16.msra.mxu0 %v1219
      %1536 = vmatprep.subr.bf16.mxu0 0
      %1537 = vmatpush1.bf16.msra.mxu0 %v1220
      %1538 = vmatprep.subr.bf16.mxu0 0
      %1539 = vmatpush1.bf16.msra.mxu0 %v1221
      %1540 = vmatprep.subr.bf16.mxu0 0
      %1541 = vmatpush1.bf16.msra.mxu0 %v1222
      %1542 = vmatprep.subr.bf16.mxu0 0
      %1543 = vmatpush1.bf16.msra.mxu0 %v1223
      %1544 = vmatprep.subr.bf16.mxu0 0
      %1545 = vmatpush1.bf16.msra.mxu0 %v1224
      %1546 = vmatprep.subr.bf16.mxu0 0
      %1547 = vmatpush1.bf16.msra.mxu0 %v1225
      %1548 = vmatprep.mubr.bf16.mxu0 %v672
      %1549 = vmatmul.mubr.bf16.gmra.mrb[0].mxu0 %v671
      %v1550 = vpop.f32.mrb[0].mxu0
      %v1551 = vadd.f32 %v1454, %v1550
      %v1552 = vpop.f32.mrb[0].mxu0
      %v1553 = vpop.f32.mrb[0].mxu0
      %v1554 = vadd.f32 %v1457, %v1553
      %v1555 = vpop.f32.mrb[0].mxu0
      %1556 = vmatprep.mubr.bf16.mxu0 %v681
      %1557 = vmatmul.mubr.bf16.gmra.mrb[0].mxu0 %v680
      %v1558 = vpop.f32.mrb[0].mxu0
      %v1559 = vadd.f32 %v1462, %v1558
      %v1560 = vpop.f32.mrb[0].mxu0
      %v1561 = vpop.f32.mrb[0].mxu0
      %v1562 = vadd.f32 %v1465, %v1561
      %v1563 = vpop.f32.mrb[0].mxu0
      %1564 = vmatprep.mubr.bf16.mxu0 %v690
      %1565 = vmatmul.mubr.bf16.gmra.mrb[0].mxu0 %v689
      %v1566 = vpop.f32.mrb[0].mxu0
      %v1567 = vadd.f32 %v1470, %v1566
      %v1568 = vpop.f32.mrb[0].mxu0
      %v1569 = vpop.f32.mrb[0].mxu0
      %v1570 = vadd.f32 %v1473, %v1569
      %v1571 = vpop.f32.mrb[0].mxu0
      %1572 = vmatprep.mubr.bf16.mxu0 %v699
      %1573 = vmatmul.mubr.bf16.gmra.mrb[0].mxu0 %v698
      %v1574 = vpop.f32.mrb[0].mxu0
      %v1575 = vadd.f32 %v1478, %v1574
      %v1576 = vpop.f32.mrb[0].mxu0
      %v1577 = vpop.f32.mrb[0].mxu0
      %v1578 = vadd.f32 %v1481, %v1577
      %v1579 = vpop.f32.mrb[0].mxu0
      %1580 = vmatprep.mubr.bf16.mxu0 %v708
      %1581 = vmatmul.mubr.bf16.gmra.mrb[0].mxu0 %v707
      %v1582 = vpop.f32.mrb[0].mxu0
      %v1583 = vadd.f32 %v1486, %v1582
      %v1584 = vpop.f32.mrb[0].mxu0
      %v1585 = vpop.f32.mrb[0].mxu0
      %v1586 = vadd.f32 %v1489, %v1585
      %v1587 = vpop.f32.mrb[0].mxu0
      %1588 = vmatprep.mubr.bf16.mxu0 %v717
      %1589 = vmatmul.mubr.bf16.gmra.mrb[0].mxu0 %v716
      %v1590 = vpop.f32.mrb[0].mxu0
      %v1591 = vadd.f32 %v1494, %v1590
      %v1592 = vpop.f32.mrb[0].mxu0
      %v1593 = vpop.f32.mrb[0].mxu0
      %v1594 = vadd.f32 %v1497, %v1593
      %v1595 = vpop.f32.mrb[0].mxu0
      %1596 = vmatprep.mubr.bf16.mxu0 %v726
      %1597 = vmatmul.mubr.bf16.gmra.mrb[0].mxu0 %v725
      %v1598 = vpop.f32.mrb[0].mxu0
      %v1599 = vadd.f32 %v1502, %v1598
      %v1600 = vpop.f32.mrb[0].mxu0
      %v1601 = vpop.f32.mrb[0].mxu0
      %v1602 = vadd.f32 %v1505, %v1601
      %v1603 = vpop.f32.mrb[0].mxu0
      %1604 = vmatprep.mubr.bf16.mxu0 %v735
      %1605 = vmatmul.mubr.bf16.gmra.mrb[0].mxu0 %v734
      %v1606 = vpop.f32.mrb[0].mxu0
      %v1607 = vadd.f32 %v1510, %v1606
      %v1608 = vpop.f32.mrb[0].mxu0
      %v1609 = vpop.f32.mrb[0].mxu0
      %v1610 = vadd.f32 %v1513, %v1609
      %v1611 = vpop.f32.mrb[0].mxu0
      %1612 = vdwg.mxu0
      %1613 = vmatprep.subr.bf16.mxu0 0
      %1614 = vmatpush1.bf16.msra.mxu0 %v1226
      %1615 = vmatprep.subr.bf16.mxu0 0
      %1616 = vmatpush1.bf16.msra.mxu0 %v1227
      %1617 = vmatprep.subr.bf16.mxu0 0
      %1618 = vmatpush1.bf16.msra.mxu0 %v1228
      %1619 = vmatprep.subr.bf16.mxu0 0
      %1620 = vmatpush1.bf16.msra.mxu0 %v1229
      %1621 = vmatprep.subr.bf16.mxu0 0
      %1622 = vmatpush1.bf16.msra.mxu0 %v1230
      %1623 = vmatprep.subr.bf16.mxu0 0
      %1624 = vmatpush1.bf16.msra.mxu0 %v1231
      %1625 = vmatprep.subr.bf16.mxu0 0
      %1626 = vmatpush1.bf16.msra.mxu0 %v1232
      %1627 = vmatprep.subr.bf16.mxu0 0
      %1628 = vmatpush1.bf16.msra.mxu0 %v1233
      %1629 = vmatprep.subr.bf16.mxu0 0
      %1630 = vmatpush1.bf16.msra.mxu0 %v1234
      %1631 = vmatprep.subr.bf16.mxu0 0
      %1632 = vmatpush1.bf16.msra.mxu0 %v1235
      %1633 = vmatprep.subr.bf16.mxu0 0
      %1634 = vmatpush1.bf16.msra.mxu0 %v1236
      %1635 = vmatprep.subr.bf16.mxu0 0
      %1636 = vmatpush1.bf16.msra.mxu0 %v1237
      %1637 = vmatprep.subr.bf16.mxu0 0
      %1638 = vmatpush1.bf16.msra.mxu0 %v1238
      %1639 = vmatprep.subr.bf16.mxu0 0
      %1640 = vmatpush1.bf16.msra.mxu0 %v1239
      %1641 = vmatprep.subr.bf16.mxu0 0
      %1642 = vmatpush1.bf16.msra.mxu0 %v1240
      %1643 = vmatprep.subr.bf16.mxu0 0
      %1644 = vmatpush1.bf16.msra.mxu0 %v1241
      %1645 = vmatprep.mubr.bf16.mxu0 %v674
      %1646 = vmatmul.mubr.bf16.gmra.mrb[0].mxu0 %v673
      %v1647 = vpop.f32.mrb[0].mxu0
      %v1648 = vadd.f32 %v1551, %v1647
      %v1649 = vpop.f32.mrb[0].mxu0
      %v1650 = vpop.f32.mrb[0].mxu0
      %v1651 = vadd.f32 %v1554, %v1650
      %v1652 = vpop.f32.mrb[0].mxu0
      %1653 = vmatprep.mubr.bf16.mxu0 %v683
      %1654 = vmatmul.mubr.bf16.gmra.mrb[0].mxu0 %v682
      %v1655 = vpop.f32.mrb[0].mxu0
      %v1656 = vadd.f32 %v1559, %v1655
      %v1657 = vpop.f32.mrb[0].mxu0
      %v1658 = vpop.f32.mrb[0].mxu0
      %v1659 = vadd.f32 %v1562, %v1658
      %v1660 = vpop.f32.mrb[0].mxu0
      %1661 = vmatprep.mubr.bf16.mxu0 %v692
      %1662 = vmatmul.mubr.bf16.gmra.mrb[0].mxu0 %v691
      %v1663 = vpop.f32.mrb[0].mxu0
      %v1664 = vadd.f32 %v1567, %v1663
      %v1665 = vpop.f32.mrb[0].mxu0
      %v1666 = vpop.f32.mrb[0].mxu0
      %v1667 = vadd.f32 %v1570, %v1666
      %v1668 = vpop.f32.mrb[0].mxu0
      %1669 = vmatprep.mubr.bf16.mxu0 %v701
      %1670 = vmatmul.mubr.bf16.gmra.mrb[0].mxu0 %v700
      %v1671 = vpop.f32.mrb[0].mxu0
      %v1672 = vadd.f32 %v1575, %v1671
      %v1673 = vpop.f32.mrb[0].mxu0
      %v1674 = vpop.f32.mrb[0].mxu0
      %v1675 = vadd.f32 %v1578, %v1674
      %v1676 = vpop.f32.mrb[0].mxu0
      %1677 = vmatprep.mubr.bf16.mxu0 %v710
      %1678 = vmatmul.mubr.bf16.gmra.mrb[0].mxu0 %v709
      %v1679 = vpop.f32.mrb[0].mxu0
      %v1680 = vadd.f32 %v1583, %v1679
      %v1681 = vpop.f32.mrb[0].mxu0
      %v1682 = vpop.f32.mrb[0].mxu0
      %v1683 = vadd.f32 %v1586, %v1682
      %v1684 = vpop.f32.mrb[0].mxu0
      %1685 = vmatprep.mubr.bf16.mxu0 %v719
      %1686 = vmatmul.mubr.bf16.gmra.mrb[0].mxu0 %v718
      %v1687 = vpop.f32.mrb[0].mxu0
      %v1688 = vadd.f32 %v1591, %v1687
      %v1689 = vpop.f32.mrb[0].mxu0
      %v1690 = vpop.f32.mrb[0].mxu0
      %v1691 = vadd.f32 %v1594, %v1690
      %v1692 = vpop.f32.mrb[0].mxu0
      %1693 = vmatprep.mubr.bf16.mxu0 %v728
      %1694 = vmatmul.mubr.bf16.gmra.mrb[0].mxu0 %v727
      %v1695 = vpop.f32.mrb[0].mxu0
      %v1696 = vadd.f32 %v1599, %v1695
      %v1697 = vpop.f32.mrb[0].mxu0
      %v1698 = vpop.f32.mrb[0].mxu0
      %v1699 = vadd.f32 %v1602, %v1698
      %v1700 = vpop.f32.mrb[0].mxu0
      %1701 = vmatprep.mubr.bf16.mxu0 %v737
      %1702 = vmatmul.mubr.bf16.gmra.mrb[0].mxu0 %v736
      %v1703 = vpop.f32.mrb[0].mxu0
      %v1704 = vadd.f32 %v1607, %v1703
      %v1705 = vpop.f32.mrb[0].mxu0
      %v1706 = vpop.f32.mrb[0].mxu0
      %v1707 = vadd.f32 %v1610, %v1706
      %v1708 = vpop.f32.mrb[0].mxu0
      %1709 = vdwg.mxu0
      %1710 = vmatprep.subr.bf16.mxu0 0
      %1711 = vmatpush1.bf16.msra.mxu0 %v1242
      %1712 = vmatprep.subr.bf16.mxu0 0
      %1713 = vmatpush1.bf16.msra.mxu0 %v1243
      %1714 = vmatprep.subr.bf16.mxu0 0
      %1715 = vmatpush1.bf16.msra.mxu0 %v1244
      %1716 = vmatprep.subr.bf16.mxu0 0
      %1717 = vmatpush1.bf16.msra.mxu0 %v1245
      %1718 = vmatprep.subr.bf16.mxu0 0
      %1719 = vmatpush1.bf16.msra.mxu0 %v1246
      %1720 = vmatprep.subr.bf16.mxu0 0
      %1721 = vmatpush1.bf16.msra.mxu0 %v1247
      %1722 = vmatprep.subr.bf16.mxu0 0
      %1723 = vmatpush1.bf16.msra.mxu0 %v1248
      %1724 = vmatprep.subr.bf16.mxu0 0
      %1725 = vmatpush1.bf16.msra.mxu0 %v1249
      %1726 = vmatprep.subr.bf16.mxu0 0
      %1727 = vmatpush1.bf16.msra.mxu0 0
      %1728 = vmatprep.subr.bf16.mxu0 0
      %1729 = vmatpush1.bf16.msra.mxu0 0
      %1730 = vmatprep.subr.bf16.mxu0 0
      %1731 = vmatpush1.bf16.msra.mxu0 0
      %1732 = vmatprep.subr.bf16.mxu0 0
      %1733 = vmatpush1.bf16.msra.mxu0 0
      %1734 = vmatprep.subr.bf16.mxu0 0
      %1735 = vmatpush1.bf16.msra.mxu0 0
      %1736 = vmatprep.subr.bf16.mxu0 0
      %1737 = vmatpush1.bf16.msra.mxu0 0
      %1738 = vmatprep.subr.bf16.mxu0 0
      %1739 = vmatpush1.bf16.msra.mxu0 0
      %1740 = vmatprep.subr.bf16.mxu0 0
      %1741 = vmatpush1.bf16.msra.mxu0 0
      %1742 = vmatprep.mubr.bf16.mxu0 0
      %1743 = vmatmul.mubr.bf16.gmra.mrb[0].mxu0 %v675
      %v1744 = vpop.f32.mrb[0].mxu0
      %v1745 = vadd.f32 %v1648, %v1744
      %v1746 = vpop.f32.mrb[0].mxu0
      %v1747 = vpop.f32.mrb[0].mxu0
      %v1748 = vadd.f32 %v1651, %v1747
      %v1749 = vpop.f32.mrb[0].mxu0
      %1750 = vmatprep.mubr.bf16.mxu0 0
      %1751 = vmatmul.mubr.bf16.gmra.mrb[0].mxu0 %v684
      %v1752 = vpop.f32.mrb[0].mxu0
      %v1753 = vadd.f32 %v1656, %v1752
      %v1754 = vpop.f32.mrb[0].mxu0
      %v1755 = vpop.f32.mrb[0].mxu0
      %v1756 = vadd.f32 %v1659, %v1755
      %v1757 = vpop.f32.mrb[0].mxu0
      %1758 = vmatprep.mubr.bf16.mxu0 0
      %1759 = vmatmul.mubr.bf16.gmra.mrb[0].mxu0 %v693
      %v1760 = vpop.f32.mrb[0].mxu0
      %v1761 = vadd.f32 %v1664, %v1760
      %v1762 = vpop.f32.mrb[0].mxu0
      %v1763 = vpop.f32.mrb[0].mxu0
      %v1764 = vadd.f32 %v1667, %v1763
      %v1765 = vpop.f32.mrb[0].mxu0
      %1766 = vmatprep.mubr.bf16.mxu0 0
      %1767 = vmatmul.mubr.bf16.gmra.mrb[0].mxu0 %v702
      %v1768 = vpop.f32.mrb[0].mxu0
      %v1769 = vadd.f32 %v1672, %v1768
      %v1770 = vpop.f32.mrb[0].mxu0
      %v1771 = vpop.f32.mrb[0].mxu0
      %v1772 = vadd.f32 %v1675, %v1771
      %v1773 = vpop.f32.mrb[0].mxu0
      %1774 = vmatprep.mubr.bf16.mxu0 0
      %1775 = vmatmul.mubr.bf16.gmra.mrb[0].mxu0 %v711
      %v1776 = vpop.f32.mrb[0].mxu0
      %v1777 = vadd.f32 %v1680, %v1776
      %v1778 = vpop.f32.mrb[0].mxu0
      %v1779 = vpop.f32.mrb[0].mxu0
      %v1780 = vadd.f32 %v1683, %v1779
      %v1781 = vpop.f32.mrb[0].mxu0
      %1782 = vmatprep.mubr.bf16.mxu0 0
      %1783 = vmatmul.mubr.bf16.gmra.mrb[0].mxu0 %v720
      %v1784 = vpop.f32.mrb[0].mxu0
      %v1785 = vadd.f32 %v1688, %v1784
      %v1786 = vpop.f32.mrb[0].mxu0
      %v1787 = vpop.f32.mrb[0].mxu0
      %v1788 = vadd.f32 %v1691, %v1787
      %v1789 = vpop.f32.mrb[0].mxu0
      %1790 = vmatprep.mubr.bf16.mxu0 0
      %1791 = vmatmul.mubr.bf16.gmra.mrb[0].mxu0 %v729
      %v1792 = vpop.f32.mrb[0].mxu0
      %v1793 = vadd.f32 %v1696, %v1792
      %v1794 = vpop.f32.mrb[0].mxu0
      %v1795 = vpop.f32.mrb[0].mxu0
      %v1796 = vadd.f32 %v1699, %v1795
      %v1797 = vpop.f32.mrb[0].mxu0
      %1798 = vmatprep.mubr.bf16.mxu0 0
      %1799 = vmatmul.mubr.bf16.gmra.mrb[0].mxu0 %v738
      %v1800 = vpop.f32.mrb[0].mxu0
      %v1801 = vadd.f32 %v1704, %v1800
      %v1802 = vpop.f32.mrb[0].mxu0
      %v1803 = vpop.f32.mrb[0].mxu0
      %v1804 = vadd.f32 %v1707, %v1803
      %v1805 = vpop.f32.mrb[0].mxu0
      %1806 = vdwg.mxu0
      %1807 = vst [vmem:[%s282] sm:$0xff] %v1745
      %1808 = vst [vmem:[%s282 + $0x8] sm:$0xff] %v1748
      %1809 = vst [vmem:[%s282 + $0x10] sm:$0xff] %v1753
      %1810 = vst [vmem:[%s282 + $0x18] sm:$0xff] %v1756
      %1811 = vst [vmem:[%s282 + $0x20] sm:$0xff] %v1761
      %1812 = vst [vmem:[%s282 + $0x28] sm:$0xff] %v1764
      %1813 = vst [vmem:[%s282 + $0x30] sm:$0xff] %v1769
      %1814 = vst [vmem:[%s282 + $0x38] sm:$0xff] %v1772
      %1815 = vst [vmem:[%s282 + $0x40] sm:$0xff] %v1777
      %1816 = vst [vmem:[%s282 + $0x48] sm:$0xff] %v1780
      %1817 = vst [vmem:[%s282 + $0x50] sm:$0xff] %v1785
      %1818 = vst [vmem:[%s282 + $0x58] sm:$0xff] %v1788
      %1819 = vst [vmem:[%s282 + $0x60] sm:$0xff] %v1793
      %1820 = vst [vmem:[%s282 + $0x68] sm:$0xff] %v1796
      %1821 = vst [vmem:[%s282 + $0x70] sm:$0xff] %v1801
      %1822 = vst [vmem:[%s282 + $0x78] sm:$0xff] %v1804
      %p1823 = scmp.eq.s32.totalorder %s23, 0
      // Predicated region
      $region49: #{conv_block.3} parent=39 // pred_check
        %p1824 = pneg %p1823
      $region50: #{conv_block.3} parent=39 // pred_check_branch
        %1826 = sbr.rel (%p1824) target = $region52
      $region51: #{conv_block.3} parent=39 // pred_region
        %1827 = vst [vmem:[%s287] sm:$0xff] 0.0
      $region52: #{conv_block.3} parent=39 // pred_fallthru
        _
      %v1828 = vld [vmem:[%s287] sm:$0x1]
      %v1829 = vadd.f32 %v1745, %v1748
      %v1830 = vadd.f32 %v1829, %v1753
      %v1831 = vadd.f32 %v1830, %v1756
      %v1832 = vadd.f32 %v1831, %v1761
      %v1833 = vadd.f32 %v1832, %v1764
      %v1834 = vadd.f32 %v1833, %v1769
      %v1835 = vadd.f32 %v1834, %v1772
      %v1836 = vadd.f32 %v1835, %v1777
      %v1837 = vadd.f32 %v1836, %v1780
      %v1838 = vadd.f32 %v1837, %v1785
      %v1839 = vadd.f32 %v1838, %v1788
      %v1840 = vadd.f32 %v1839, %v1793
      %v1841 = vadd.f32 %v1840, %v1796
      %v1842 = vadd.f32 %v1841, %v1801
      %v1843 = vadd.f32 %v1842, %v1804
      %v1844 = vrot.slane %v1843, 4
      %v1845 = vadd.f32 %v1843, %v1844
      %v1846 = vrot.slane %v1845, 2
      %v1847 = vadd.f32 %v1845, %v1846
      %v1848 = vrot.slane %v1847, 1
      %v1849 = vadd.f32 %v1847, %v1848
      %v1850 = vadd.f32 %v1828, %v1849
      %1851 = vst [vmem:[%s287] sm:$0x1] %v1850
      %v1852 = vld [vmem:[%s287 + $0x1] sm:$0x1]
      %v1853 = vmul.f32 %v1745, %v1745
      %v1854 = vmul.f32 %v1748, %v1748
      %v1855 = vmul.f32 %v1753, %v1753
      %v1856 = vmul.f32 %v1756, %v1756
      %v1857 = vmul.f32 %v1761, %v1761
      %v1858 = vmul.f32 %v1764, %v1764
      %v1859 = vmul.f32 %v1769, %v1769
      %v1860 = vmul.f32 %v1772, %v1772
      %v1861 = vmul.f32 %v1777, %v1777
      %v1862 = vmul.f32 %v1780, %v1780
      %v1863 = vmul.f32 %v1785, %v1785
      %v1864 = vmul.f32 %v1788, %v1788
      %v1865 = vmul.f32 %v1793, %v1793
      %v1866 = vmul.f32 %v1796, %v1796
      %v1867 = vmul.f32 %v1801, %v1801
      %v1868 = vmul.f32 %v1804, %v1804
      %v1869 = vadd.f32 %v1853, %v1854
      %v1870 = vadd.f32 %v1869, %v1855
      %v1871 = vadd.f32 %v1870, %v1856
      %v1872 = vadd.f32 %v1871, %v1857
      %v1873 = vadd.f32 %v1872, %v1858
      %v1874 = vadd.f32 %v1873, %v1859
      %v1875 = vadd.f32 %v1874, %v1860
      %v1876 = vadd.f32 %v1875, %v1861
      %v1877 = vadd.f32 %v1876, %v1862
      %v1878 = vadd.f32 %v1877, %v1863
      %v1879 = vadd.f32 %v1878, %v1864
      %v1880 = vadd.f32 %v1879, %v1865
      %v1881 = vadd.f32 %v1880, %v1866
      %v1882 = vadd.f32 %v1881, %v1867
      %v1883 = vadd.f32 %v1882, %v1868
      %v1884 = vrot.slane %v1883, 4
      %v1885 = vadd.f32 %v1883, %v1884
      %v1886 = vrot.slane %v1885, 2
      %v1887 = vadd.f32 %v1885, %v1886
      %v1888 = vrot.slane %v1887, 1
      %v1889 = vadd.f32 %v1887, %v1888
      %v1890 = vadd.f32 %v1852, %v1889
      %1891 = vst [vmem:[%s287 + $0x1] sm:$0x1] %v1890
      %s1892 = smul.u32 8, %s23
      %p1893 = scmp.lt.s32.totalorder %s22, 1
      %s1894 = scalar_select %p1893, %s22, 1
      %p1895 = scmp.lt.s32.totalorder %s1892, 15
      %s1896 = scalar_select %p1895, %s1892, 15
      %s1897 = smul.addr %s1896, 2
      %s1898 = smul.addr %s1894, 32
      %s1899 = sadd.s32 %s1897, %s1898
      %s1900 = smul.addr %s1899, 8
      %s1901 = scalar_lea.vmem %s5, %s1900
      %p1902 = scmp.lt.s32.totalorder %s22, 1
      %s1903 = scalar_select %p1902, %s22, 1
      %s1904 = smul.addr %s1903, 8
      %s1905 = scalar_lea.vmem %s6, %s1904
      // Predicated region
      $region53: #{conv_block.3} parent=39 // pred_check
        %p1906 = pneg %p160
      $region54: #{conv_block.3} parent=39 // pred_check_branch
        %1908 = sbr.rel (%p1906) target = $region56
      $region55: #{conv_block.3} parent=39 // pred_region
        %s1909 = smul.u32 8, %s23
      $region56: #{conv_block.3} parent=39 // pred_fallthru
        _
      // Predicated region
      $region57: #{conv_block.3} parent=39 // pred_check
        %p1910 = pneg %p186
      $region58: #{conv_block.3} parent=39 // pred_check_branch
        %1912 = sbr.rel (%p1910) target = $region60
      $region59: #{conv_block.3} parent=39 // pred_region
        _
      $region60: #{conv_block.3} parent=39 // pred_fallthru
        _
    $region40: #{conv_block.3} parent=5 // pred_fallthru
      _
    %p1913 = scmp.le.s32.totalorder 2, %s13
    // Predicated region
    $region61: #{conv_block.3} parent=5 // pred_check
      %p1914 = pneg %p1913
    $region62: #{conv_block.3} parent=5 // pred_check_branch
      %1916 = sbr.rel (%p1914) target = $region64
    $region63: #{conv_block.3} parent=5 // pred_region
      %s1917 = ssub.s32 %s13, 2
      // Predicated region
      $region65: #{conv_block.3} parent=63 // pred_check
        %p1918 = pneg %p166
      $region66: #{conv_block.3} parent=63 // pred_check_branch
        %1920 = sbr.rel (%p1918) target = $region68
      $region67: #{conv_block.3} parent=63 // pred_region
        %s1921 = smul.u32 8, %s25
        %p1922 = scmp.lt.s32.totalorder %s24, 1
        %s1923 = scalar_select %p1922, %s24, 1
        %p1924 = scmp.lt.s32.totalorder %s1921, 15
        %s1925 = scalar_select %p1924, %s1921, 15
        %s1926 = smul.addr %s1925, 2
        %s1927 = smul.addr %s1923, 32
        %s1928 = sadd.s32 %s1926, %s1927
        %s1929 = smul.addr %s1928, 8
        %s1930 = scalar_lea.vmem %s5, %s1929
      $region68: #{conv_block.3} parent=63 // pred_fallthru
        _
      // Predicated region
      $region69: #{conv_block.3} parent=63 // pred_check
        %p1931 = pneg %p192
      $region70: #{conv_block.3} parent=63 // pred_check_branch
        %1933 = sbr.rel (%p1931) target = $region72
      $region71: #{conv_block.3} parent=63 // pred_region
        %p1934 = scmp.lt.s32.totalorder %s24, 1
        %s1935 = scalar_select %p1934, %s24, 1
        %s1936 = smul.addr %s1935, 8
        %s1937 = scalar_lea.vmem %s6, %s1936
      $region72: #{conv_block.3} parent=63 // pred_fallthru
        _
    $region64: #{conv_block.3} parent=5 // pred_fallthru
      _
  $region6: #{conv_block.3} parent=0 // loop_footer
    %s17 = sadd.s32 1, %s13
  $region7: #{conv_block.3} parent=0 // loop_footer_branch
    %12 = sbr.rel target = $region3
  $region8: #{conv_block.3} parent=0 // loop_exit
    _

// kernel: conv_block.4
$region0: #{conv_block.4}
  #allocation0 [shape = 'u32[]', space=smem, size = 0x4, offset = 0x4, fixed_abs, tag = 'smem constant byte address 0x4 - core index']
  #allocation1 [shape = 'u32[144,128]{1,0:T(1,128)}', space=vmem, size = 0x12000, scoped, tag = 'internal scratch']
  #allocation2 [shape = 'f32[10,18,128]{2,1,0:T(8,128)}', space=vmem, size = 0x1e000, scoped, tag = 'scratch operand']
  #allocation3 [shape = 'bf16[128,1152]{1,0:T(16,128)(2,1)}', space=vmem, size = 0x48000, scoped, tag = 'scratch operand']
  %s0 = inlined_call_operand.vmem [shape: f32[2,16,16,128], index: 0, kind: input, shape index: {}]
  %s1 = inlined_call_operand.vmem [shape: bf16[1152,128], index: 1, kind: input, shape index: {}]
  %s2 = inlined_call_operand.vmem [shape: f32[1,128], index: 2, kind: input, shape index: {}]
  %s3 = inlined_call_operand.vmem [shape: f32[1,128], index: 3, kind: input, shape index: {}]
  %s4 = inlined_call_operand.vmem [shape: f32[1,128], index: 4, kind: input, shape index: {}]
  %s5 = inlined_call_operand.vmem [shape: f32[2,16,16,128], index: 5, kind: output, shape index: {0}]
  %s6 = inlined_call_operand.vmem [shape: f32[2,8,128], index: 6, kind: output, shape index: {1}]
  %7 = xla_tuple %s5, %s6
  %s8 = sld [smem:[#allocation0]]
  $region73: #{conv_block.4} parent=0
    _
  %s10 = ssub.s32 1, %s8
  %s11 = scalar_select 0, %s10, %s8
  loop: start=0, step=1, limit=6
  $region2: #{conv_block.4} parent=0 // loop_pre_header
    _
  $region3: #{conv_block.4} parent=0 // loop_header
    %s13 = sphi 0, %s17
    %p14 = scmp.ge.s32.totalorder %s13, 6
    %s20 = sphi 0, %s32
    %s21 = sphi 0, %s28
    %s22 = sphi 0, %s20
    %s23 = sphi 0, %s21
    %s24 = sphi 0, %s22
    %s25 = sphi 0, %s23
    %s35 = sphi 0, %s37
    %s38 = sphi 0, %s35
    %s39 = sphi 0, %s38
    %s55 = sphi 0, %s39
    %s59 = sphi 0, %s59
    %s61 = sphi 0, %s59
    %s62 = sphi 0, %s61
    %s76 = sphi 0, %s62
    %s80 = sphi 0, %s80
    %s82 = sphi 0, %s80
    %s83 = sphi 0, %s82
    %s97 = sphi 0, %s83
    %s101 = sphi 0, %s101
    %s103 = sphi 0, %s101
    %s104 = sphi 0, %s103
    %s118 = sphi 0, %s104
    %s122 = sphi 0, %s122
    %s124 = sphi 0, %s122
    %s125 = sphi 0, %s124
    %s139 = sphi 0, %s125
    %s147 = sphi 0, %s149
    %s150 = sphi 0, %s147
    %s151 = sphi 0, %s150
    %s167 = sphi 0, %s151
    %s173 = sphi 0, %s175
    %s176 = sphi 0, %s173
    %s177 = sphi 0, %s176
    %s193 = sphi 0, %s177
  $region4: #{conv_block.4} parent=0 // loop_header_branch
    %16 = sbr.rel (%p14) target = $region8
  $region5: #{conv_block.4} parent=0 // loop_body
    %s18 = ssub.s32 %s13, 1
    %s19 = ssub.s32 %s13, 2
    %s26 = sadd.s32 1, %s21
    %p27 = scmp.ge.s32.totalorder %s26, 2
    %s28 = scalar_select %p27, 0, %s26
    %s29 = sadd.s32 1, %s20
    %s30 = scalar_select %p27, %s29, %s20
    %p31 = scmp.ge.s32.totalorder %s30, 2
    %s32 = scalar_select %p31, 0, %s30
    %s33 = ssub.s32 %s20, %s32
    %p34 = scmp.eq.s32.totalorder %s33, 0
    %s36 = sadd.s32 %s35, 1
    %s37 = scalar_select %p34, %s35, %s36
    %p40 = pneg %p34
    %p41 = scmp.eq.s32.totalorder %s13, 3
    %p42 = por %p40, %p41
    %p43 = scmp.ne.s32.totalorder %s35, %s38
    %p44 = scmp.eq.s32.totalorder %s13, 0
    %p45 = por %p43, %p44
    %p46 = scmp.ne.s32.totalorder %s35, %s38
    %p47 = scmp.eq.s32.totalorder %s18, 3
    %p48 = por %p46, %p47
    %p49 = scmp.ne.s32.totalorder %s38, %s39
    %p50 = scmp.eq.s32.totalorder %s18, 0
    %p51 = por %p49, %p50
    %p52 = scmp.ne.s32.totalorder %s38, %s39
    %p53 = scmp.eq.s32.totalorder %s19, 3
    %p54 = por %p52, %p53
    %p56 = scmp.ne.s32.totalorder %s39, %s55
    %p57 = scmp.eq.s32.totalorder %s19, 0
    %p58 = por %p56, %p57
    %s60 = sadd.s32 %s59, 1
    %p63 = scmp.eq.s32.totalorder %s13, 3
    %p64 = scmp.ne.s32.totalorder %s59, %s61
    %p65 = scmp.eq.s32.totalorder %s13, 0
    %p66 = por %p64, %p65
    %p67 = scmp.ne.s32.totalorder %s59, %s61
    %p68 = scmp.eq.s32.totalorder %s18, 3
    %p69 = por %p67, %p68
    %p70 = scmp.ne.s32.totalorder %s61, %s62
    %p71 = scmp.eq.s32.totalorder %s18, 0
    %p72 = por %p70, %p71
    %p73 = scmp.ne.s32.totalorder %s61, %s62
    %p74 = scmp.eq.s32.totalorder %s19, 3
    %p75 = por %p73, %p74
    %p77 = scmp.ne.s32.totalorder %s62, %s76
    %p78 = scmp.eq.s32.totalorder %s19, 0
    %p79 = por %p77, %p78
    %s81 = sadd.s32 %s80, 1
    %p84 = scmp.eq.s32.totalorder %s13, 3
    %p85 = scmp.ne.s32.totalorder %s80, %s82
    %p86 = scmp.eq.s32.totalorder %s13, 0
    %p87 = por %p85, %p86
    %p88 = scmp.ne.s32.totalorder %s80, %s82
    %p89 = scmp.eq.s32.totalorder %s18, 3
    %p90 = por %p88, %p89
    %p91 = scmp.ne.s32.totalorder %s82, %s83
    %p92 = scmp.eq.s32.totalorder %s18, 0
    %p93 = por %p91, %p92
    %p94 = scmp.ne.s32.totalorder %s82, %s83
    %p95 = scmp.eq.s32.totalorder %s19, 3
    %p96 = por %p94, %p95
    %p98 = scmp.ne.s32.totalorder %s83, %s97
    %p99 = scmp.eq.s32.totalorder %s19, 0
    %p100 = por %p98, %p99
    %s102 = sadd.s32 %s101, 1
    %p105 = scmp.eq.s32.totalorder %s13, 3
    %p106 = scmp.ne.s32.totalorder %s101, %s103
    %p107 = scmp.eq.s32.totalorder %s13, 0
    %p108 = por %p106, %p107
    %p109 = scmp.ne.s32.totalorder %s101, %s103
    %p110 = scmp.eq.s32.totalorder %s18, 3
    %p111 = por %p109, %p110
    %p112 = scmp.ne.s32.totalorder %s103, %s104
    %p113 = scmp.eq.s32.totalorder %s18, 0
    %p114 = por %p112, %p113
    %p115 = scmp.ne.s32.totalorder %s103, %s104
    %p116 = scmp.eq.s32.totalorder %s19, 3
    %p117 = por %p115, %p116
    %p119 = scmp.ne.s32.totalorder %s104, %s118
    %p120 = scmp.eq.s32.totalorder %s19, 0
    %p121 = por %p119, %p120
    %s123 = sadd.s32 %s122, 1
    %p126 = scmp.eq.s32.totalorder %s13, 3
    %p127 = scmp.ne.s32.totalorder %s122, %s124
    %p128 = scmp.eq.s32.totalorder %s13, 0
    %p129 = por %p127, %p128
    %p130 = scmp.ne.s32.totalorder %s122, %s124
    %p131 = scmp.eq.s32.totalorder %s18, 3
    %p132 = por %p130, %p131
    %p133 = scmp.ne.s32.totalorder %s124, %s125
    %p134 = scmp.eq.s32.totalorder %s18, 0
    %p135 = por %p133, %p134
    %p136 = scmp.ne.s32.totalorder %s124, %s125
    %p137 = scmp.eq.s32.totalorder %s19, 3
    %p138 = por %p136, %p137
    %p140 = scmp.ne.s32.totalorder %s125, %s139
    %p141 = scmp.eq.s32.totalorder %s19, 0
    %p142 = por %p140, %p141
    %s143 = ssub.s32 %s20, %s32
    %s144 = ssub.s32 %s21, %s28
    %s145 = sor.u32 %s143, %s144
    %p146 = scmp.eq.s32.totalorder %s145, 0
    %s148 = sadd.s32 %s147, 1
    %s149 = scalar_select %p146, %s147, %s148
    %p152 = pneg %p146
    %p153 = scmp.eq.s32.totalorder %s13, 3
    %p154 = por %p152, %p153
    %p155 = scmp.ne.s32.totalorder %s147, %s150
    %p156 = scmp.eq.s32.totalorder %s13, 0
    %p157 = por %p155, %p156
    %p158 = scmp.ne.s32.totalorder %s147, %s150
    %p159 = scmp.eq.s32.totalorder %s18, 3
    %p160 = por %p158, %p159
    %p161 = scmp.ne.s32.totalorder %s150, %s151
    %p162 = scmp.eq.s32.totalorder %s18, 0
    %p163 = por %p161, %p162
    %p164 = scmp.ne.s32.totalorder %s150, %s151
    %p165 = scmp.eq.s32.totalorder %s19, 3
    %p166 = por %p164, %p165
    %p168 = scmp.ne.s32.totalorder %s151, %s167
    %p169 = scmp.eq.s32.totalorder %s19, 0
    %p170 = por %p168, %p169
    %s171 = ssub.s32 %s20, %s32
    %p172 = scmp.eq.s32.totalorder %s171, 0
    %s174 = sadd.s32 %s173, 1
    %s175 = scalar_select %p172, %s173, %s174
    %p178 = pneg %p172
    %p179 = scmp.eq.s32.totalorder %s13, 3
    %p180 = por %p178, %p179
    %p181 = scmp.ne.s32.totalorder %s173, %s176
    %p182 = scmp.eq.s32.totalorder %s13, 0
    %p183 = por %p181, %p182
    %p184 = scmp.ne.s32.totalorder %s173, %s176
    %p185 = scmp.eq.s32.totalorder %s18, 3
    %p186 = por %p184, %p185
    %p187 = scmp.ne.s32.totalorder %s176, %s177
    %p188 = scmp.eq.s32.totalorder %s18, 0
    %p189 = por %p187, %p188
    %p190 = scmp.ne.s32.totalorder %s176, %s177
    %p191 = scmp.eq.s32.totalorder %s19, 3
    %p192 = por %p190, %p191
    %p194 = scmp.ne.s32.totalorder %s177, %s193
    %p195 = scmp.eq.s32.totalorder %s19, 0
    %p196 = por %p194, %p195
    %p197 = scmp.le.s32.totalorder 1, %s13
    %p198 = scmp.lt.s32.totalorder %s13, 5
    %p199 = pnand %p197, %p198
    %p200 = pneg %p199
    // Predicated region
    $region9: #{conv_block.4} parent=5 // pred_check
      _
    $region10: #{conv_block.4} parent=5 // pred_check_branch
      %202 = sbr.rel (%p199) target = $region12
    $region11: #{conv_block.4} parent=5 // pred_region
      %s203 = ssub.s32 %s13, 1
      // Predicated region
      $region13: #{conv_block.4} parent=11 // pred_check
        %p204 = pneg %p72
      $region14: #{conv_block.4} parent=11 // pred_check_branch
        %206 = sbr.rel (%p204) target = $region16
      $region15: #{conv_block.4} parent=11 // pred_region
        _
      $region16: #{conv_block.4} parent=11 // pred_fallthru
        _
      // Predicated region
      $region17: #{conv_block.4} parent=11 // pred_check
        %p207 = pneg %p93
      $region18: #{conv_block.4} parent=11 // pred_check_branch
        %209 = sbr.rel (%p207) target = $region20
      $region19: #{conv_block.4} parent=11 // pred_region
        _
      $region20: #{conv_block.4} parent=11 // pred_fallthru
        _
      // Predicated region
      $region21: #{conv_block.4} parent=11 // pred_check
        %p210 = pneg %p114
      $region22: #{conv_block.4} parent=11 // pred_check_branch
        %212 = sbr.rel (%p210) target = $region24
      $region23: #{conv_block.4} parent=11 // pred_region
        _
      $region24: #{conv_block.4} parent=11 // pred_fallthru
        _
      // Predicated region
      $region25: #{conv_block.4} parent=11 // pred_check
        %p213 = pneg %p135
      $region26: #{conv_block.4} parent=11 // pred_check_branch
        %215 = sbr.rel (%p213) target = $region28
      $region27: #{conv_block.4} parent=11 // pred_region
        _
      $region28: #{conv_block.4} parent=11 // pred_fallthru
        _
    $region12: #{conv_block.4} parent=5 // pred_fallthru
      _
    %p216 = scmp.lt.s32.totalorder %s13, 4
    // Predicated region
    $region29: #{conv_block.4} parent=5 // pred_check
      %p217 = pneg %p216
    $region30: #{conv_block.4} parent=5 // pred_check_branch
      %219 = sbr.rel (%p217) target = $region32
    $region31: #{conv_block.4} parent=5 // pred_region
      // Predicated region
      $region33: #{conv_block.4} parent=31 // pred_check
        %p220 = pneg %p45
      $region34: #{conv_block.4} parent=31 // pred_check_branch
        %222 = sbr.rel (%p220) target = $region36
      $region35: #{conv_block.4} parent=31 // pred_region
        %p223 = scmp.lt.s32.totalorder %s20, 1
        %s224 = scalar_select %p223, %s20, 1
        %s225 = smul.addr %s224, 32
        %s226 = smul.addr %s225, 8
        %s227 = scalar_lea.vmem %s0, %s226
      $region36: #{conv_block.4} parent=31 // pred_fallthru
        _
    $region32: #{conv_block.4} parent=5 // pred_fallthru
      _
    %p228 = scmp.le.s32.totalorder 1, %s13
    %p229 = scmp.lt.s32.totalorder %s13, 5
    %p230 = pnand %p228, %p229
    %p231 = pneg %p230
    // Predicated region
    $region37: #{conv_block.4} parent=5 // pred_check
      _
    $region38: #{conv_block.4} parent=5 // pred_check_branch
      %233 = sbr.rel (%p230) target = $region40
    $region39: #{conv_block.4} parent=5 // pred_region
      %s234 = ssub.s32 %s13, 1
      %p235 = scmp.lt.s32.totalorder %s22, 1
      %s236 = scalar_select %p235, %s22, 1
      %s237 = smul.addr %s236, 32
      %s238 = smul.addr %s237, 8
      %s239 = scalar_lea.vmem %s0, %s238
      %p240 = pneg %p51
      %p241 = pneg %p48
      %p242 = pneg %p72
      %p243 = pneg %p69
      %p244 = pneg %p93
      %p245 = pneg %p90
      %p246 = pneg %p114
      %p247 = pneg %p111
      %p248 = pneg %p135
      %p249 = pneg %p132
      %p250 = pneg %p163
      %p251 = pneg %p160
      %s252 = smul.u32 8, %s23
      %p253 = scmp.lt.s32.totalorder %s22, 1
      %s254 = scalar_select %p253, %s22, 1
      %p255 = scmp.lt.s32.totalorder %s252, 15
      %s256 = scalar_select %p255, %s252, 15
      %s257 = smul.addr %s256, 2
      %s258 = smul.addr %s254, 32
      %s259 = sadd.s32 %s257, %s258
      %s260 = smul.addr %s259, 8
      %s261 = scalar_lea.vmem %s5, %s260
      %p262 = pneg %p189
      %p263 = pneg %p186
      %p264 = scmp.lt.s32.totalorder %s22, 1
      %s265 = scalar_select %p264, %s22, 1
      %s266 = smul.addr %s265, 8
      %s267 = scalar_lea.vmem %s6, %s266
      %p268 = scmp.lt.s32.totalorder %s22, 1
      %s269 = scalar_select %p268, %s22, 1
      %s270 = smul.addr %s269, 32
      %s271 = smul.addr %s270, 8
      %s272 = scalar_lea.vmem %s0, %s271
      %s273 = smul.u32 8, %s23
      %p274 = scmp.lt.s32.totalorder %s22, 1
      %s275 = scalar_select %p274, %s22, 1
      %p276 = scmp.lt.s32.totalorder %s273, 15
      %s277 = scalar_select %p276, %s273, 15
      %s278 = smul.addr %s277, 2
      %s279 = smul.addr %s275, 32
      %s280 = sadd.s32 %s278, %s279
      %s281 = smul.addr %s280, 8
      %s282 = scalar_lea.vmem %s5, %s281
      %s283 = smul.u32 8, %s23
      %p284 = scmp.lt.s32.totalorder %s22, 1
      %s285 = scalar_select %p284, %s22, 1
      %s286 = smul.addr %s285, 8
      %s287 = scalar_lea.vmem %s6, %s286
      %s289 = smul.u32 %s23, 8
      %290 = vst [vmem:[#allocation2] sm:$0xff] 0.0
      %291 = vst [vmem:[#allocation2 + $0x8] sm:$0xff] 0.0
      %292 = vst [vmem:[#allocation2 + $0x10] sm:$0x3] 0.0
      %293 = vst [vmem:[#allocation2 + $0x18] sm:$0xff] 0.0
      %294 = vst [vmem:[#allocation2 + $0x20] sm:$0xff] 0.0
      %295 = vst [vmem:[#allocation2 + $0x28] sm:$0x3] 0.0
      %296 = vst [vmem:[#allocation2 + $0x30] sm:$0xff] 0.0
      %297 = vst [vmem:[#allocation2 + $0x38] sm:$0xff] 0.0
      %298 = vst [vmem:[#allocation2 + $0x40] sm:$0x3] 0.0
      %299 = vst [vmem:[#allocation2 + $0x48] sm:$0xff] 0.0
      %300 = vst [vmem:[#allocation2 + $0x50] sm:$0xff] 0.0
      %301 = vst [vmem:[#allocation2 + $0x58] sm:$0x3] 0.0
      %302 = vst [vmem:[#allocation2 + $0x60] sm:$0xff] 0.0
      %303 = vst [vmem:[#allocation2 + $0x68] sm:$0xff] 0.0
      %304 = vst [vmem:[#allocation2 + $0x70] sm:$0x3] 0.0
      %305 = vst [vmem:[#allocation2 + $0x78] sm:$0xff] 0.0
      %306 = vst [vmem:[#allocation2 + $0x80] sm:$0xff] 0.0
      %307 = vst [vmem:[#allocation2 + $0x88] sm:$0x3] 0.0
      %308 = vst [vmem:[#allocation2 + $0x90] sm:$0xff] 0.0
      %309 = vst [vmem:[#allocation2 + $0x98] sm:$0xff] 0.0
      %310 = vst [vmem:[#allocation2 + $0xa0] sm:$0x3] 0.0
      %311 = vst [vmem:[#allocation2 + $0xa8] sm:$0xff] 0.0
      %312 = vst [vmem:[#allocation2 + $0xb0] sm:$0xff] 0.0
      %313 = vst [vmem:[#allocation2 + $0xb8] sm:$0x3] 0.0
      %314 = vst [vmem:[#allocation2 + $0xc0] sm:$0xff] 0.0
      %315 = vst [vmem:[#allocation2 + $0xc8] sm:$0xff] 0.0
      %316 = vst [vmem:[#allocation2 + $0xd0] sm:$0x3] 0.0
      %317 = vst [vmem:[#allocation2 + $0xd8] sm:$0xff] 0.0
      %318 = vst [vmem:[#allocation2 + $0xe0] sm:$0xff] 0.0
      %319 = vst [vmem:[#allocation2 + $0xe8] sm:$0x3] 0.0
      %s320 = smul.u32 %s289, 16
      %s321 = scalar_lea.vmem %s272, %s320
      %v322 = vld [vmem:[%s321] sm:$0xff]
      %v323 = vld [vmem:[%s321 + $0x8] sm:$0xff]
      %v324 = vld [vmem:[%s321 + $0x10] sm:$0xff]
      %v325 = vld [vmem:[%s321 + $0x18] sm:$0xff]
      %v326 = vld [vmem:[%s321 + $0x20] sm:$0xff]
      %v327 = vld [vmem:[%s321 + $0x28] sm:$0xff]
      %v328 = vld [vmem:[%s321 + $0x30] sm:$0xff]
      %v329 = vld [vmem:[%s321 + $0x38] sm:$0xff]
      %v330 = vld [vmem:[%s321 + $0x40] sm:$0xff]
      %v331 = vld [vmem:[%s321 + $0x48] sm:$0xff]
      %v332 = vld [vmem:[%s321 + $0x50] sm:$0xff]
      %v333 = vld [vmem:[%s321 + $0x58] sm:$0xff]
      %v334 = vld [vmem:[%s321 + $0x60] sm:$0xff]
      %v335 = vld [vmem:[%s321 + $0x68] sm:$0xff]
      %v336 = vld [vmem:[%s321 + $0x70] sm:$0xff]
      %v337 = vld [vmem:[%s321 + $0x78] sm:$0xff]
      %v338 = vld [vmem:[%s3] sm:$0x1]
      %v339 = vld [vmem:[%s4] sm:$0x1]
      %v341 = vlaneseq
      %v342 = vshrl.u32 %v341, 7
      %v343 = vsub.s32 0, %v342
      %v344 = vrot.slane %v338, %v343
      %v346 = vmul.f32 %v322, %v344
      %v347 = vmul.f32 %v323, %v344
      %v348 = vmul.f32 %v324, %v344
      %v349 = vmul.f32 %v325, %v344
      %v350 = vmul.f32 %v326, %v344
      %v351 = vmul.f32 %v327, %v344
      %v352 = vmul.f32 %v328, %v344
      %v353 = vmul.f32 %v329, %v344
      %v354 = vmul.f32 %v330, %v344
      %v355 = vmul.f32 %v331, %v344
      %v356 = vmul.f32 %v332, %v344
      %v357 = vmul.f32 %v333, %v344
      %v358 = vmul.f32 %v334, %v344
      %v359 = vmul.f32 %v335, %v344
      %v360 = vmul.f32 %v336, %v344
      %v361 = vmul.f32 %v337, %v344
      %v363 = vlaneseq
      %v364 = vshrl.u32 %v363, 7
      %v365 = vsub.s32 0, %v364
      %v366 = vrot.slane %v339, %v365
      %v368 = vadd.f32 %v346, %v366
      %v369 = vadd.f32 %v347, %v366
      %v370 = vadd.f32 %v348, %v366
      %v371 = vadd.f32 %v349, %v366
      %v372 = vadd.f32 %v350, %v366
      %v373 = vadd.f32 %v351, %v366
      %v374 = vadd.f32 %v352, %v366
      %v375 = vadd.f32 %v353, %v366
      %v376 = vadd.f32 %v354, %v366
      %v377 = vadd.f32 %v355, %v366
      %v378 = vadd.f32 %v356, %v366
      %v379 = vadd.f32 %v357, %v366
      %v380 = vadd.f32 %v358, %v366
      %v381 = vadd.f32 %v359, %v366
      %v382 = vadd.f32 %v360, %v366
      %v383 = vadd.f32 %v361, %v366
      %v384 = vmax.f32 %v368, 0.0
      %v385 = vmax.f32 %v369, 0.0
      %v386 = vmax.f32 %v370, 0.0
      %v387 = vmax.f32 %v371, 0.0
      %v388 = vmax.f32 %v372, 0.0
      %v389 = vmax.f32 %v373, 0.0
      %v390 = vmax.f32 %v374, 0.0
      %v391 = vmax.f32 %v375, 0.0
      %v392 = vmax.f32 %v376, 0.0
      %v393 = vmax.f32 %v377, 0.0
      %v394 = vmax.f32 %v378, 0.0
      %v395 = vmax.f32 %v379, 0.0
      %v396 = vmax.f32 %v380, 0.0
      %v397 = vmax.f32 %v381, 0.0
      %v398 = vmax.f32 %v382, 0.0
      %v399 = vmax.f32 %v383, 0.0
      %s400 = scalar_lea.vmem [#allocation2], 24
      %401 = vst [vmem:[%s400 + $0x1] sm:$0xff] %v384
      %402 = vst [vmem:[%s400 + $0x9] sm:$0xff] %v385
      %403 = vst [vmem:[%s400 + $0x19] sm:$0xff] %v386
      %404 = vst [vmem:[%s400 + $0x21] sm:$0xff] %v387
      %405 = vst [vmem:[%s400 + $0x31] sm:$0xff] %v388
      %406 = vst [vmem:[%s400 + $0x39] sm:$0xff] %v389
      %407 = vst [vmem:[%s400 + $0x49] sm:$0xff] %v390
      %408 = vst [vmem:[%s400 + $0x51] sm:$0xff] %v391
      %409 = vst [vmem:[%s400 + $0x61] sm:$0xff] %v392
      %410 = vst [vmem:[%s400 + $0x69] sm:$0xff] %v393
      %411 = vst [vmem:[%s400 + $0x79] sm:$0xff] %v394
      %412 = vst [vmem:[%s400 + $0x81] sm:$0xff] %v395
      %413 = vst [vmem:[%s400 + $0x91] sm:$0xff] %v396
      %414 = vst [vmem:[%s400 + $0x99] sm:$0xff] %v397
      %415 = vst [vmem:[%s400 + $0xa9] sm:$0xff] %v398
      %416 = vst [vmem:[%s400 + $0xb1] sm:$0xff] %v399
      %p417 = scmp.gt.s32.totalorder %s23, 0
      // Predicated region
      $region41: #{conv_block.4} parent=39 // pred_check
        %p418 = pneg %p417
      $region42: #{conv_block.4} parent=39 // pred_check_branch
        %420 = sbr.rel (%p418) target = $region44
      $region43: #{conv_block.4} parent=39 // pred_region
        %s421 = ssub.s32 %s289, 1
        %s422 = smul.u32 %s421, 16
        %s423 = scalar_lea.vmem %s272, %s422
        %v424 = vld [vmem:[%s423] sm:$0xff]
        %v425 = vld [vmem:[%s423 + $0x8] sm:$0xff]
        %v426 = vld [vmem:[%s3] sm:$0x1]
        %v427 = vld [vmem:[%s4] sm:$0x1]
        %v429 = vlaneseq
        %v430 = vshrl.u32 %v429, 7
        %v431 = vsub.s32 0, %v430
        %v432 = vrot.slane %v426, %v431
        %v434 = vmul.f32 %v424, %v432
        %v435 = vmul.f32 %v425, %v432
        %v437 = vlaneseq
        %v438 = vshrl.u32 %v437, 7
        %v439 = vsub.s32 0, %v438
        %v440 = vrot.slane %v427, %v439
        %v442 = vadd.f32 %v434, %v440
        %v443 = vadd.f32 %v435, %v440
        %v444 = vmax.f32 %v442, 0.0
        %v445 = vmax.f32 %v443, 0.0
        %446 = vst [vmem:[#allocation2 + $0x1] sm:$0xff] %v444
        %447 = vst [vmem:[#allocation2 + $0x9] sm:$0xff] %v445
      $region44: #{conv_block.4} parent=39 // pred_fallthru
        _
      %p448 = scmp.lt.s32.totalorder %s23, 1
      // Predicated region
      $region45: #{conv_block.4} parent=39 // pred_check
        %p449 = pneg %p448
      $region46: #{conv_block.4} parent=39 // pred_check_branch
        %451 = sbr.rel (%p449) target = $region48
      $region47: #{conv_block.4} parent=39 // pred_region
        %s452 = sadd.s32 %s289, 8
        %s453 = smul.u32 %s452, 16
        %s454 = scalar_lea.vmem %s272, %s453
        %v455 = vld [vmem:[%s454] sm:$0xff]
        %v456 = vld [vmem:[%s454 + $0x8] sm:$0xff]
        %v457 = vld [vmem:[%s3] sm:$0x1]
        %v458 = vld [vmem:[%s4] sm:$0x1]
        %v460 = vlaneseq
        %v461 = vshrl.u32 %v460, 7
        %v462 = vsub.s32 0, %v461
        %v463 = vrot.slane %v457, %v462
        %v465 = vmul.f32 %v455, %v463
        %v466 = vmul.f32 %v456, %v463
        %v468 = vlaneseq
        %v469 = vshrl.u32 %v468, 7
        %v470 = vsub.s32 0, %v469
        %v471 = vrot.slane %v458, %v470
        %v473 = vadd.f32 %v465, %v471
        %v474 = vadd.f32 %v466, %v471
        %v475 = vmax.f32 %v473, 0.0
        %v476 = vmax.f32 %v474, 0.0
        %s477 = scalar_lea.vmem [#allocation2], 216
        %478 = vst [vmem:[%s477 + $0x1] sm:$0xff] %v475
        %479 = vst [vmem:[%s477 + $0x9] sm:$0xff] %v476
      $region48: #{conv_block.4} parent=39 // pred_fallthru
        _
      %v480 = vld [vmem:[#allocation2] sm:$0xff]
      %v481 = vld [vmem:[#allocation2 + $0x8] sm:$0xff]
      %v482 = vld [vmem:[#allocation2 + $0x18] sm:$0xff]
      %v483 = vld [vmem:[#allocation2 + $0x20] sm:$0xff]
      %v484 = vld [vmem:[#allocation2 + $0x30] sm:$0xff]
      %v485 = vld [vmem:[#allocation2 + $0x38] sm:$0xff]
      %v486 = vld [vmem:[#allocation2 + $0x48] sm:$0xff]
      %v487 = vld [vmem:[#allocation2 + $0x50] sm:$0xff]
      %v488 = vld [vmem:[#allocation2 + $0x60] sm:$0xff]
      %v489 = vld [vmem:[#allocation2 + $0x68] sm:$0xff]
      %v490 = vld [vmem:[#allocation2 + $0x78] sm:$0xff]
      %v491 = vld [vmem:[#allocation2 + $0x80] sm:$0xff]
      %v492 = vld [vmem:[#allocation2 + $0x90] sm:$0xff]
      %v493 = vld [vmem:[#allocation2 + $0x98] sm:$0xff]
      %v494 = vld [vmem:[#allocation2 + $0xa8] sm:$0xff]
      %v495 = vld [vmem:[#allocation2 + $0xb0] sm:$0xff]
      %v496 = vpack.c.bf16 %v481, %v480
      %v497 = vpack.c.bf16 %v483, %v482
      %v498 = vpack.c.bf16 %v485, %v484
      %v499 = vpack.c.bf16 %v487, %v486
      %v500 = vpack.c.bf16 %v489, %v488
      %v501 = vpack.c.bf16 %v491, %v490
      %v502 = vpack.c.bf16 %v493, %v492
      %v503 = vpack.c.bf16 %v495, %v494
      %504 = vst [vmem:[#allocation3] sm:$0xff] %v496
      %505 = vst [vmem:[#allocation3 + $0x48] sm:$0xff] %v497
      %506 = vst [vmem:[#allocation3 + $0x90] sm:$0xff] %v498
      %507 = vst [vmem:[#allocation3 + $0xd8] sm:$0xff] %v499
      %508 = vst [vmem:[#allocation3 + $0x120] sm:$0xff] %v500
      %509 = vst [vmem:[#allocation3 + $0x168] sm:$0xff] %v501
      %510 = vst [vmem:[#allocation3 + $0x1b0] sm:$0xff] %v502
      %511 = vst [vmem:[#allocation3 + $0x1f8] sm:$0xff] %v503
      %v512 = vld [vmem:[#allocation2 + $0x1] sm:$0xff]
      %v513 = vld [vmem:[#allocation2 + $0x9] sm:$0xff]
      %v514 = vld [vmem:[#allocation2 + $0x19] sm:$0xff]
      %v515 = vld [vmem:[#allocation2 + $0x21] sm:$0xff]
      %v516 = vld [vmem:[#allocation2 + $0x31] sm:$0xff]
      %v517 = vld [vmem:[#allocation2 + $0x39] sm:$0xff]
      %v518 = vld [vmem:[#allocation2 + $0x49] sm:$0xff]
      %v519 = vld [vmem:[#allocation2 + $0x51] sm:$0xff]
      %v520 = vld [vmem:[#allocation2 + $0x61] sm:$0xff]
      %v521 = vld [vmem:[#allocation2 + $0x69] sm:$0xff]
      %v522 = vld [vmem:[#allocation2 + $0x79] sm:$0xff]
      %v523 = vld [vmem:[#allocation2 + $0x81] sm:$0xff]
      %v524 = vld [vmem:[#allocation2 + $0x91] sm:$0xff]
      %v525 = vld [vmem:[#allocation2 + $0x99] sm:$0xff]
      %v526 = vld [vmem:[#allocation2 + $0xa9] sm:$0xff]
      %v527 = vld [vmem:[#allocation2 + $0xb1] sm:$0xff]
      %v528 = vpack.c.bf16 %v513, %v512
      %v529 = vpack.c.bf16 %v515, %v514
      %v530 = vpack.c.bf16 %v517, %v516
      %v531 = vpack.c.bf16 %v519, %v518
      %v532 = vpack.c.bf16 %v521, %v520
      %v533 = vpack.c.bf16 %v523, %v522
      %v534 = vpack.c.bf16 %v525, %v524
      %v535 = vpack.c.bf16 %v527, %v526
      %536 = vst [vmem:[#allocation3 + $0x8] sm:$0xff] %v528
      %537 = vst [vmem:[#allocation3 + $0x50] sm:$0xff] %v529
      %538 = vst [vmem:[#allocation3 + $0x98] sm:$0xff] %v530
      %539 = vst [vmem:[#allocation3 + $0xe0] sm:$0xff] %v531
      %540 = vst [vmem:[#allocation3 + $0x128] sm:$0xff] %v532
      %541 = vst [vmem:[#allocation3 + $0x170] sm:$0xff] %v533
      %542 = vst [vmem:[#allocation3 + $0x1b8] sm:$0xff] %v534
      %543 = vst [vmem:[#allocation3 + $0x200] sm:$0xff] %v535
      %v544 = vld [vmem:[#allocation2 + $0x2] sm:$0xff]
      %v545 = vld [vmem:[#allocation2 + $0xa] sm:$0xff]
      %v546 = vld [vmem:[#allocation2 + $0x1a] sm:$0xff]
      %v547 = vld [vmem:[#allocation2 + $0x22] sm:$0xff]
      %v548 = vld [vmem:[#allocation2 + $0x32] sm:$0xff]
      %v549 = vld [vmem:[#allocation2 + $0x3a] sm:$0xff]
      %v550 = vld [vmem:[#allocation2 + $0x4a] sm:$0xff]
      %v551 = vld [vmem:[#allocation2 + $0x52] sm:$0xff]
      %v552 = vld [vmem:[#allocation2 + $0x62] sm:$0xff]
      %v553 = vld [vmem:[#allocation2 + $0x6a] sm:$0xff]
      %v554 = vld [vmem:[#allocation2 + $0x7a] sm:$0xff]
      %v555 = vld [vmem:[#allocation2 + $0x82] sm:$0xff]
      %v556 = vld [vmem:[#allocation2 + $0x92] sm:$0xff]
      %v557 = vld [vmem:[#allocation2 + $0x9a] sm:$0xff]
      %v558 = vld [vmem:[#allocation2 + $0xaa] sm:$0xff]
      %v559 = vld [vmem:[#allocation2 + $0xb2] sm:$0xff]
      %v560 = vpack.c.bf16 %v545, %v544
      %v561 = vpack.c.bf16 %v547, %v546
      %v562 = vpack.c.bf16 %v549, %v548
      %v563 = vpack.c.bf16 %v551, %v550
      %v564 = vpack.c.bf16 %v553, %v552
      %v565 = vpack.c.bf16 %v555, %v554
      %v566 = vpack.c.bf16 %v557, %v556
      %v567 = vpack.c.bf16 %v559, %v558
      %568 = vst [vmem:[#allocation3 + $0x10] sm:$0xff] %v560
      %569 = vst [vmem:[#allocation3 + $0x58] sm:$0xff] %v561
      %570 = vst [vmem:[#allocation3 + $0xa0] sm:$0xff] %v562
      %571 = vst [vmem:[#allocation3 + $0xe8] sm:$0xff] %v563
      %572 = vst [vmem:[#allocation3 + $0x130] sm:$0xff] %v564
      %573 = vst [vmem:[#allocation3 + $0x178] sm:$0xff] %v565
      %574 = vst [vmem:[#allocation3 + $0x1c0] sm:$0xff] %v566
      %575 = vst [vmem:[#allocation3 + $0x208] sm:$0xff] %v567
      %v576 = vld [vmem:[%s400] sm:$0xff]
      %v577 = vld [vmem:[%s400 + $0x8] sm:$0xff]
      %v578 = vld [vmem:[%s400 + $0x18] sm:$0xff]
      %v579 = vld [vmem:[%s400 + $0x20] sm:$0xff]
      %v580 = vld [vmem:[%s400 + $0x30] sm:$0xff]
      %v581 = vld [vmem:[%s400 + $0x38] sm:$0xff]
      %v582 = vld [vmem:[%s400 + $0x48] sm:$0xff]
      %v583 = vld [vmem:[%s400 + $0x50] sm:$0xff]
      %v584 = vld [vmem:[%s400 + $0x60] sm:$0xff]
      %v585 = vld [vmem:[%s400 + $0x68] sm:$0xff]
      %v586 = vld [vmem:[%s400 + $0x78] sm:$0xff]
      %v587 = vld [vmem:[%s400 + $0x80] sm:$0xff]
      %v588 = vld [vmem:[%s400 + $0x90] sm:$0xff]
      %v589 = vld [vmem:[%s400 + $0x98] sm:$0xff]
      %v590 = vld [vmem:[%s400 + $0xa8] sm:$0xff]
      %v591 = vld [vmem:[%s400 + $0xb0] sm:$0xff]
      %v592 = vpack.c.bf16 %v577, %v576
      %v593 = vpack.c.bf16 %v579, %v578
      %v594 = vpack.c.bf16 %v581, %v580
      %v595 = vpack.c.bf16 %v583, %v582
      %v596 = vpack.c.bf16 %v585, %v584
      %v597 = vpack.c.bf16 %v587, %v586
      %v598 = vpack.c.bf16 %v589, %v588
      %v599 = vpack.c.bf16 %v591, %v590
      %600 = vst [vmem:[#allocation3 + $0x18] sm:$0xff] %v592
      %601 = vst [vmem:[#allocation3 + $0x60] sm:$0xff] %v593
      %602 = vst [vmem:[#allocation3 + $0xa8] sm:$0xff] %v594
      %603 = vst [vmem:[#allocation3 + $0xf0] sm:$0xff] %v595
      %604 = vst [vmem:[#allocation3 + $0x138] sm:$0xff] %v596
      %605 = vst [vmem:[#allocation3 + $0x180] sm:$0xff] %v597
      %606 = vst [vmem:[#allocation3 + $0x1c8] sm:$0xff] %v598
      %607 = vst [vmem:[#allocation3 + $0x210] sm:$0xff] %v599
      %v608 = vld [vmem:[%s400 + $0x1] sm:$0xff]
      %v609 = vld [vmem:[%s400 + $0x9] sm:$0xff]
      %v610 = vld [vmem:[%s400 + $0x19] sm:$0xff]
      %v611 = vld [vmem:[%s400 + $0x21] sm:$0xff]
      %v612 = vld [vmem:[%s400 + $0x31] sm:$0xff]
      %v613 = vld [vmem:[%s400 + $0x39] sm:$0xff]
      %v614 = vld [vmem:[%s400 + $0x49] sm:$0xff]
      %v615 = vld [vmem:[%s400 + $0x51] sm:$0xff]
      %v616 = vld [vmem:[%s400 + $0x61] sm:$0xff]
      %v617 = vld [vmem:[%s400 + $0x69] sm:$0xff]
      %v618 = vld [vmem:[%s400 + $0x79] sm:$0xff]
      %v619 = vld [vmem:[%s400 + $0x81] sm:$0xff]
      %v620 = vld [vmem:[%s400 + $0x91] sm:$0xff]
      %v621 = vld [vmem:[%s400 + $0x99] sm:$0xff]
      %v622 = vld [vmem:[%s400 + $0xa9] sm:$0xff]
      %v623 = vld [vmem:[%s400 + $0xb1] sm:$0xff]
      %v624 = vpack.c.bf16 %v609, %v608
      %v625 = vpack.c.bf16 %v611, %v610
      %v626 = vpack.c.bf16 %v613, %v612
      %v627 = vpack.c.bf16 %v615, %v614
      %v628 = vpack.c.bf16 %v617, %v616
      %v629 = vpack.c.bf16 %v619, %v618
      %v630 = vpack.c.bf16 %v621, %v620
      %v631 = vpack.c.bf16 %v623, %v622
      %632 = vst [vmem:[#allocation3 + $0x20] sm:$0xff] %v624
      %633 = vst [vmem:[#allocation3 + $0x68] sm:$0xff] %v625
      %634 = vst [vmem:[#allocation3 + $0xb0] sm:$0xff] %v626
      %635 = vst [vmem:[#allocation3 + $0xf8] sm:$0xff] %v627
      %636 = vst [vmem:[#allocation3 + $0x140] sm:$0xff] %v628
      %637 = vst [vmem:[#allocation3 + $0x188] sm:$0xff] %v629
      %638 = vst [vmem:[#allocation3 + $0x1d0] sm:$0xff] %v630
      %639 = vst [vmem:[#allocation3 + $0x218] sm:$0xff] %v631
      %v640 = vld [vmem:[%s400 + $0x2] sm:$0xff]
      %v641 = vld [vmem:[%s400 + $0xa] sm:$0xff]
      %v642 = vld [vmem:[%s400 + $0x1a] sm:$0xff]
      %v643 = vld [vmem:[%s400 + $0x22] sm:$0xff]
      %v644 = vld [vmem:[%s400 + $0x32] sm:$0xff]
      %v645 = vld [vmem:[%s400 + $0x3a] sm:$0xff]
      %v646 = vld [vmem:[%s400 + $0x4a] sm:$0xff]
      %v647 = vld [vmem:[%s400 + $0x52] sm:$0xff]
      %v648 = vld [vmem:[%s400 + $0x62] sm:$0xff]
      %v649 = vld [vmem:[%s400 + $0x6a] sm:$0xff]
      %v650 = vld [vmem:[%s400 + $0x7a] sm:$0xff]
      %v651 = vld [vmem:[%s400 + $0x82] sm:$0xff]
      %v652 = vld [vmem:[%s400 + $0x92] sm:$0xff]
      %v653 = vld [vmem:[%s400 + $0x9a] sm:$0xff]
      %v654 = vld [vmem:[%s400 + $0xaa] sm:$0xff]
      %v655 = vld [vmem:[%s400 + $0xb2] sm:$0xff]
      %v656 = vpack.c.bf16 %v641, %v640
      %v657 = vpack.c.bf16 %v643, %v642
      %v658 = vpack.c.bf16 %v645, %v644
      %v659 = vpack.c.bf16 %v647, %v646
      %v660 = vpack.c.bf16 %v649, %v648
      %v661 = vpack.c.bf16 %v651, %v650
      %v662 = vpack.c.bf16 %v653, %v652
      %v663 = vpack.c.bf16 %v655, %v654
      %664 = vst [vmem:[#allocation3 + $0x28] sm:$0xff] %v656
      %665 = vst [vmem:[#allocation3 + $0x70] sm:$0xff] %v657
      %666 = vst [vmem:[#allocation3 + $0xb8] sm:$0xff] %v658
      %667 = vst [vmem:[#allocation3 + $0x100] sm:$0xff] %v659
      %668 = vst [vmem:[#allocation3 + $0x148] sm:$0xff] %v660
      %669 = vst [vmem:[#allocation3 + $0x190] sm:$0xff] %v661
      %670 = vst [vmem:[#allocation3 + $0x1d8] sm:$0xff] %v662
      %671 = vst [vmem:[#allocation3 + $0x220] sm:$0xff] %v663
      %s672 = scalar_lea.vmem [#allocation2], 48
      %v673 = vld [vmem:[%s672] sm:$0xff]
      %v674 = vld [vmem:[%s672 + $0x8] sm:$0xff]
      %v675 = vld [vmem:[%s672 + $0x18] sm:$0xff]
      %v676 = vld [vmem:[%s672 + $0x20] sm:$0xff]
      %v677 = vld [vmem:[%s672 + $0x30] sm:$0xff]
      %v678 = vld [vmem:[%s672 + $0x38] sm:$0xff]
      %v679 = vld [vmem:[%s672 + $0x48] sm:$0xff]
      %v680 = vld [vmem:[%s672 + $0x50] sm:$0xff]
      %v681 = vld [vmem:[%s672 + $0x60] sm:$0xff]
      %v682 = vld [vmem:[%s672 + $0x68] sm:$0xff]
      %v683 = vld [vmem:[%s672 + $0x78] sm:$0xff]
      %v684 = vld [vmem:[%s672 + $0x80] sm:$0xff]
      %v685 = vld [vmem:[%s672 + $0x90] sm:$0xff]
      %v686 = vld [vmem:[%s672 + $0x98] sm:$0xff]
      %v687 = vld [vmem:[%s672 + $0xa8] sm:$0xff]
      %v688 = vld [vmem:[%s672 + $0xb0] sm:$0xff]
      %v689 = vpack.c.bf16 %v674, %v673
      %v690 = vpack.c.bf16 %v676, %v675
      %v691 = vpack.c.bf16 %v678, %v677
      %v692 = vpack.c.bf16 %v680, %v679
      %v693 = vpack.c.bf16 %v682, %v681
      %v694 = vpack.c.bf16 %v684, %v683
      %v695 = vpack.c.bf16 %v686, %v685
      %v696 = vpack.c.bf16 %v688, %v687
      %697 = vst [vmem:[#allocation3 + $0x30] sm:$0xff] %v689
      %698 = vst [vmem:[#allocation3 + $0x78] sm:$0xff] %v690
      %699 = vst [vmem:[#allocation3 + $0xc0] sm:$0xff] %v691
      %700 = vst [vmem:[#allocation3 + $0x108] sm:$0xff] %v692
      %701 = vst [vmem:[#allocation3 + $0x150] sm:$0xff] %v693
      %702 = vst [vmem:[#allocation3 + $0x198] sm:$0xff] %v694
      %703 = vst [vmem:[#allocation3 + $0x1e0] sm:$0xff] %v695
      %704 = vst [vmem:[#allocation3 + $0x228] sm:$0xff] %v696
      %v705 = vld [vmem:[%s672 + $0x1] sm:$0xff]
      %v706 = vld [vmem:[%s672 + $0x9] sm:$0xff]
      %v707 = vld [vmem:[%s672 + $0x19] sm:$0xff]
      %v708 = vld [vmem:[%s672 + $0x21] sm:$0xff]
      %v709 = vld [vmem:[%s672 + $0x31] sm:$0xff]
      %v710 = vld [vmem:[%s672 + $0x39] sm:$0xff]
      %v711 = vld [vmem:[%s672 + $0x49] sm:$0xff]
      %v712 = vld [vmem:[%s672 + $0x51] sm:$0xff]
      %v713 = vld [vmem:[%s672 + $0x61] sm:$0xff]
      %v714 = vld [vmem:[%s672 + $0x69] sm:$0xff]
      %v715 = vld [vmem:[%s672 + $0x79] sm:$0xff]
      %v716 = vld [vmem:[%s672 + $0x81] sm:$0xff]
      %v717 = vld [vmem:[%s672 + $0x91] sm:$0xff]
      %v718 = vld [vmem:[%s672 + $0x99] sm:$0xff]
      %v719 = vld [vmem:[%s672 + $0xa9] sm:$0xff]
      %v720 = vld [vmem:[%s672 + $0xb1] sm:$0xff]
      %v721 = vpack.c.bf16 %v706, %v705
      %v722 = vpack.c.bf16 %v708, %v707
      %v723 = vpack.c.bf16 %v710, %v709
      %v724 = vpack.c.bf16 %v712, %v711
      %v725 = vpack.c.bf16 %v714, %v713
      %v726 = vpack.c.bf16 %v716, %v715
      %v727 = vpack.c.bf16 %v718, %v717
      %v728 = vpack.c.bf16 %v720, %v719
      %729 = vst [vmem:[#allocation3 + $0x38] sm:$0xff] %v721
      %730 = vst [vmem:[#allocation3 + $0x80] sm:$0xff] %v722
      %731 = vst [vmem:[#allocation3 + $0xc8] sm:$0xff] %v723
      %732 = vst [vmem:[#allocation3 + $0x110] sm:$0xff] %v724
      %733 = vst [vmem:[#allocation3 + $0x158] sm:$0xff] %v725
      %734 = vst [vmem:[#allocation3 + $0x1a0] sm:$0xff] %v726
      %735 = vst [vmem:[#allocation3 + $0x1e8] sm:$0xff] %v727
      %736 = vst [vmem:[#allocation3 + $0x230] sm:$0xff] %v728
      %v737 = vld [vmem:[%s672 + $0x2] sm:$0xff]
      %v738 = vld [vmem:[%s672 + $0xa] sm:$0xff]
      %v739 = vld [vmem:[%s672 + $0x1a] sm:$0xff]
      %v740 = vld [vmem:[%s672 + $0x22] sm:$0xff]
      %v741 = vld [vmem:[%s672 + $0x32] sm:$0xff]
      %v742 = vld [vmem:[%s672 + $0x3a] sm:$0xff]
      %v743 = vld [vmem:[%s672 + $0x4a] sm:$0xff]
      %v744 = vld [vmem:[%s672 + $0x52] sm:$0xff]
      %v745 = vld [vmem:[%s672 + $0x62] sm:$0xff]
      %v746 = vld [vmem:[%s672 + $0x6a] sm:$0xff]
      %v747 = vld [vmem:[%s672 + $0x7a] sm:$0xff]
      %v748 = vld [vmem:[%s672 + $0x82] sm:$0xff]
      %v749 = vld [vmem:[%s672 + $0x92] sm:$0xff]
      %v750 = vld [vmem:[%s672 + $0x9a] sm:$0xff]
      %v751 = vld [vmem:[%s672 + $0xaa] sm:$0xff]
      %v752 = vld [vmem:[%s672 + $0xb2] sm:$0xff]
      %v753 = vpack.c.bf16 %v738, %v737
      %v754 = vpack.c.bf16 %v740, %v739
      %v755 = vpack.c.bf16 %v742, %v741
      %v756 = vpack.c.bf16 %v744, %v743
      %v757 = vpack.c.bf16 %v746, %v745
      %v758 = vpack.c.bf16 %v748, %v747
      %v759 = vpack.c.bf16 %v750, %v749
      %v760 = vpack.c.bf16 %v752, %v751
      %761 = vst [vmem:[#allocation3 + $0x40] sm:$0xff] %v753
      %762 = vst [vmem:[#allocation3 + $0x88] sm:$0xff] %v754
      %763 = vst [vmem:[#allocation3 + $0xd0] sm:$0xff] %v755
      %764 = vst [vmem:[#allocation3 + $0x118] sm:$0xff] %v756
      %765 = vst [vmem:[#allocation3 + $0x160] sm:$0xff] %v757
      %766 = vst [vmem:[#allocation3 + $0x1a8] sm:$0xff] %v758
      %767 = vst [vmem:[#allocation3 + $0x1f0] sm:$0xff] %v759
      %768 = vst [vmem:[#allocation3 + $0x238] sm:$0xff] %v760
      %v769 = vld [vmem:[#allocation3] sm:$0xff]
      %v770 = vld [vmem:[#allocation3 + $0x8] sm:$0xff]
      %v771 = vld [vmem:[#allocation3 + $0x10] sm:$0xff]
      %v772 = vld [vmem:[#allocation3 + $0x18] sm:$0xff]
      %v773 = vld [vmem:[#allocation3 + $0x20] sm:$0xff]
      %v774 = vld [vmem:[#allocation3 + $0x28] sm:$0xff]
      %v775 = vld [vmem:[#allocation3 + $0x30] sm:$0xff]
      %v776 = vld [vmem:[#allocation3 + $0x38] sm:$0xff]
      %v777 = vld [vmem:[#allocation3 + $0x40] sm:$0xff]
      %v778 = vld [vmem:[#allocation3 + $0x48] sm:$0xff]
      %v779 = vld [vmem:[#allocation3 + $0x50] sm:$0xff]
      %v780 = vld [vmem:[#allocation3 + $0x58] sm:$0xff]
      %v781 = vld [vmem:[#allocation3 + $0x60] sm:$0xff]
      %v782 = vld [vmem:[#allocation3 + $0x68] sm:$0xff]
      %v783 = vld [vmem:[#allocation3 + $0x70] sm:$0xff]
      %v784 = vld [vmem:[#allocation3 + $0x78] sm:$0xff]
      %v785 = vld [vmem:[#allocation3 + $0x80] sm:$0xff]
      %v786 = vld [vmem:[#allocation3 + $0x88] sm:$0xff]
      %v787 = vld [vmem:[#allocation3 + $0x90] sm:$0xff]
      %v788 = vld [vmem:[#allocation3 + $0x98] sm:$0xff]
      %v789 = vld [vmem:[#allocation3 + $0xa0] sm:$0xff]
      %v790 = vld [vmem:[#allocation3 + $0xa8] sm:$0xff]
      %v791 = vld [vmem:[#allocation3 + $0xb0] sm:$0xff]
      %v792 = vld [vmem:[#allocation3 + $0xb8] sm:$0xff]
      %v793 = vld [vmem:[#allocation3 + $0xc0] sm:$0xff]
      %v794 = vld [vmem:[#allocation3 + $0xc8] sm:$0xff]
      %v795 = vld [vmem:[#allocation3 + $0xd0] sm:$0xff]
      %v796 = vld [vmem:[#allocation3 + $0xd8] sm:$0xff]
      %v797 = vld [vmem:[#allocation3 + $0xe0] sm:$0xff]
      %v798 = vld [vmem:[#allocation3 + $0xe8] sm:$0xff]
      %v799 = vld [vmem:[#allocation3 + $0xf0] sm:$0xff]
      %v800 = vld [vmem:[#allocation3 + $0xf8] sm:$0xff]
      %v801 = vld [vmem:[#allocation3 + $0x100] sm:$0xff]
      %v802 = vld [vmem:[#allocation3 + $0x108] sm:$0xff]
      %v803 = vld [vmem:[#allocation3 + $0x110] sm:$0xff]
      %v804 = vld [vmem:[#allocation3 + $0x118] sm:$0xff]
      %v805 = vld [vmem:[#allocation3 + $0x120] sm:$0xff]
      %v806 = vld [vmem:[#allocation3 + $0x128] sm:$0xff]
      %v807 = vld [vmem:[#allocation3 + $0x130] sm:$0xff]
      %v808 = vld [vmem:[#allocation3 + $0x138] sm:$0xff]
      %v809 = vld [vmem:[#allocation3 + $0x140] sm:$0xff]
      %v810 = vld [vmem:[#allocation3 + $0x148] sm:$0xff]
      %v811 = vld [vmem:[#allocation3 + $0x150] sm:$0xff]
      %v812 = vld [vmem:[#allocation3 + $0x158] sm:$0xff]
      %v813 = vld [vmem:[#allocation3 + $0x160] sm:$0xff]
      %v814 = vld [vmem:[#allocation3 + $0x168] sm:$0xff]
      %v815 = vld [vmem:[#allocation3 + $0x170] sm:$0xff]
      %v816 = vld [vmem:[#allocation3 + $0x178] sm:$0xff]
      %v817 = vld [vmem:[#allocation3 + $0x180] sm:$0xff]
      %v818 = vld [vmem:[#allocation3 + $0x188] sm:$0xff]
      %v819 = vld [vmem:[#allocation3 + $0x190] sm:$0xff]
      %v820 = vld [vmem:[#allocation3 + $0x198] sm:$0xff]
      %v821 = vld [vmem:[#allocation3 + $0x1a0] sm:$0xff]
      %v822 = vld [vmem:[#allocation3 + $0x1a8] sm:$0xff]
      %v823 = vld [vmem:[#allocation3 + $0x1b0] sm:$0xff]
      %v824 = vld [vmem:[#allocation3 + $0x1b8] sm:$0xff]
      %v825 = vld [vmem:[#allocation3 + $0x1c0] sm:$0xff]
      %v826 = vld [vmem:[#allocation3 + $0x1c8] sm:$0xff]
      %v827 = vld [vmem:[#allocation3 + $0x1d0] sm:$0xff]
      %v828 = vld [vmem:[#allocation3 + $0x1d8] sm:$0xff]
      %v829 = vld [vmem:[#allocation3 + $0x1e0] sm:$0xff]
      %v830 = vld [vmem:[#allocation3 + $0x1e8] sm:$0xff]
      %v831 = vld [vmem:[#allocation3 + $0x1f0] sm:$0xff]
      %v832 = vld [vmem:[#allocation3 + $0x1f8] sm:$0xff]
      %v833 = vld [vmem:[#allocation3 + $0x200] sm:$0xff]
      %v834 = vld [vmem:[#allocation3 + $0x208] sm:$0xff]
      %v835 = vld [vmem:[#allocation3 + $0x210] sm:$0xff]
      %v836 = vld [vmem:[#allocation3 + $0x218] sm:$0xff]
      %v837 = vld [vmem:[#allocation3 + $0x220] sm:$0xff]
      %v838 = vld [vmem:[#allocation3 + $0x228] sm:$0xff]
      %v839 = vld [vmem:[#allocation3 + $0x230] sm:$0xff]
      %v840 = vld [vmem:[#allocation3 + $0x238] sm:$0xff]
      %v841 = vld [vmem:[%s1] sm:$0xf]
      %v842 = vld [vmem:[%s1 + $0x4] sm:$0xf]
      %v843 = vld [vmem:[%s1 + $0x8] sm:$0xf]
      %v844 = vld [vmem:[%s1 + $0xc] sm:$0xf]
      %v845 = vld [vmem:[%s1 + $0x10] sm:$0xf]
      %v846 = vld [vmem:[%s1 + $0x14] sm:$0xf]
      %v847 = vld [vmem:[%s1 + $0x18] sm:$0xf]
      %v848 = vld [vmem:[%s1 + $0x1c] sm:$0xf]
      %v849 = vld [vmem:[%s1 + $0x20] sm:$0xf]
      %v850 = vld [vmem:[%s1 + $0x24] sm:$0xf]
      %v851 = vld [vmem:[%s1 + $0x28] sm:$0xf]
      %v852 = vld [vmem:[%s1 + $0x2c] sm:$0xf]
      %v853 = vld [vmem:[%s1 + $0x30] sm:$0xf]
      %v854 = vld [vmem:[%s1 + $0x34] sm:$0xf]
      %v855 = vld [vmem:[%s1 + $0x38] sm:$0xf]
      %v856 = vld [vmem:[%s1 + $0x3c] sm:$0xf]
      %v857 = vld [vmem:[%s1 + $0x40] sm:$0xf]
      %v858 = vld [vmem:[%s1 + $0x44] sm:$0xf]
      %v859 = vld [vmem:[%s1 + $0x48] sm:$0xf]
      %v860 = vld [vmem:[%s1 + $0x4c] sm:$0xf]
      %v861 = vld [vmem:[%s1 + $0x50] sm:$0xf]
      %v862 = vld [vmem:[%s1 + $0x54] sm:$0xf]
      %v863 = vld [vmem:[%s1 + $0x58] sm:$0xf]
      %v864 = vld [vmem:[%s1 + $0x5c] sm:$0xf]
      %v865 = vld [vmem:[%s1 + $0x60] sm:$0xf]
      %v866 = vld [vmem:[%s1 + $0x64] sm:$0xf]
      %v867 = vld [vmem:[%s1 + $0x68] sm:$0xf]
      %v868 = vld [vmem:[%s1 + $0x6c] sm:$0xf]
      %v869 = vld [vmem:[%s1 + $0x70] sm:$0xf]
      %v870 = vld [vmem:[%s1 + $0x74] sm:$0xf]
      %v871 = vld [vmem:[%s1 + $0x78] sm:$0xf]
      %v872 = vld [vmem:[%s1 + $0x7c] sm:$0xf]
      %v873 = vld [vmem:[%s1 + $0x80] sm:$0xf]
      %v874 = vld [vmem:[%s1 + $0x84] sm:$0xf]
      %v875 = vld [vmem:[%s1 + $0x88] sm:$0xf]
      %v876 = vld [vmem:[%s1 + $0x8c] sm:$0xf]
      %v877 = vld [vmem:[%s1 + $0x90] sm:$0xf]
      %v878 = vld [vmem:[%s1 + $0x94] sm:$0xf]
      %v879 = vld [vmem:[%s1 + $0x98] sm:$0xf]
      %v880 = vld [vmem:[%s1 + $0x9c] sm:$0xf]
      %v881 = vld [vmem:[%s1 + $0xa0] sm:$0xf]
      %v882 = vld [vmem:[%s1 + $0xa4] sm:$0xf]
      %v883 = vld [vmem:[%s1 + $0xa8] sm:$0xf]
      %v884 = vld [vmem:[%s1 + $0xac] sm:$0xf]
      %v885 = vld [vmem:[%s1 + $0xb0] sm:$0xf]
      %v886 = vld [vmem:[%s1 + $0xb4] sm:$0xf]
      %v887 = vld [vmem:[%s1 + $0xb8] sm:$0xf]
      %v888 = vld [vmem:[%s1 + $0xbc] sm:$0xf]
      %v889 = vld [vmem:[%s1 + $0xc0] sm:$0xf]
      %v890 = vld [vmem:[%s1 + $0xc4] sm:$0xf]
      %v891 = vld [vmem:[%s1 + $0xc8] sm:$0xf]
      %v892 = vld [vmem:[%s1 + $0xcc] sm:$0xf]
      %v893 = vld [vmem:[%s1 + $0xd0] sm:$0xf]
      %v894 = vld [vmem:[%s1 + $0xd4] sm:$0xf]
      %v895 = vld [vmem:[%s1 + $0xd8] sm:$0xf]
      %v896 = vld [vmem:[%s1 + $0xdc] sm:$0xf]
      %v897 = vld [vmem:[%s1 + $0xe0] sm:$0xf]
      %v898 = vld [vmem:[%s1 + $0xe4] sm:$0xf]
      %v899 = vld [vmem:[%s1 + $0xe8] sm:$0xf]
      %v900 = vld [vmem:[%s1 + $0xec] sm:$0xf]
      %v901 = vld [vmem:[%s1 + $0xf0] sm:$0xf]
      %v902 = vld [vmem:[%s1 + $0xf4] sm:$0xf]
      %v903 = vld [vmem:[%s1 + $0xf8] sm:$0xf]
      %v904 = vld [vmem:[%s1 + $0xfc] sm:$0xf]
      %v905 = vld [vmem:[%s1 + $0x100] sm:$0xf]
      %v906 = vld [vmem:[%s1 + $0x104] sm:$0xf]
      %v907 = vld [vmem:[%s1 + $0x108] sm:$0xf]
      %v908 = vld [vmem:[%s1 + $0x10c] sm:$0xf]
      %v909 = vld [vmem:[%s1 + $0x110] sm:$0xf]
      %v910 = vld [vmem:[%s1 + $0x114] sm:$0xf]
      %v911 = vld [vmem:[%s1 + $0x118] sm:$0xf]
      %v912 = vld [vmem:[%s1 + $0x11c] sm:$0xf]
      %v913 = vld [vmem:[%s1 + $0x120] sm:$0xf]
      %v914 = vld [vmem:[%s1 + $0x124] sm:$0xf]
      %v915 = vld [vmem:[%s1 + $0x128] sm:$0xf]
      %v916 = vld [vmem:[%s1 + $0x12c] sm:$0xf]
      %v917 = vld [vmem:[%s1 + $0x130] sm:$0xf]
      %v918 = vld [vmem:[%s1 + $0x134] sm:$0xf]
      %v919 = vld [vmem:[%s1 + $0x138] sm:$0xf]
      %v920 = vld [vmem:[%s1 + $0x13c] sm:$0xf]
      %v921 = vld [vmem:[%s1 + $0x140] sm:$0xf]
      %v922 = vld [vmem:[%s1 + $0x144] sm:$0xf]
      %v923 = vld [vmem:[%s1 + $0x148] sm:$0xf]
      %v924 = vld [vmem:[%s1 + $0x14c] sm:$0xf]
      %v925 = vld [vmem:[%s1 + $0x150] sm:$0xf]
      %v926 = vld [vmem:[%s1 + $0x154] sm:$0xf]
      %v927 = vld [vmem:[%s1 + $0x158] sm:$0xf]
      %v928 = vld [vmem:[%s1 + $0x15c] sm:$0xf]
      %v929 = vld [vmem:[%s1 + $0x160] sm:$0xf]
      %v930 = vld [vmem:[%s1 + $0x164] sm:$0xf]
      %v931 = vld [vmem:[%s1 + $0x168] sm:$0xf]
      %v932 = vld [vmem:[%s1 + $0x16c] sm:$0xf]
      %v933 = vld [vmem:[%s1 + $0x170] sm:$0xf]
      %v934 = vld [vmem:[%s1 + $0x174] sm:$0xf]
      %v935 = vld [vmem:[%s1 + $0x178] sm:$0xf]
      %v936 = vld [vmem:[%s1 + $0x17c] sm:$0xf]
      %v937 = vld [vmem:[%s1 + $0x180] sm:$0xf]
      %v938 = vld [vmem:[%s1 + $0x184] sm:$0xf]
      %v939 = vld [vmem:[%s1 + $0x188] sm:$0xf]
      %v940 = vld [vmem:[%s1 + $0x18c] sm:$0xf]
      %v941 = vld [vmem:[%s1 + $0x190] sm:$0xf]
      %v942 = vld [vmem:[%s1 + $0x194] sm:$0xf]
      %v943 = vld [vmem:[%s1 + $0x198] sm:$0xf]
      %v944 = vld [vmem:[%s1 + $0x19c] sm:$0xf]
      %v945 = vld [vmem:[%s1 + $0x1a0] sm:$0xf]
      %v946 = vld [vmem:[%s1 + $0x1a4] sm:$0xf]
      %v947 = vld [vmem:[%s1 + $0x1a8] sm:$0xf]
      %v948 = vld [vmem:[%s1 + $0x1ac] sm:$0xf]
      %v949 = vld [vmem:[%s1 + $0x1b0] sm:$0xf]
      %v950 = vld [vmem:[%s1 + $0x1b4] sm:$0xf]
      %v951 = vld [vmem:[%s1 + $0x1b8] sm:$0xf]
      %v952 = vld [vmem:[%s1 + $0x1bc] sm:$0xf]
      %v953 = vld [vmem:[%s1 + $0x1c0] sm:$0xf]
      %v954 = vld [vmem:[%s1 + $0x1c4] sm:$0xf]
      %v955 = vld [vmem:[%s1 + $0x1c8] sm:$0xf]
      %v956 = vld [vmem:[%s1 + $0x1cc] sm:$0xf]
      %v957 = vld [vmem:[%s1 + $0x1d0] sm:$0xf]
      %v958 = vld [vmem:[%s1 + $0x1d4] sm:$0xf]
      %v959 = vld [vmem:[%s1 + $0x1d8] sm:$0xf]
      %v960 = vld [vmem:[%s1 + $0x1dc] sm:$0xf]
      %v961 = vld [vmem:[%s1 + $0x1e0] sm:$0xf]
      %v962 = vld [vmem:[%s1 + $0x1e4] sm:$0xf]
      %v963 = vld [vmem:[%s1 + $0x1e8] sm:$0xf]
      %v964 = vld [vmem:[%s1 + $0x1ec] sm:$0xf]
      %v965 = vld [vmem:[%s1 + $0x1f0] sm:$0xf]
      %v966 = vld [vmem:[%s1 + $0x1f4] sm:$0xf]
      %v967 = vld [vmem:[%s1 + $0x1f8] sm:$0xf]
      %v968 = vld [vmem:[%s1 + $0x1fc] sm:$0xf]
      %v969 = vld [vmem:[%s1 + $0x200] sm:$0xf]
      %v970 = vld [vmem:[%s1 + $0x204] sm:$0xf]
      %v971 = vld [vmem:[%s1 + $0x208] sm:$0xf]
      %v972 = vld [vmem:[%s1 + $0x20c] sm:$0xf]
      %v973 = vld [vmem:[%s1 + $0x210] sm:$0xf]
      %v974 = vld [vmem:[%s1 + $0x214] sm:$0xf]
      %v975 = vld [vmem:[%s1 + $0x218] sm:$0xf]
      %v976 = vld [vmem:[%s1 + $0x21c] sm:$0xf]
      %v977 = vld [vmem:[%s1 + $0x220] sm:$0xf]
      %v978 = vld [vmem:[%s1 + $0x224] sm:$0xf]
      %v979 = vld [vmem:[%s1 + $0x228] sm:$0xf]
      %v980 = vld [vmem:[%s1 + $0x22c] sm:$0xf]
      %v981 = vld [vmem:[%s1 + $0x230] sm:$0xf]
      %v982 = vld [vmem:[%s1 + $0x234] sm:$0xf]
      %v983 = vld [vmem:[%s1 + $0x238] sm:$0xf]
      %v984 = vld [vmem:[%s1 + $0x23c] sm:$0xf]
      %v985 = vld [vmem:[%s2] sm:$0x1]
      %v987 = vlaneseq
      %v988 = vshrl.u32 %v987, 7
      %v989 = vsub.s32 0, %v988
      %v990 = vrot.slane %v985, %v989
      %v1136 = vunpack.c.l.b16 %v841
      %v1137 = vunpack.c.l.b16 %v842
      %v1138 = vunpack.c.l.b16 %v843
      %v1139 = vunpack.c.l.b16 %v844
      %v1140 = vunpack.c.l.b16 %v845
      %v1141 = vunpack.c.l.b16 %v846
      %v1142 = vunpack.c.l.b16 %v847
      %v1143 = vunpack.c.l.b16 %v848
      %v1144 = vunpack.c.l.b16 %v849
      %v1145 = vunpack.c.l.b16 %v850
      %v1146 = vunpack.c.l.b16 %v851
      %v1147 = vunpack.c.l.b16 %v852
      %v1148 = vunpack.c.l.b16 %v853
      %v1149 = vunpack.c.l.b16 %v854
      %v1150 = vunpack.c.l.b16 %v855
      %v1151 = vunpack.c.l.b16 %v856
      %v1152 = vunpack.c.l.b16 %v857
      %v1153 = vunpack.c.l.b16 %v858
      %v1154 = vunpack.c.l.b16 %v859
      %v1155 = vunpack.c.l.b16 %v860
      %v1156 = vunpack.c.l.b16 %v861
      %v1157 = vunpack.c.l.b16 %v862
      %v1158 = vunpack.c.l.b16 %v863
      %v1159 = vunpack.c.l.b16 %v864
      %v1160 = vunpack.c.l.b16 %v865
      %v1161 = vunpack.c.l.b16 %v866
      %v1162 = vunpack.c.l.b16 %v867
      %v1163 = vunpack.c.l.b16 %v868
      %v1164 = vunpack.c.l.b16 %v869
      %v1165 = vunpack.c.l.b16 %v870
      %v1166 = vunpack.c.l.b16 %v871
      %v1167 = vunpack.c.l.b16 %v872
      %v1168 = vunpack.c.l.b16 %v873
      %v1169 = vunpack.c.l.b16 %v874
      %v1170 = vunpack.c.l.b16 %v875
      %v1171 = vunpack.c.l.b16 %v876
      %v1172 = vunpack.c.l.b16 %v877
      %v1173 = vunpack.c.l.b16 %v878
      %v1174 = vunpack.c.l.b16 %v879
      %v1175 = vunpack.c.l.b16 %v880
      %v1176 = vunpack.c.l.b16 %v881
      %v1177 = vunpack.c.l.b16 %v882
      %v1178 = vunpack.c.l.b16 %v883
      %v1179 = vunpack.c.l.b16 %v884
      %v1180 = vunpack.c.l.b16 %v885
      %v1181 = vunpack.c.l.b16 %v886
      %v1182 = vunpack.c.l.b16 %v887
      %v1183 = vunpack.c.l.b16 %v888
      %v1184 = vunpack.c.l.b16 %v889
      %v1185 = vunpack.c.l.b16 %v890
      %v1186 = vunpack.c.l.b16 %v891
      %v1187 = vunpack.c.l.b16 %v892
      %v1188 = vunpack.c.l.b16 %v893
      %v1189 = vunpack.c.l.b16 %v894
      %v1190 = vunpack.c.l.b16 %v895
      %v1191 = vunpack.c.l.b16 %v896
      %v1192 = vunpack.c.l.b16 %v897
      %v1193 = vunpack.c.l.b16 %v898
      %v1194 = vunpack.c.l.b16 %v899
      %v1195 = vunpack.c.l.b16 %v900
      %v1196 = vunpack.c.l.b16 %v901
      %v1197 = vunpack.c.l.b16 %v902
      %v1198 = vunpack.c.l.b16 %v903
      %v1199 = vunpack.c.l.b16 %v904
      %v1200 = vunpack.c.l.b16 %v905
      %v1201 = vunpack.c.l.b16 %v906
      %v1202 = vunpack.c.l.b16 %v907
      %v1203 = vunpack.c.l.b16 %v908
      %v1204 = vunpack.c.l.b16 %v909
      %v1205 = vunpack.c.l.b16 %v910
      %v1206 = vunpack.c.l.b16 %v911
      %v1207 = vunpack.c.l.b16 %v912
      %v1208 = vunpack.c.l.b16 %v913
      %v1209 = vunpack.c.l.b16 %v914
      %v1210 = vunpack.c.l.b16 %v915
      %v1211 = vunpack.c.l.b16 %v916
      %v1212 = vunpack.c.l.b16 %v917
      %v1213 = vunpack.c.l.b16 %v918
      %v1214 = vunpack.c.l.b16 %v919
      %v1215 = vunpack.c.l.b16 %v920
      %v1216 = vunpack.c.l.b16 %v921
      %v1217 = vunpack.c.l.b16 %v922
      %v1218 = vunpack.c.l.b16 %v923
      %v1219 = vunpack.c.l.b16 %v924
      %v1220 = vunpack.c.l.b16 %v925
      %v1221 = vunpack.c.l.b16 %v926
      %v1222 = vunpack.c.l.b16 %v927
      %v1223 = vunpack.c.l.b16 %v928
      %v1224 = vunpack.c.l.b16 %v929
      %v1225 = vunpack.c.l.b16 %v930
      %v1226 = vunpack.c.l.b16 %v931
      %v1227 = vunpack.c.l.b16 %v932
      %v1228 = vunpack.c.l.b16 %v933
      %v1229 = vunpack.c.l.b16 %v934
      %v1230 = vunpack.c.l.b16 %v935
      %v1231 = vunpack.c.l.b16 %v936
      %v1232 = vunpack.c.l.b16 %v937
      %v1233 = vunpack.c.l.b16 %v938
      %v1234 = vunpack.c.l.b16 %v939
      %v1235 = vunpack.c.l.b16 %v940
      %v1236 = vunpack.c.l.b16 %v941
      %v1237 = vunpack.c.l.b16 %v942
      %v1238 = vunpack.c.l.b16 %v943
      %v1239 = vunpack.c.l.b16 %v944
      %v1240 = vunpack.c.l.b16 %v945
      %v1241 = vunpack.c.l.b16 %v946
      %v1242 = vunpack.c.l.b16 %v947
      %v1243 = vunpack.c.l.b16 %v948
      %v1244 = vunpack.c.l.b16 %v949
      %v1245 = vunpack.c.l.b16 %v950
      %v1246 = vunpack.c.l.b16 %v951
      %v1247 = vunpack.c.l.b16 %v952
      %v1248 = vunpack.c.l.b16 %v953
      %v1249 = vunpack.c.l.b16 %v954
      %v1250 = vunpack.c.l.b16 %v955
      %v1251 = vunpack.c.l.b16 %v956
      %v1252 = vunpack.c.l.b16 %v957
      %v1253 = vunpack.c.l.b16 %v958
      %v1254 = vunpack.c.l.b16 %v959
      %v1255 = vunpack.c.l.b16 %v960
      %v1256 = vunpack.c.l.b16 %v961
      %v1257 = vunpack.c.l.b16 %v962
      %v1258 = vunpack.c.l.b16 %v963
      %v1259 = vunpack.c.l.b16 %v964
      %v1260 = vunpack.c.l.b16 %v965
      %v1261 = vunpack.c.l.b16 %v966
      %v1262 = vunpack.c.l.b16 %v967
      %v1263 = vunpack.c.l.b16 %v968
      %v1264 = vunpack.c.l.b16 %v969
      %v1265 = vunpack.c.l.b16 %v970
      %v1266 = vunpack.c.l.b16 %v971
      %v1267 = vunpack.c.l.b16 %v972
      %v1268 = vunpack.c.l.b16 %v973
      %v1269 = vunpack.c.l.b16 %v974
      %v1270 = vunpack.c.l.b16 %v975
      %v1271 = vunpack.c.l.b16 %v976
      %v1272 = vunpack.c.l.b16 %v977
      %v1273 = vunpack.c.l.b16 %v978
      %v1274 = vunpack.c.l.b16 %v979
      %v1275 = vunpack.c.l.b16 %v980
      %v1276 = vunpack.c.l.b16 %v981
      %v1277 = vunpack.c.l.b16 %v982
      %v1278 = vunpack.c.l.b16 %v983
      %v1279 = vunpack.c.l.b16 %v984
      %v1280 = vpack.c.b16 %v1137, %v1136
      %v1281 = vpack.c.b16 %v1139, %v1138
      %v1282 = vpack.c.b16 %v1141, %v1140
      %v1283 = vpack.c.b16 %v1143, %v1142
      %v1284 = vpack.c.b16 %v1145, %v1144
      %v1285 = vpack.c.b16 %v1147, %v1146
      %v1286 = vpack.c.b16 %v1149, %v1148
      %v1287 = vpack.c.b16 %v1151, %v1150
      %v1288 = vpack.c.b16 %v1153, %v1152
      %v1289 = vpack.c.b16 %v1155, %v1154
      %v1290 = vpack.c.b16 %v1157, %v1156
      %v1291 = vpack.c.b16 %v1159, %v1158
      %v1292 = vpack.c.b16 %v1161, %v1160
      %v1293 = vpack.c.b16 %v1163, %v1162
      %v1294 = vpack.c.b16 %v1165, %v1164
      %v1295 = vpack.c.b16 %v1167, %v1166
      %v1296 = vpack.c.b16 %v1169, %v1168
      %v1297 = vpack.c.b16 %v1171, %v1170
      %v1298 = vpack.c.b16 %v1173, %v1172
      %v1299 = vpack.c.b16 %v1175, %v1174
      %v1300 = vpack.c.b16 %v1177, %v1176
      %v1301 = vpack.c.b16 %v1179, %v1178
      %v1302 = vpack.c.b16 %v1181, %v1180
      %v1303 = vpack.c.b16 %v1183, %v1182
      %v1304 = vpack.c.b16 %v1185, %v1184
      %v1305 = vpack.c.b16 %v1187, %v1186
      %v1306 = vpack.c.b16 %v1189, %v1188
      %v1307 = vpack.c.b16 %v1191, %v1190
      %v1308 = vpack.c.b16 %v1193, %v1192
      %v1309 = vpack.c.b16 %v1195, %v1194
      %v1310 = vpack.c.b16 %v1197, %v1196
      %v1311 = vpack.c.b16 %v1199, %v1198
      %v1312 = vpack.c.b16 %v1201, %v1200
      %v1313 = vpack.c.b16 %v1203, %v1202
      %v1314 = vpack.c.b16 %v1205, %v1204
      %v1315 = vpack.c.b16 %v1207, %v1206
      %v1316 = vpack.c.b16 %v1209, %v1208
      %v1317 = vpack.c.b16 %v1211, %v1210
      %v1318 = vpack.c.b16 %v1213, %v1212
      %v1319 = vpack.c.b16 %v1215, %v1214
      %v1320 = vpack.c.b16 %v1217, %v1216
      %v1321 = vpack.c.b16 %v1219, %v1218
      %v1322 = vpack.c.b16 %v1221, %v1220
      %v1323 = vpack.c.b16 %v1223, %v1222
      %v1324 = vpack.c.b16 %v1225, %v1224
      %v1325 = vpack.c.b16 %v1227, %v1226
      %v1326 = vpack.c.b16 %v1229, %v1228
      %v1327 = vpack.c.b16 %v1231, %v1230
      %v1328 = vpack.c.b16 %v1233, %v1232
      %v1329 = vpack.c.b16 %v1235, %v1234
      %v1330 = vpack.c.b16 %v1237, %v1236
      %v1331 = vpack.c.b16 %v1239, %v1238
      %v1332 = vpack.c.b16 %v1241, %v1240
      %v1333 = vpack.c.b16 %v1243, %v1242
      %v1334 = vpack.c.b16 %v1245, %v1244
      %v1335 = vpack.c.b16 %v1247, %v1246
      %v1336 = vpack.c.b16 %v1249, %v1248
      %v1337 = vpack.c.b16 %v1251, %v1250
      %v1338 = vpack.c.b16 %v1253, %v1252
      %v1339 = vpack.c.b16 %v1255, %v1254
      %v1340 = vpack.c.b16 %v1257, %v1256
      %v1341 = vpack.c.b16 %v1259, %v1258
      %v1342 = vpack.c.b16 %v1261, %v1260
      %v1343 = vpack.c.b16 %v1263, %v1262
      %v1344 = vpack.c.b16 %v1265, %v1264
      %v1345 = vpack.c.b16 %v1267, %v1266
      %v1346 = vpack.c.b16 %v1269, %v1268
      %v1347 = vpack.c.b16 %v1271, %v1270
      %v1348 = vpack.c.b16 %v1273, %v1272
      %v1349 = vpack.c.b16 %v1275, %v1274
      %v1350 = vpack.c.b16 %v1277, %v1276
      %v1351 = vpack.c.b16 %v1279, %v1278
      %1424 = vmatprep.subr.bf16.mxu0 0
      %1425 = vmatpush1.bf16.msra.mxu0 %v1280
      %1426 = vmatprep.subr.bf16.mxu0 0
      %1427 = vmatpush1.bf16.msra.mxu0 %v1281
      %1428 = vmatprep.subr.bf16.mxu0 0
      %1429 = vmatpush1.bf16.msra.mxu0 %v1282
      %1430 = vmatprep.subr.bf16.mxu0 0
      %1431 = vmatpush1.bf16.msra.mxu0 %v1283
      %1432 = vmatprep.subr.bf16.mxu0 0
      %1433 = vmatpush1.bf16.msra.mxu0 %v1284
      %1434 = vmatprep.subr.bf16.mxu0 0
      %1435 = vmatpush1.bf16.msra.mxu0 %v1285
      %1436 = vmatprep.subr.bf16.mxu0 0
      %1437 = vmatpush1.bf16.msra.mxu0 %v1286
      %1438 = vmatprep.subr.bf16.mxu0 0
      %1439 = vmatpush1.bf16.msra.mxu0 %v1287
      %1440 = vmatprep.subr.bf16.mxu0 0
      %1441 = vmatpush1.bf16.msra.mxu0 %v1288
      %1442 = vmatprep.subr.bf16.mxu0 0
      %1443 = vmatpush1.bf16.msra.mxu0 %v1289
      %1444 = vmatprep.subr.bf16.mxu0 0
      %1445 = vmatpush1.bf16.msra.mxu0 %v1290
      %1446 = vmatprep.subr.bf16.mxu0 0
      %1447 = vmatpush1.bf16.msra.mxu0 %v1291
      %1448 = vmatprep.subr.bf16.mxu0 0
      %1449 = vmatpush1.bf16.msra.mxu0 %v1292
      %1450 = vmatprep.subr.bf16.mxu0 0
      %1451 = vmatpush1.bf16.msra.mxu0 %v1293
      %1452 = vmatprep.subr.bf16.mxu0 0
      %1453 = vmatpush1.bf16.msra.mxu0 %v1294
      %1454 = vmatprep.subr.bf16.mxu0 0
      %1455 = vmatpush1.bf16.msra.mxu0 %v1295
      %1456 = vmatprep.mubr.bf16.mxu0 %v770
      %1457 = vmatmul.mubr.bf16.gmra.mrb[0].mxu0 %v769
      %v1458 = vpop.f32.mrb[0].mxu0
      %v1459 = vadd.f32 %v990, %v1458
      %v1460 = vpop.f32.mrb[0].mxu0
      %v1461 = vpop.f32.mrb[0].mxu0
      %v1462 = vadd.f32 %v990, %v1461
      %v1463 = vpop.f32.mrb[0].mxu0
      %1464 = vmatprep.mubr.bf16.mxu0 %v779
      %1465 = vmatmul.mubr.bf16.gmra.mrb[0].mxu0 %v778
      %v1466 = vpop.f32.mrb[0].mxu0
      %v1467 = vadd.f32 %v990, %v1466
      %v1468 = vpop.f32.mrb[0].mxu0
      %v1469 = vpop.f32.mrb[0].mxu0
      %v1470 = vadd.f32 %v990, %v1469
      %v1471 = vpop.f32.mrb[0].mxu0
      %1472 = vmatprep.mubr.bf16.mxu0 %v788
      %1473 = vmatmul.mubr.bf16.gmra.mrb[0].mxu0 %v787
      %v1474 = vpop.f32.mrb[0].mxu0
      %v1475 = vadd.f32 %v990, %v1474
      %v1476 = vpop.f32.mrb[0].mxu0
      %v1477 = vpop.f32.mrb[0].mxu0
      %v1478 = vadd.f32 %v990, %v1477
      %v1479 = vpop.f32.mrb[0].mxu0
      %1480 = vmatprep.mubr.bf16.mxu0 %v797
      %1481 = vmatmul.mubr.bf16.gmra.mrb[0].mxu0 %v796
      %v1482 = vpop.f32.mrb[0].mxu0
      %v1483 = vadd.f32 %v990, %v1482
      %v1484 = vpop.f32.mrb[0].mxu0
      %v1485 = vpop.f32.mrb[0].mxu0
      %v1486 = vadd.f32 %v990, %v1485
      %v1487 = vpop.f32.mrb[0].mxu0
      %1488 = vmatprep.mubr.bf16.mxu0 %v806
      %1489 = vmatmul.mubr.bf16.gmra.mrb[0].mxu0 %v805
      %v1490 = vpop.f32.mrb[0].mxu0
      %v1491 = vadd.f32 %v990, %v1490
      %v1492 = vpop.f32.mrb[0].mxu0
      %v1493 = vpop.f32.mrb[0].mxu0
      %v1494 = vadd.f32 %v990, %v1493
      %v1495 = vpop.f32.mrb[0].mxu0
      %1496 = vmatprep.mubr.bf16.mxu0 %v815
      %1497 = vmatmul.mubr.bf16.gmra.mrb[0].mxu0 %v814
      %v1498 = vpop.f32.mrb[0].mxu0
      %v1499 = vadd.f32 %v990, %v1498
      %v1500 = vpop.f32.mrb[0].mxu0
      %v1501 = vpop.f32.mrb[0].mxu0
      %v1502 = vadd.f32 %v990, %v1501
      %v1503 = vpop.f32.mrb[0].mxu0
      %1504 = vmatprep.mubr.bf16.mxu0 %v824
      %1505 = vmatmul.mubr.bf16.gmra.mrb[0].mxu0 %v823
      %v1506 = vpop.f32.mrb[0].mxu0
      %v1507 = vadd.f32 %v990, %v1506
      %v1508 = vpop.f32.mrb[0].mxu0
      %v1509 = vpop.f32.mrb[0].mxu0
      %v1510 = vadd.f32 %v990, %v1509
      %v1511 = vpop.f32.mrb[0].mxu0
      %1512 = vmatprep.mubr.bf16.mxu0 %v833
      %1513 = vmatmul.mubr.bf16.gmra.mrb[0].mxu0 %v832
      %v1514 = vpop.f32.mrb[0].mxu0
      %v1515 = vadd.f32 %v990, %v1514
      %v1516 = vpop.f32.mrb[0].mxu0
      %v1517 = vpop.f32.mrb[0].mxu0
      %v1518 = vadd.f32 %v990, %v1517
      %v1519 = vpop.f32.mrb[0].mxu0
      %1520 = vdwg.mxu0
      %1521 = vmatprep.subr.bf16.mxu0 0
      %1522 = vmatpush1.bf16.msra.mxu0 %v1296
      %1523 = vmatprep.subr.bf16.mxu0 0
      %1524 = vmatpush1.bf16.msra.mxu0 %v1297
      %1525 = vmatprep.subr.bf16.mxu0 0
      %1526 = vmatpush1.bf16.msra.mxu0 %v1298
      %1527 = vmatprep.subr.bf16.mxu0 0
      %1528 = vmatpush1.bf16.msra.mxu0 %v1299
      %1529 = vmatprep.subr.bf16.mxu0 0
      %1530 = vmatpush1.bf16.msra.mxu0 %v1300
      %1531 = vmatprep.subr.bf16.mxu0 0
      %1532 = vmatpush1.bf16.msra.mxu0 %v1301
      %1533 = vmatprep.subr.bf16.mxu0 0
      %1534 = vmatpush1.bf16.msra.mxu0 %v1302
      %1535 = vmatprep.subr.bf16.mxu0 0
      %1536 = vmatpush1.bf16.msra.mxu0 %v1303
      %1537 = vmatprep.subr.bf16.mxu0 0
      %1538 = vmatpush1.bf16.msra.mxu0 %v1304
      %1539 = vmatprep.subr.bf16.mxu0 0
      %1540 = vmatpush1.bf16.msra.mxu0 %v1305
      %1541 = vmatprep.subr.bf16.mxu0 0
      %1542 = vmatpush1.bf16.msra.mxu0 %v1306
      %1543 = vmatprep.subr.bf16.mxu0 0
      %1544 = vmatpush1.bf16.msra.mxu0 %v1307
      %1545 = vmatprep.subr.bf16.mxu0 0
      %1546 = vmatpush1.bf16.msra.mxu0 %v1308
      %1547 = vmatprep.subr.bf16.mxu0 0
      %1548 = vmatpush1.bf16.msra.mxu0 %v1309
      %1549 = vmatprep.subr.bf16.mxu0 0
      %1550 = vmatpush1.bf16.msra.mxu0 %v1310
      %1551 = vmatprep.subr.bf16.mxu0 0
      %1552 = vmatpush1.bf16.msra.mxu0 %v1311
      %1553 = vmatprep.mubr.bf16.mxu0 %v772
      %1554 = vmatmul.mubr.bf16.gmra.mrb[0].mxu0 %v771
      %v1555 = vpop.f32.mrb[0].mxu0
      %v1556 = vadd.f32 %v1459, %v1555
      %v1557 = vpop.f32.mrb[0].mxu0
      %v1558 = vpop.f32.mrb[0].mxu0
      %v1559 = vadd.f32 %v1462, %v1558
      %v1560 = vpop.f32.mrb[0].mxu0
      %1561 = vmatprep.mubr.bf16.mxu0 %v781
      %1562 = vmatmul.mubr.bf16.gmra.mrb[0].mxu0 %v780
      %v1563 = vpop.f32.mrb[0].mxu0
      %v1564 = vadd.f32 %v1467, %v1563
      %v1565 = vpop.f32.mrb[0].mxu0
      %v1566 = vpop.f32.mrb[0].mxu0
      %v1567 = vadd.f32 %v1470, %v1566
      %v1568 = vpop.f32.mrb[0].mxu0
      %1569 = vmatprep.mubr.bf16.mxu0 %v790
      %1570 = vmatmul.mubr.bf16.gmra.mrb[0].mxu0 %v789
      %v1571 = vpop.f32.mrb[0].mxu0
      %v1572 = vadd.f32 %v1475, %v1571
      %v1573 = vpop.f32.mrb[0].mxu0
      %v1574 = vpop.f32.mrb[0].mxu0
      %v1575 = vadd.f32 %v1478, %v1574
      %v1576 = vpop.f32.mrb[0].mxu0
      %1577 = vmatprep.mubr.bf16.mxu0 %v799
      %1578 = vmatmul.mubr.bf16.gmra.mrb[0].mxu0 %v798
      %v1579 = vpop.f32.mrb[0].mxu0
      %v1580 = vadd.f32 %v1483, %v1579
      %v1581 = vpop.f32.mrb[0].mxu0
      %v1582 = vpop.f32.mrb[0].mxu0
      %v1583 = vadd.f32 %v1486, %v1582
      %v1584 = vpop.f32.mrb[0].mxu0
      %1585 = vmatprep.mubr.bf16.mxu0 %v808
      %1586 = vmatmul.mubr.bf16.gmra.mrb[0].mxu0 %v807
      %v1587 = vpop.f32.mrb[0].mxu0
      %v1588 = vadd.f32 %v1491, %v1587
      %v1589 = vpop.f32.mrb[0].mxu0
      %v1590 = vpop.f32.mrb[0].mxu0
      %v1591 = vadd.f32 %v1494, %v1590
      %v1592 = vpop.f32.mrb[0].mxu0
      %1593 = vmatprep.mubr.bf16.mxu0 %v817
      %1594 = vmatmul.mubr.bf16.gmra.mrb[0].mxu0 %v816
      %v1595 = vpop.f32.mrb[0].mxu0
      %v1596 = vadd.f32 %v1499, %v1595
      %v1597 = vpop.f32.mrb[0].mxu0
      %v1598 = vpop.f32.mrb[0].mxu0
      %v1599 = vadd.f32 %v1502, %v1598
      %v1600 = vpop.f32.mrb[0].mxu0
      %1601 = vmatprep.mubr.bf16.mxu0 %v826
      %1602 = vmatmul.mubr.bf16.gmra.mrb[0].mxu0 %v825
      %v1603 = vpop.f32.mrb[0].mxu0
      %v1604 = vadd.f32 %v1507, %v1603
      %v1605 = vpop.f32.mrb[0].mxu0
      %v1606 = vpop.f32.mrb[0].mxu0
      %v1607 = vadd.f32 %v1510, %v1606
      %v1608 = vpop.f32.mrb[0].mxu0
      %1609 = vmatprep.mubr.bf16.mxu0 %v835
      %1610 = vmatmul.mubr.bf16.gmra.mrb[0].mxu0 %v834
      %v1611 = vpop.f32.mrb[0].mxu0
      %v1612 = vadd.f32 %v1515, %v1611
      %v1613 = vpop.f32.mrb[0].mxu0
      %v1614 = vpop.f32.mrb[0].mxu0
      %v1615 = vadd.f32 %v1518, %v1614
      %v1616 = vpop.f32.mrb[0].mxu0
      %1617 = vdwg.mxu0
      %1618 = vmatprep.subr.bf16.mxu0 0
      %1619 = vmatpush1.bf16.msra.mxu0 %v1312
      %1620 = vmatprep.subr.bf16.mxu0 0
      %1621 = vmatpush1.bf16.msra.mxu0 %v1313
      %1622 = vmatprep.subr.bf16.mxu0 0
      %1623 = vmatpush1.bf16.msra.mxu0 %v1314
      %1624 = vmatprep.subr.bf16.mxu0 0
      %1625 = vmatpush1.bf16.msra.mxu0 %v1315
      %1626 = vmatprep.subr.bf16.mxu0 0
      %1627 = vmatpush1.bf16.msra.mxu0 %v1316
      %1628 = vmatprep.subr.bf16.mxu0 0
      %1629 = vmatpush1.bf16.msra.mxu0 %v1317
      %1630 = vmatprep.subr.bf16.mxu0 0
      %1631 = vmatpush1.bf16.msra.mxu0 %v1318
      %1632 = vmatprep.subr.bf16.mxu0 0
      %1633 = vmatpush1.bf16.msra.mxu0 %v1319
      %1634 = vmatprep.subr.bf16.mxu0 0
      %1635 = vmatpush1.bf16.msra.mxu0 %v1320
      %1636 = vmatprep.subr.bf16.mxu0 0
      %1637 = vmatpush1.bf16.msra.mxu0 %v1321
      %1638 = vmatprep.subr.bf16.mxu0 0
      %1639 = vmatpush1.bf16.msra.mxu0 %v1322
      %1640 = vmatprep.subr.bf16.mxu0 0
      %1641 = vmatpush1.bf16.msra.mxu0 %v1323
      %1642 = vmatprep.subr.bf16.mxu0 0
      %1643 = vmatpush1.bf16.msra.mxu0 %v1324
      %1644 = vmatprep.subr.bf16.mxu0 0
      %1645 = vmatpush1.bf16.msra.mxu0 %v1325
      %1646 = vmatprep.subr.bf16.mxu0 0
      %1647 = vmatpush1.bf16.msra.mxu0 %v1326
      %1648 = vmatprep.subr.bf16.mxu0 0
      %1649 = vmatpush1.bf16.msra.mxu0 %v1327
      %1650 = vmatprep.mubr.bf16.mxu0 %v774
      %1651 = vmatmul.mubr.bf16.gmra.mrb[0].mxu0 %v773
      %v1652 = vpop.f32.mrb[0].mxu0
      %v1653 = vadd.f32 %v1556, %v1652
      %v1654 = vpop.f32.mrb[0].mxu0
      %v1655 = vpop.f32.mrb[0].mxu0
      %v1656 = vadd.f32 %v1559, %v1655
      %v1657 = vpop.f32.mrb[0].mxu0
      %1658 = vmatprep.mubr.bf16.mxu0 %v783
      %1659 = vmatmul.mubr.bf16.gmra.mrb[0].mxu0 %v782
      %v1660 = vpop.f32.mrb[0].mxu0
      %v1661 = vadd.f32 %v1564, %v1660
      %v1662 = vpop.f32.mrb[0].mxu0
      %v1663 = vpop.f32.mrb[0].mxu0
      %v1664 = vadd.f32 %v1567, %v1663
      %v1665 = vpop.f32.mrb[0].mxu0
      %1666 = vmatprep.mubr.bf16.mxu0 %v792
      %1667 = vmatmul.mubr.bf16.gmra.mrb[0].mxu0 %v791
      %v1668 = vpop.f32.mrb[0].mxu0
      %v1669 = vadd.f32 %v1572, %v1668
      %v1670 = vpop.f32.mrb[0].mxu0
      %v1671 = vpop.f32.mrb[0].mxu0
      %v1672 = vadd.f32 %v1575, %v1671
      %v1673 = vpop.f32.mrb[0].mxu0
      %1674 = vmatprep.mubr.bf16.mxu0 %v801
      %1675 = vmatmul.mubr.bf16.gmra.mrb[0].mxu0 %v800
      %v1676 = vpop.f32.mrb[0].mxu0
      %v1677 = vadd.f32 %v1580, %v1676
      %v1678 = vpop.f32.mrb[0].mxu0
      %v1679 = vpop.f32.mrb[0].mxu0
      %v1680 = vadd.f32 %v1583, %v1679
      %v1681 = vpop.f32.mrb[0].mxu0
      %1682 = vmatprep.mubr.bf16.mxu0 %v810
      %1683 = vmatmul.mubr.bf16.gmra.mrb[0].mxu0 %v809
      %v1684 = vpop.f32.mrb[0].mxu0
      %v1685 = vadd.f32 %v1588, %v1684
      %v1686 = vpop.f32.mrb[0].mxu0
      %v1687 = vpop.f32.mrb[0].mxu0
      %v1688 = vadd.f32 %v1591, %v1687
      %v1689 = vpop.f32.mrb[0].mxu0
      %1690 = vmatprep.mubr.bf16.mxu0 %v819
      %1691 = vmatmul.mubr.bf16.gmra.mrb[0].mxu0 %v818
      %v1692 = vpop.f32.mrb[0].mxu0
      %v1693 = vadd.f32 %v1596, %v1692
      %v1694 = vpop.f32.mrb[0].mxu0
      %v1695 = vpop.f32.mrb[0].mxu0
      %v1696 = vadd.f32 %v1599, %v1695
      %v1697 = vpop.f32.mrb[0].mxu0
      %1698 = vmatprep.mubr.bf16.mxu0 %v828
      %1699 = vmatmul.mubr.bf16.gmra.mrb[0].mxu0 %v827
      %v1700 = vpop.f32.mrb[0].mxu0
      %v1701 = vadd.f32 %v1604, %v1700
      %v1702 = vpop.f32.mrb[0].mxu0
      %v1703 = vpop.f32.mrb[0].mxu0
      %v1704 = vadd.f32 %v1607, %v1703
      %v1705 = vpop.f32.mrb[0].mxu0
      %1706 = vmatprep.mubr.bf16.mxu0 %v837
      %1707 = vmatmul.mubr.bf16.gmra.mrb[0].mxu0 %v836
      %v1708 = vpop.f32.mrb[0].mxu0
      %v1709 = vadd.f32 %v1612, %v1708
      %v1710 = vpop.f32.mrb[0].mxu0
      %v1711 = vpop.f32.mrb[0].mxu0
      %v1712 = vadd.f32 %v1615, %v1711
      %v1713 = vpop.f32.mrb[0].mxu0
      %1714 = vdwg.mxu0
      %1715 = vmatprep.subr.bf16.mxu0 0
      %1716 = vmatpush1.bf16.msra.mxu0 %v1328
      %1717 = vmatprep.subr.bf16.mxu0 0
      %1718 = vmatpush1.bf16.msra.mxu0 %v1329
      %1719 = vmatprep.subr.bf16.mxu0 0
      %1720 = vmatpush1.bf16.msra.mxu0 %v1330
      %1721 = vmatprep.subr.bf16.mxu0 0
      %1722 = vmatpush1.bf16.msra.mxu0 %v1331
      %1723 = vmatprep.subr.bf16.mxu0 0
      %1724 = vmatpush1.bf16.msra.mxu0 %v1332
      %1725 = vmatprep.subr.bf16.mxu0 0
      %1726 = vmatpush1.bf16.msra.mxu0 %v1333
      %1727 = vmatprep.subr.bf16.mxu0 0
      %1728 = vmatpush1.bf16.msra.mxu0 %v1334
      %1729 = vmatprep.subr.bf16.mxu0 0
      %1730 = vmatpush1.bf16.msra.mxu0 %v1335
      %1731 = vmatprep.subr.bf16.mxu0 0
      %1732 = vmatpush1.bf16.msra.mxu0 %v1336
      %1733 = vmatprep.subr.bf16.mxu0 0
      %1734 = vmatpush1.bf16.msra.mxu0 %v1337
      %1735 = vmatprep.subr.bf16.mxu0 0
      %1736 = vmatpush1.bf16.msra.mxu0 %v1338
      %1737 = vmatprep.subr.bf16.mxu0 0
      %1738 = vmatpush1.bf16.msra.mxu0 %v1339
      %1739 = vmatprep.subr.bf16.mxu0 0
      %1740 = vmatpush1.bf16.msra.mxu0 %v1340
      %1741 = vmatprep.subr.bf16.mxu0 0
      %1742 = vmatpush1.bf16.msra.mxu0 %v1341
      %1743 = vmatprep.subr.bf16.mxu0 0
      %1744 = vmatpush1.bf16.msra.mxu0 %v1342
      %1745 = vmatprep.subr.bf16.mxu0 0
      %1746 = vmatpush1.bf16.msra.mxu0 %v1343
      %1747 = vmatprep.mubr.bf16.mxu0 %v776
      %1748 = vmatmul.mubr.bf16.gmra.mrb[0].mxu0 %v775
      %v1749 = vpop.f32.mrb[0].mxu0
      %v1750 = vadd.f32 %v1653, %v1749
      %v1751 = vpop.f32.mrb[0].mxu0
      %v1752 = vpop.f32.mrb[0].mxu0
      %v1753 = vadd.f32 %v1656, %v1752
      %v1754 = vpop.f32.mrb[0].mxu0
      %1755 = vmatprep.mubr.bf16.mxu0 %v785
      %1756 = vmatmul.mubr.bf16.gmra.mrb[0].mxu0 %v784
      %v1757 = vpop.f32.mrb[0].mxu0
      %v1758 = vadd.f32 %v1661, %v1757
      %v1759 = vpop.f32.mrb[0].mxu0
      %v1760 = vpop.f32.mrb[0].mxu0
      %v1761 = vadd.f32 %v1664, %v1760
      %v1762 = vpop.f32.mrb[0].mxu0
      %1763 = vmatprep.mubr.bf16.mxu0 %v794
      %1764 = vmatmul.mubr.bf16.gmra.mrb[0].mxu0 %v793
      %v1765 = vpop.f32.mrb[0].mxu0
      %v1766 = vadd.f32 %v1669, %v1765
      %v1767 = vpop.f32.mrb[0].mxu0
      %v1768 = vpop.f32.mrb[0].mxu0
      %v1769 = vadd.f32 %v1672, %v1768
      %v1770 = vpop.f32.mrb[0].mxu0
      %1771 = vmatprep.mubr.bf16.mxu0 %v803
      %1772 = vmatmul.mubr.bf16.gmra.mrb[0].mxu0 %v802
      %v1773 = vpop.f32.mrb[0].mxu0
      %v1774 = vadd.f32 %v1677, %v1773
      %v1775 = vpop.f32.mrb[0].mxu0
      %v1776 = vpop.f32.mrb[0].mxu0
      %v1777 = vadd.f32 %v1680, %v1776
      %v1778 = vpop.f32.mrb[0].mxu0
      %1779 = vmatprep.mubr.bf16.mxu0 %v812
      %1780 = vmatmul.mubr.bf16.gmra.mrb[0].mxu0 %v811
      %v1781 = vpop.f32.mrb[0].mxu0
      %v1782 = vadd.f32 %v1685, %v1781
      %v1783 = vpop.f32.mrb[0].mxu0
      %v1784 = vpop.f32.mrb[0].mxu0
      %v1785 = vadd.f32 %v1688, %v1784
      %v1786 = vpop.f32.mrb[0].mxu0
      %1787 = vmatprep.mubr.bf16.mxu0 %v821
      %1788 = vmatmul.mubr.bf16.gmra.mrb[0].mxu0 %v820
      %v1789 = vpop.f32.mrb[0].mxu0
      %v1790 = vadd.f32 %v1693, %v1789
      %v1791 = vpop.f32.mrb[0].mxu0
      %v1792 = vpop.f32.mrb[0].mxu0
      %v1793 = vadd.f32 %v1696, %v1792
      %v1794 = vpop.f32.mrb[0].mxu0
      %1795 = vmatprep.mubr.bf16.mxu0 %v830
      %1796 = vmatmul.mubr.bf16.gmra.mrb[0].mxu0 %v829
      %v1797 = vpop.f32.mrb[0].mxu0
      %v1798 = vadd.f32 %v1701, %v1797
      %v1799 = vpop.f32.mrb[0].mxu0
      %v1800 = vpop.f32.mrb[0].mxu0
      %v1801 = vadd.f32 %v1704, %v1800
      %v1802 = vpop.f32.mrb[0].mxu0
      %1803 = vmatprep.mubr.bf16.mxu0 %v839
      %1804 = vmatmul.mubr.bf16.gmra.mrb[0].mxu0 %v838
      %v1805 = vpop.f32.mrb[0].mxu0
      %v1806 = vadd.f32 %v1709, %v1805
      %v1807 = vpop.f32.mrb[0].mxu0
      %v1808 = vpop.f32.mrb[0].mxu0
      %v1809 = vadd.f32 %v1712, %v1808
      %v1810 = vpop.f32.mrb[0].mxu0
      %1811 = vdwg.mxu0
      %1812 = vmatprep.subr.bf16.mxu0 0
      %1813 = vmatpush1.bf16.msra.mxu0 %v1344
      %1814 = vmatprep.subr.bf16.mxu0 0
      %1815 = vmatpush1.bf16.msra.mxu0 %v1345
      %1816 = vmatprep.subr.bf16.mxu0 0
      %1817 = vmatpush1.bf16.msra.mxu0 %v1346
      %1818 = vmatprep.subr.bf16.mxu0 0
      %1819 = vmatpush1.bf16.msra.mxu0 %v1347
      %1820 = vmatprep.subr.bf16.mxu0 0
      %1821 = vmatpush1.bf16.msra.mxu0 %v1348
      %1822 = vmatprep.subr.bf16.mxu0 0
      %1823 = vmatpush1.bf16.msra.mxu0 %v1349
      %1824 = vmatprep.subr.bf16.mxu0 0
      %1825 = vmatpush1.bf16.msra.mxu0 %v1350
      %1826 = vmatprep.subr.bf16.mxu0 0
      %1827 = vmatpush1.bf16.msra.mxu0 %v1351
      %1828 = vmatprep.subr.bf16.mxu0 0
      %1829 = vmatpush1.bf16.msra.mxu0 0
      %1830 = vmatprep.subr.bf16.mxu0 0
      %1831 = vmatpush1.bf16.msra.mxu0 0
      %1832 = vmatprep.subr.bf16.mxu0 0
      %1833 = vmatpush1.bf16.msra.mxu0 0
      %1834 = vmatprep.subr.bf16.mxu0 0
      %1835 = vmatpush1.bf16.msra.mxu0 0
      %1836 = vmatprep.subr.bf16.mxu0 0
      %1837 = vmatpush1.bf16.msra.mxu0 0
      %1838 = vmatprep.subr.bf16.mxu0 0
      %1839 = vmatpush1.bf16.msra.mxu0 0
      %1840 = vmatprep.subr.bf16.mxu0 0
      %1841 = vmatpush1.bf16.msra.mxu0 0
      %1842 = vmatprep.subr.bf16.mxu0 0
      %1843 = vmatpush1.bf16.msra.mxu0 0
      %1844 = vmatprep.mubr.bf16.mxu0 0
      %1845 = vmatmul.mubr.bf16.gmra.mrb[0].mxu0 %v777
      %v1846 = vpop.f32.mrb[0].mxu0
      %v1847 = vadd.f32 %v1750, %v1846
      %v1848 = vpop.f32.mrb[0].mxu0
      %v1849 = vpop.f32.mrb[0].mxu0
      %v1850 = vadd.f32 %v1753, %v1849
      %v1851 = vpop.f32.mrb[0].mxu0
      %1852 = vmatprep.mubr.bf16.mxu0 0
      %1853 = vmatmul.mubr.bf16.gmra.mrb[0].mxu0 %v786
      %v1854 = vpop.f32.mrb[0].mxu0
      %v1855 = vadd.f32 %v1758, %v1854
      %v1856 = vpop.f32.mrb[0].mxu0
      %v1857 = vpop.f32.mrb[0].mxu0
      %v1858 = vadd.f32 %v1761, %v1857
      %v1859 = vpop.f32.mrb[0].mxu0
      %1860 = vmatprep.mubr.bf16.mxu0 0
      %1861 = vmatmul.mubr.bf16.gmra.mrb[0].mxu0 %v795
      %v1862 = vpop.f32.mrb[0].mxu0
      %v1863 = vadd.f32 %v1766, %v1862
      %v1864 = vpop.f32.mrb[0].mxu0
      %v1865 = vpop.f32.mrb[0].mxu0
      %v1866 = vadd.f32 %v1769, %v1865
      %v1867 = vpop.f32.mrb[0].mxu0
      %1868 = vmatprep.mubr.bf16.mxu0 0
      %1869 = vmatmul.mubr.bf16.gmra.mrb[0].mxu0 %v804
      %v1870 = vpop.f32.mrb[0].mxu0
      %v1871 = vadd.f32 %v1774, %v1870
      %v1872 = vpop.f32.mrb[0].mxu0
      %v1873 = vpop.f32.mrb[0].mxu0
      %v1874 = vadd.f32 %v1777, %v1873
      %v1875 = vpop.f32.mrb[0].mxu0
      %1876 = vmatprep.mubr.bf16.mxu0 0
      %1877 = vmatmul.mubr.bf16.gmra.mrb[0].mxu0 %v813
      %v1878 = vpop.f32.mrb[0].mxu0
      %v1879 = vadd.f32 %v1782, %v1878
      %v1880 = vpop.f32.mrb[0].mxu0
      %v1881 = vpop.f32.mrb[0].mxu0
      %v1882 = vadd.f32 %v1785, %v1881
      %v1883 = vpop.f32.mrb[0].mxu0
      %1884 = vmatprep.mubr.bf16.mxu0 0
      %1885 = vmatmul.mubr.bf16.gmra.mrb[0].mxu0 %v822
      %v1886 = vpop.f32.mrb[0].mxu0
      %v1887 = vadd.f32 %v1790, %v1886
      %v1888 = vpop.f32.mrb[0].mxu0
      %v1889 = vpop.f32.mrb[0].mxu0
      %v1890 = vadd.f32 %v1793, %v1889
      %v1891 = vpop.f32.mrb[0].mxu0
      %1892 = vmatprep.mubr.bf16.mxu0 0
      %1893 = vmatmul.mubr.bf16.gmra.mrb[0].mxu0 %v831
      %v1894 = vpop.f32.mrb[0].mxu0
      %v1895 = vadd.f32 %v1798, %v1894
      %v1896 = vpop.f32.mrb[0].mxu0
      %v1897 = vpop.f32.mrb[0].mxu0
      %v1898 = vadd.f32 %v1801, %v1897
      %v1899 = vpop.f32.mrb[0].mxu0
      %1900 = vmatprep.mubr.bf16.mxu0 0
      %1901 = vmatmul.mubr.bf16.gmra.mrb[0].mxu0 %v840
      %v1902 = vpop.f32.mrb[0].mxu0
      %v1903 = vadd.f32 %v1806, %v1902
      %v1904 = vpop.f32.mrb[0].mxu0
      %v1905 = vpop.f32.mrb[0].mxu0
      %v1906 = vadd.f32 %v1809, %v1905
      %v1907 = vpop.f32.mrb[0].mxu0
      %1908 = vdwg.mxu0
      %1909 = vst [vmem:[%s282] sm:$0xff] %v1847
      %1910 = vst [vmem:[%s282 + $0x8] sm:$0xff] %v1850
      %1911 = vst [vmem:[%s282 + $0x10] sm:$0xff] %v1855
      %1912 = vst [vmem:[%s282 + $0x18] sm:$0xff] %v1858
      %1913 = vst [vmem:[%s282 + $0x20] sm:$0xff] %v1863
      %1914 = vst [vmem:[%s282 + $0x28] sm:$0xff] %v1866
      %1915 = vst [vmem:[%s282 + $0x30] sm:$0xff] %v1871
      %1916 = vst [vmem:[%s282 + $0x38] sm:$0xff] %v1874
      %1917 = vst [vmem:[%s282 + $0x40] sm:$0xff] %v1879
      %1918 = vst [vmem:[%s282 + $0x48] sm:$0xff] %v1882
      %1919 = vst [vmem:[%s282 + $0x50] sm:$0xff] %v1887
      %1920 = vst [vmem:[%s282 + $0x58] sm:$0xff] %v1890
      %1921 = vst [vmem:[%s282 + $0x60] sm:$0xff] %v1895
      %1922 = vst [vmem:[%s282 + $0x68] sm:$0xff] %v1898
      %1923 = vst [vmem:[%s282 + $0x70] sm:$0xff] %v1903
      %1924 = vst [vmem:[%s282 + $0x78] sm:$0xff] %v1906
      %p1925 = scmp.eq.s32.totalorder %s23, 0
      // Predicated region
      $region49: #{conv_block.4} parent=39 // pred_check
        %p1926 = pneg %p1925
      $region50: #{conv_block.4} parent=39 // pred_check_branch
        %1928 = sbr.rel (%p1926) target = $region52
      $region51: #{conv_block.4} parent=39 // pred_region
        %1929 = vst [vmem:[%s287] sm:$0xff] 0.0
      $region52: #{conv_block.4} parent=39 // pred_fallthru
        _
      %v1930 = vld [vmem:[%s287] sm:$0x1]
      %v1931 = vadd.f32 %v1847, %v1850
      %v1932 = vadd.f32 %v1931, %v1855
      %v1933 = vadd.f32 %v1932, %v1858
      %v1934 = vadd.f32 %v1933, %v1863
      %v1935 = vadd.f32 %v1934, %v1866
      %v1936 = vadd.f32 %v1935, %v1871
      %v1937 = vadd.f32 %v1936, %v1874
      %v1938 = vadd.f32 %v1937, %v1879
      %v1939 = vadd.f32 %v1938, %v1882
      %v1940 = vadd.f32 %v1939, %v1887
      %v1941 = vadd.f32 %v1940, %v1890
      %v1942 = vadd.f32 %v1941, %v1895
      %v1943 = vadd.f32 %v1942, %v1898
      %v1944 = vadd.f32 %v1943, %v1903
      %v1945 = vadd.f32 %v1944, %v1906
      %v1946 = vrot.slane %v1945, 4
      %v1947 = vadd.f32 %v1945, %v1946
      %v1948 = vrot.slane %v1947, 2
      %v1949 = vadd.f32 %v1947, %v1948
      %v1950 = vrot.slane %v1949, 1
      %v1951 = vadd.f32 %v1949, %v1950
      %v1952 = vadd.f32 %v1930, %v1951
      %1953 = vst [vmem:[%s287] sm:$0x1] %v1952
      %v1954 = vld [vmem:[%s287 + $0x1] sm:$0x1]
      %v1955 = vmul.f32 %v1847, %v1847
      %v1956 = vmul.f32 %v1850, %v1850
      %v1957 = vmul.f32 %v1855, %v1855
      %v1958 = vmul.f32 %v1858, %v1858
      %v1959 = vmul.f32 %v1863, %v1863
      %v1960 = vmul.f32 %v1866, %v1866
      %v1961 = vmul.f32 %v1871, %v1871
      %v1962 = vmul.f32 %v1874, %v1874
      %v1963 = vmul.f32 %v1879, %v1879
      %v1964 = vmul.f32 %v1882, %v1882
      %v1965 = vmul.f32 %v1887, %v1887
      %v1966 = vmul.f32 %v1890, %v1890
      %v1967 = vmul.f32 %v1895, %v1895
      %v1968 = vmul.f32 %v1898, %v1898
      %v1969 = vmul.f32 %v1903, %v1903
      %v1970 = vmul.f32 %v1906, %v1906
      %v1971 = vadd.f32 %v1955, %v1956
      %v1972 = vadd.f32 %v1971, %v1957
      %v1973 = vadd.f32 %v1972, %v1958
      %v1974 = vadd.f32 %v1973, %v1959
      %v1975 = vadd.f32 %v1974, %v1960
      %v1976 = vadd.f32 %v1975, %v1961
      %v1977 = vadd.f32 %v1976, %v1962
      %v1978 = vadd.f32 %v1977, %v1963
      %v1979 = vadd.f32 %v1978, %v1964
      %v1980 = vadd.f32 %v1979, %v1965
      %v1981 = vadd.f32 %v1980, %v1966
      %v1982 = vadd.f32 %v1981, %v1967
      %v1983 = vadd.f32 %v1982, %v1968
      %v1984 = vadd.f32 %v1983, %v1969
      %v1985 = vadd.f32 %v1984, %v1970
      %v1986 = vrot.slane %v1985, 4
      %v1987 = vadd.f32 %v1985, %v1986
      %v1988 = vrot.slane %v1987, 2
      %v1989 = vadd.f32 %v1987, %v1988
      %v1990 = vrot.slane %v1989, 1
      %v1991 = vadd.f32 %v1989, %v1990
      %v1992 = vadd.f32 %v1954, %v1991
      %1993 = vst [vmem:[%s287 + $0x1] sm:$0x1] %v1992
      %s1994 = smul.u32 8, %s23
      %p1995 = scmp.lt.s32.totalorder %s22, 1
      %s1996 = scalar_select %p1995, %s22, 1
      %p1997 = scmp.lt.s32.totalorder %s1994, 15
      %s1998 = scalar_select %p1997, %s1994, 15
      %s1999 = smul.addr %s1998, 2
      %s2000 = smul.addr %s1996, 32
      %s2001 = sadd.s32 %s1999, %s2000
      %s2002 = smul.addr %s2001, 8
      %s2003 = scalar_lea.vmem %s5, %s2002
      %p2004 = scmp.lt.s32.totalorder %s22, 1
      %s2005 = scalar_select %p2004, %s22, 1
      %s2006 = smul.addr %s2005, 8
      %s2007 = scalar_lea.vmem %s6, %s2006
      // Predicated region
      $region53: #{conv_block.4} parent=39 // pred_check
        %p2008 = pneg %p160
      $region54: #{conv_block.4} parent=39 // pred_check_branch
        %2010 = sbr.rel (%p2008) target = $region56
      $region55: #{conv_block.4} parent=39 // pred_region
        %s2011 = smul.u32 8, %s23
      $region56: #{conv_block.4} parent=39 // pred_fallthru
        _
      // Predicated region
      $region57: #{conv_block.4} parent=39 // pred_check
        %p2012 = pneg %p186
      $region58: #{conv_block.4} parent=39 // pred_check_branch
        %2014 = sbr.rel (%p2012) target = $region60
      $region59: #{conv_block.4} parent=39 // pred_region
        _
      $region60: #{conv_block.4} parent=39 // pred_fallthru
        _
    $region40: #{conv_block.4} parent=5 // pred_fallthru
      _
    %p2015 = scmp.le.s32.totalorder 2, %s13
    // Predicated region
    $region61: #{conv_block.4} parent=5 // pred_check
      %p2016 = pneg %p2015
    $region62: #{conv_block.4} parent=5 // pred_check_branch
      %2018 = sbr.rel (%p2016) target = $region64
    $region63: #{conv_block.4} parent=5 // pred_region
      %s2019 = ssub.s32 %s13, 2
      // Predicated region
      $region65: #{conv_block.4} parent=63 // pred_check
        %p2020 = pneg %p166
      $region66: #{conv_block.4} parent=63 // pred_check_branch
        %2022 = sbr.rel (%p2020) target = $region68
      $region67: #{conv_block.4} parent=63 // pred_region
        %s2023 = smul.u32 8, %s25
        %p2024 = scmp.lt.s32.totalorder %s24, 1
        %s2025 = scalar_select %p2024, %s24, 1
        %p2026 = scmp.lt.s32.totalorder %s2023, 15
        %s2027 = scalar_select %p2026, %s2023, 15
        %s2028 = smul.addr %s2027, 2
        %s2029 = smul.addr %s2025, 32
        %s2030 = sadd.s32 %s2028, %s2029
        %s2031 = smul.addr %s2030, 8
        %s2032 = scalar_lea.vmem %s5, %s2031
      $region68: #{conv_block.4} parent=63 // pred_fallthru
        _
      // Predicated region
      $region69: #{conv_block.4} parent=63 // pred_check
        %p2033 = pneg %p192
      $region70: #{conv_block.4} parent=63 // pred_check_branch
        %2035 = sbr.rel (%p2033) target = $region72
      $region71: #{conv_block.4} parent=63 // pred_region
        %p2036 = scmp.lt.s32.totalorder %s24, 1
        %s2037 = scalar_select %p2036, %s24, 1
        %s2038 = smul.addr %s2037, 8
        %s2039 = scalar_lea.vmem %s6, %s2038
      $region72: #{conv_block.4} parent=63 // pred_fallthru
        _
    $region64: #{conv_block.4} parent=5 // pred_fallthru
      _
  $region6: #{conv_block.4} parent=0 // loop_footer
    %s17 = sadd.s32 1, %s13
  $region7: #{conv_block.4} parent=0 // loop_footer_branch
    %12 = sbr.rel target = $region3
  $region8: #{conv_block.4} parent=0 // loop_exit
    _

</llo_original>
